<compile_context>
chip_gen: v7x
topology: tpu7x:2x2x1
jax: 0.10.0
libtpu: 0.0.40
codegen_flags: <defaults>
</compile_context>

<pallas_src>
import itertools
import math

import jax
import jax.numpy as jnp
from jax.experimental import pallas as pl
from jax.experimental.pallas import tpu as pltpu

# ----------------------- module hyper-parameters (from __init__) ------------
W_HIDDEN = 256            # self.W
N_HIDDEN_LAYERS = 7       # self.D - 1 extra (ReLU, Linear) pairs in feature_out
OUT_COORD_DIM = 32        # kplanes output_coordinate_dim
MULTIRES = (1, 2, 4, 8)
BASE_RESO = (64, 64, 64, 25)
FEAT_DIM = OUT_COORD_DIM * len(MULTIRES)   # 128 (concat_features=True)
BOUNDS = 1.6
OUT_PAD = 128             # lane-dense packed delta slab width (keep at 128)
TN_DEFAULT = 2048         # points per Pallas grid step (large-N case)
TN_MIN = 128              # floor so (8,128)/(16,128) tiling always holds


# ----------------------------- Pallas MLP kernel ----------------------------
def deform_mlp_kernel(x_ref, w0_ref, b0_ref, wh_ref, bh_ref,
                      wha_ref, bha_ref, whb_ref, bhb_ref, o_ref):
    bf16 = jnp.bfloat16
    # feature_out: Linear(128,256) then 7x (ReLU, Linear(256,256)); f32 accum.
    # x_ref is already bf16 (cast in the wrapper) -> no per-step repack.
    h = jnp.dot(x_ref[...], w0_ref[...],
                preferred_element_type=jnp.float32) + b0_ref[...]
    for i in range(N_HIDDEN_LAYERS):
        h = jnp.dot(jnp.maximum(h, 0.0).astype(bf16), wh_ref[i],
                    preferred_element_type=jnp.float32) + bh_ref[i]

    r = jnp.maximum(h, 0.0).astype(bf16)

    # fused head first layers: (TN,256) @ (256,768) = [pos | scales | rotations]
    t = jnp.maximum(
        jnp.dot(r, wha_ref[...], preferred_element_type=jnp.float32)
        + bha_ref[...], 0.0).astype(bf16)

    # fused head second layers: block-diagonal (768,128) -> lane-dense output
    # bf16 store halves the HBM writeback of the mostly-zero delta slab.
    o_ref[...] = (jnp.dot(t, whb_ref[...], preferred_element_type=jnp.float32)
                  + bhb_ref[...]).astype(o_ref.dtype)


def pack_mlp_params(params):
    """Cast weights to bf16 and fuse/pad the three head projections."""
    (w0, b0, wh, bh, ah, ab, wp, bp, ws, bs, wr, br) = params
    bf16 = jnp.bfloat16
    # concat head first layers along output dim -> one (256, 768) matmul
    wha = jnp.concatenate([ah[0], ah[1], ah[2]], axis=1)        # (256, 768)
    bha = jnp.concatenate([ab[0], ab[1], ab[2]], axis=1)        # (1, 768)
    # block-diagonal, lane-padded head second layers -> one (768, 128) matmul
    whb = jnp.zeros((3 * W_HIDDEN, OUT_PAD), jnp.float32)
    whb = whb.at[0 * W_HIDDEN:1 * W_HIDDEN, 0:3].set(wp)
    whb = whb.at[1 * W_HIDDEN:2 * W_HIDDEN, 3:6].set(ws)
    whb = whb.at[2 * W_HIDDEN:3 * W_HIDDEN, 6:10].set(wr)
    bhb = jnp.zeros((1, OUT_PAD), jnp.float32)
    bhb = bhb.at[:, 0:3].set(bp).at[:, 3:6].set(bs).at[:, 6:10].set(br)
    return (w0.astype(bf16), b0, wh.astype(bf16), bh,
            wha.astype(bf16), bha, whb.astype(bf16), bhb)


def _pick_tn(n):
    """Choose points-per-step tile.

    Large N -> TN_DEFAULT (amortize per-step overhead, feed the MXU).
    Small/medium N -> shrink so the grid has >=2 steps (both v7x TensorCores
    are used by dimension_semantics=("parallel",)); floor at 128 rows.
    """
    if n >= 2 * TN_DEFAULT:
        return TN_DEFAULT
    tn = pl.next_power_of_2(max(int(pl.cdiv(n, 2)), 1))
    return int(min(max(tn, TN_MIN), TN_DEFAULT))


def deform_mlp_pallas(feat, packed, tn=None):
    """Run the fused deformation MLP; returns the (N, 128) bf16 packed delta slab."""
    n = feat.shape[0]
    if tn is None:
        tn = _pick_tn(n)
    n_pad = int(pl.cdiv(n, tn)) * tn

    # bf16 input stream: halves per-block DMA; (16,128) tiling satisfied
    # (tn >= 128, FEAT_DIM = 128). Pad after the cast to keep padding cheap.
    feat = feat.astype(jnp.bfloat16)
    if n_pad != n:
        feat = jnp.pad(feat, ((0, n_pad - n), (0, 0)))

    w0, b0, wh, bh, wha, bha, whb, bhb = packed

    # weights/biases: whole-array VMEM-resident (no per-step DMA, no 2x buffers)
    vmem = pl.BlockSpec(memory_space=pltpu.MemorySpace.VMEM)
    in_specs = [pl.BlockSpec((tn, FEAT_DIM), lambda i: (i, 0))] + [vmem] * 8
    out_specs = pl.BlockSpec((tn, OUT_PAD), lambda i: (i, 0))

    # VMEM budget @ TN=2048: 2x bf16 in-blocks (1 MB) + 2x bf16 out-blocks
    # (1 MB) + ~1.6 MB weights + ~6 MB intermediates  -> well under 32 MiB
    # (and under v7x's 64 MiB physical VMEM).
    delta = pl.pallas_call(
        deform_mlp_kernel,
        grid=(n_pad // tn,),
        in_specs=in_specs,
        out_specs=out_specs,
        out_shape=jax.ShapeDtypeStruct((n_pad, OUT_PAD), jnp.bfloat16),
        compiler_params=pltpu.CompilerParams(
            dimension_semantics=("parallel",),
            vmem_limit_bytes=32 * 1024 * 1024),
    )(feat, w0, b0, wh, bh, wha, bha, whb, bhb)
    return delta[:n]


# --------------------- HexPlaneField (plain JAX glue) ------------------------
def make_hexplane_grids(key):
    coo_combs = list(itertools.combinations(range(4), 2))
    grids = []
    for res in MULTIRES:
        reso = [BASE_RESO[0] * res, BASE_RESO[1] * res,
                BASE_RESO[2] * res, BASE_RESO[3]]
        planes = []
        for comb in coo_combs:
            # torch shape [1, out_dim, reso[comb[1]], reso[comb[0]]]
            shape = (OUT_COORD_DIM, reso[comb[1]], reso[comb[0]])
            if 3 in comb:
                planes.append(jnp.ones(shape, jnp.float32))
            else:
                key, sub = jax.random.split(key)
                planes.append(jax.random.uniform(sub, shape, jnp.float32,
                                                 0.1, 0.5))
        grids.append(planes)
    return grids


def _grid_sample_2d(plane, coords):
    # plane: (C, H, W); coords: (N, 2) with [:,0]=x over W, [:,1]=y over H
    # align_corners=True, mode='bilinear', padding_mode='border'
    C, H, W = plane.shape
    ix = (coords[:, 0] + 1.0) * 0.5 * (W - 1)
    iy = (coords[:, 1] + 1.0) * 0.5 * (H - 1)
    ix = jnp.clip(ix, 0.0, W - 1)
    iy = jnp.clip(iy, 0.0, H - 1)
    ix0f = jnp.floor(ix)
    iy0f = jnp.floor(iy)
    wx = ix - ix0f
    wy = iy - iy0f
    ix0 = ix0f.astype(jnp.int32)
    iy0 = iy0f.astype(jnp.int32)
    ix1 = jnp.minimum(ix0 + 1, W - 1)
    iy1 = jnp.minimum(iy0 + 1, H - 1)
    v00 = plane[:, iy0, ix0]
    v01 = plane[:, iy0, ix1]
    v10 = plane[:, iy1, ix0]
    v11 = plane[:, iy1, ix1]
    out = (v00 * (1 - wx) * (1 - wy) + v01 * wx * (1 - wy)
           + v10 * (1 - wx) * wy + v11 * wx * wy)
    return out.T  # (N, C)


def hexplane_features(pts_xyz, timestamps, grids):
    # matches torch: aabb[0] = +bounds, aabb[1] = -bounds  =>  p = -pts/bounds
    # TODO(synk): for large N move this 24-gather bilinear sampling into a
    # Pallas kernel (scalar-prefetch indices + manual DMA gather).
    aabb0 = jnp.array([BOUNDS] * 3, jnp.float32)
    aabb1 = jnp.array([-BOUNDS] * 3, jnp.float32)
    p = (pts_xyz - aabb0) * (2.0 / (aabb1 - aabb0)) - 1.0
    pts4 = jnp.concatenate([p, timestamps], axis=-1)      # (N, 4)
    coo_combs = list(itertools.combinations(range(4), 2))
    feats = []
    for planes in grids:
        interp = jnp.ones((pts4.shape[0], OUT_COORD_DIM), jnp.float32)
        for ci, comb in enumerate(coo_combs):
            interp = interp * _grid_sample_2d(planes[ci], pts4[:, list(comb)])
        feats.append(interp)
    return jnp.concatenate(feats, axis=-1)                # (N, 128)


# ----------------------------- parameter init --------------------------------
def _linear(key, fan_in, fan_out):
    k1, k2 = jax.random.split(key)
    bound = 1.0 / math.sqrt(fan_in)
    w = jax.random.uniform(k1, (fan_in, fan_out), jnp.float32, -bound, bound)
    b = jax.random.uniform(k2, (1, fan_out), jnp.float32, -bound, bound)
    return w, b


def make_mlp_params(key):
    keys = jax.random.split(key, 1 + N_HIDDEN_LAYERS + 6)
    it = iter(keys)
    w0, b0 = _linear(next(it), FEAT_DIM, W_HIDDEN)
    whs, bhs = zip(*[_linear(next(it), W_HIDDEN, W_HIDDEN)
                     for _ in range(N_HIDDEN_LAYERS)])
    wh = jnp.stack(whs)                    # (7, 256, 256)
    bh = jnp.stack(bhs)                    # (7, 1, 256)
    # head first layers (pos, scales, rotations); opacity head unused (no_do=True)
    ahs, abs_ = zip(*[_linear(next(it), W_HIDDEN, W_HIDDEN) for _ in range(3)])
    ah = jnp.stack(ahs)                    # (3, 256, 256)
    ab = jnp.stack(abs_)                   # (3, 1, 256)
    wp, bp = _linear(next(it), W_HIDDEN, 3)
    ws, bs = _linear(next(it), W_HIDDEN, 3)
    wr, br = _linear(next(it), W_HIDDEN, 4)
    return (w0, b0, wh, bh, ah, ab, wp, bp, ws, bs, wr, br)


# ----------------------------- full forward ----------------------------------
def deformation_forward(rays_pts_emb, scales_emb, rotations_emb, opacity_emb,
                        time_emb, grids, packed_params):
    feat = hexplane_features(rays_pts_emb[:, :3], time_emb[:, :1], grids)
    delta = deform_mlp_pallas(feat, packed_params)        # (N, 128) bf16 slab
    delta = delta.astype(jnp.float32)
    pts = rays_pts_emb[:, :3] + delta[:, 0:3]
    scales = scales_emb[:, :3] + delta[:, 3:6]
    rotations = rotations_emb[:, :4] + delta[:, 6:10]
    opacity = opacity_emb[:, :1]                          # no_do = True
    return pts, scales, rotations, opacity


# --------- plain-JAX reference (same bf16-in / f32-accum matmul math) ---------
def _ref_heads(feat, params):
    (w0, b0, wh, bh, ah, ab, wp, bp, ws, bs, wr, br) = params
    bf16 = jnp.bfloat16

    def dot(a, b):
        return jnp.dot(a.astype(bf16), b.astype(bf16),
                       preferred_element_type=jnp.float32)

    h = dot(feat, w0) + b0
    for i in range(N_HIDDEN_LAYERS):
        h = dot(jnp.maximum(h, 0.0), wh[i]) + bh[i]
    r = jnp.maximum(h, 0.0)

    def head(i, w2, b2):
        t = jnp.maximum(dot(r, ah[i]) + ab[i], 0.0)
        return dot(t, w2) + b2

    return head(0, wp, bp), head(1, ws, bs), head(2, wr, br)


if __name__ == "__main__":
    key = jax.random.PRNGKey(0)
    N = 256
    key, k0, k1, k2, k3, k4, kg, km = jax.random.split(key, 8)

    rays_pts_emb = jax.random.uniform(k0, (N, 3), jnp.float32, -BOUNDS, BOUNDS)
    scales_emb = jax.random.uniform(k1, (N, 3), jnp.float32, -1.0, 1.0)
    rotations_emb = jax.random.uniform(k2, (N, 4), jnp.float32, -1.0, 1.0)
    opacity_emb = jax.random.uniform(k3, (N, 1), jnp.float32, 0.0, 1.0)
    time_emb = jax.random.uniform(k4, (N, 1), jnp.float32, 0.0, 1.0)

    grids = make_hexplane_grids(kg)
    params = make_mlp_params(km)
    packed = pack_mlp_params(params)

    pts, scales, rotations, opacity = deformation_forward(
        rays_pts_emb, scales_emb, rotations_emb, opacity_emb, time_emb,
        grids, packed)
    jax.block_until_ready((pts, scales, rotations, opacity))

    # sanity check against a plain-JAX reference using identical matmul precision
    feat = hexplane_features(rays_pts_emb[:, :3], time_emb[:, :1], grids)
    dpts, dscl, drot = _ref_heads(feat, params)
    r_pts = rays_pts_emb[:, :3] + dpts
    r_scl = scales_emb[:, :3] + dscl
    r_rot = rotations_emb[:, :4] + drot
    assert jnp.max(jnp.abs(pts - r_pts)) < 1e-2
    assert jnp.max(jnp.abs(scales - r_scl)) < 1e-2
    assert jnp.max(jnp.abs(rotations - r_rot)) < 1e-2
    assert pts.shape == (N, 3) and scales.shape == (N, 3)
    assert rotations.shape == (N, 4) and opacity.shape == (N, 1)
    assert bool(jnp.all(jnp.isfinite(pts)))

    print("KERNEL_OK")
</pallas_src>

<mosaic_0001>
module attributes {stable_mosaic.version = 11 : i64} {
  func.func @deform_mlp_kernel(%arg0: i32, %arg1: memref<128x128xbf16, #tpu.memory_space<vmem>>, %arg2: memref<128x256xbf16, #tpu.memory_space<vmem>>, %arg3: memref<1x256xf32, #tpu.memory_space<vmem>>, %arg4: memref<7x256x256xbf16, #tpu.memory_space<vmem>>, %arg5: memref<7x1x256xf32, #tpu.memory_space<vmem>>, %arg6: memref<256x768xbf16, #tpu.memory_space<vmem>>, %arg7: memref<1x768xf32, #tpu.memory_space<vmem>>, %arg8: memref<768x128xbf16, #tpu.memory_space<vmem>>, %arg9: memref<1x128xf32, #tpu.memory_space<vmem>>, %arg10: memref<128x128xbf16, #tpu.memory_space<vmem>>) attributes {dimension_semantics = [#tpu.dimension_semantics<parallel>], iteration_bounds = array<i64: 2>, scalar_prefetch = 0 : i64, scratch_operands = 0 : i64, tpu.core_type = #tpu.core_type<tc>, window_params = [{transform_indices = @transform_0, window_bounds = array<i64: 128, 128>}, {pipeline_mode = #tpu.pipeline_mode<synchronous>, transform_indices = @transform_1, window_bounds = array<i64: 128, 256>}, {pipeline_mode = #tpu.pipeline_mode<synchronous>, transform_indices = @transform_2, window_bounds = array<i64: 1, 256>}, {pipeline_mode = #tpu.pipeline_mode<synchronous>, transform_indices = @transform_3, window_bounds = array<i64: 7, 256, 256>}, {pipeline_mode = #tpu.pipeline_mode<synchronous>, transform_indices = @transform_4, window_bounds = array<i64: 7, 1, 256>}, {pipeline_mode = #tpu.pipeline_mode<synchronous>, transform_indices = @transform_5, window_bounds = array<i64: 256, 768>}, {pipeline_mode = #tpu.pipeline_mode<synchronous>, transform_indices = @transform_6, window_bounds = array<i64: 1, 768>}, {pipeline_mode = #tpu.pipeline_mode<synchronous>, transform_indices = @transform_7, window_bounds = array<i64: 768, 128>}, {pipeline_mode = #tpu.pipeline_mode<synchronous>, transform_indices = @transform_8, window_bounds = array<i64: 1, 128>}, {transform_indices = @transform_9, window_bounds = array<i64: 128, 128>}]} {
    %c0 = arith.constant 0 : index
    %c0_0 = arith.constant 0 : index
    %0 = vector.load %arg1[%c0, %c0_0] : memref<128x128xbf16, #tpu.memory_space<vmem>>, vector<128x128xbf16>
    %c0_1 = arith.constant 0 : index
    %c0_2 = arith.constant 0 : index
    %1 = vector.load %arg2[%c0_1, %c0_2] : memref<128x256xbf16, #tpu.memory_space<vmem>>, vector<128x256xbf16>
    %cst = arith.constant dense<0.000000e+00> : vector<128x256xf32>
    %2 = tpu.matmul %0, %1, %cst {dimension_numbers = #tpu.dot_dimension_numbers<[1], [0], [0], [1], [0, 0, 1, 1], [], []>} : vector<128x128xbf16>, vector<128x256xbf16>, vector<128x256xf32> -> vector<128x256xf32>
    %c0_3 = arith.constant 0 : index
    %c0_4 = arith.constant 0 : index
    %3 = vector.load %arg3[%c0_3, %c0_4] : memref<1x256xf32, #tpu.memory_space<vmem>>, vector<1x256xf32>
    %4 = vector.broadcast %3 : vector<1x256xf32> to vector<128x256xf32>
    %5 = arith.addf %2, %4 : vector<128x256xf32>
    %cst_5 = arith.constant 0.000000e+00 : f32
    %6 = vector.broadcast %cst_5 : f32 to vector<128x256xf32>
    %7 = arith.maximumf %5, %6 : vector<128x256xf32>
    %8 = arith.truncf %7 : vector<128x256xf32> to vector<128x256xbf16>
    %c0_6 = arith.constant 0 : index
    %c0_7 = arith.constant 0 : index
    %c0_8 = arith.constant 0 : index
    %9 = vector.load %arg4[%c0_6, %c0_7, %c0_8] : memref<7x256x256xbf16, #tpu.memory_space<vmem>>, vector<1x256x256xbf16>
    %10 = vector.shape_cast %9 : vector<1x256x256xbf16> to vector<256x256xbf16>
    %cst_9 = arith.constant dense<0.000000e+00> : vector<128x256xf32>
    %11 = tpu.matmul %8, %10, %cst_9 {dimension_numbers = #tpu.dot_dimension_numbers<[1], [0], [0], [1], [0, 0, 1, 1], [], []>} : vector<128x256xbf16>, vector<256x256xbf16>, vector<128x256xf32> -> vector<128x256xf32>
    %c0_10 = arith.constant 0 : index
    %c0_11 = arith.constant 0 : index
    %c0_12 = arith.constant 0 : index
    %12 = vector.load %arg5[%c0_10, %c0_11, %c0_12] : memref<7x1x256xf32, #tpu.memory_space<vmem>>, vector<1x1x256xf32>
    %13 = vector.shape_cast %12 : vector<1x1x256xf32> to vector<1x256xf32>
    %14 = vector.broadcast %13 : vector<1x256xf32> to vector<128x256xf32>
    %15 = arith.addf %11, %14 : vector<128x256xf32>
    %cst_13 = arith.constant 0.000000e+00 : f32
    %16 = vector.broadcast %cst_13 : f32 to vector<128x256xf32>
    %17 = arith.maximumf %15, %16 : vector<128x256xf32>
    %18 = arith.truncf %17 : vector<128x256xf32> to vector<128x256xbf16>
    %c1 = arith.constant 1 : index
    %c0_14 = arith.constant 0 : index
    %c0_15 = arith.constant 0 : index
    %19 = vector.load %arg4[%c1, %c0_14, %c0_15] : memref<7x256x256xbf16, #tpu.memory_space<vmem>>, vector<1x256x256xbf16>
    %20 = vector.shape_cast %19 : vector<1x256x256xbf16> to vector<256x256xbf16>
    %cst_16 = arith.constant dense<0.000000e+00> : vector<128x256xf32>
    %21 = tpu.matmul %18, %20, %cst_16 {dimension_numbers = #tpu.dot_dimension_numbers<[1], [0], [0], [1], [0, 0, 1, 1], [], []>} : vector<128x256xbf16>, vector<256x256xbf16>, vector<128x256xf32> -> vector<128x256xf32>
    %c1_17 = arith.constant 1 : index
    %c0_18 = arith.constant 0 : index
    %c0_19 = arith.constant 0 : index
    %22 = vector.load %arg5[%c1_17, %c0_18, %c0_19] : memref<7x1x256xf32, #tpu.memory_space<vmem>>, vector<1x1x256xf32>
    %23 = vector.shape_cast %22 : vector<1x1x256xf32> to vector<1x256xf32>
    %24 = vector.broadcast %23 : vector<1x256xf32> to vector<128x256xf32>
    %25 = arith.addf %21, %24 : vector<128x256xf32>
    %cst_20 = arith.constant 0.000000e+00 : f32
    %26 = vector.broadcast %cst_20 : f32 to vector<128x256xf32>
    %27 = arith.maximumf %25, %26 : vector<128x256xf32>
    %28 = arith.truncf %27 : vector<128x256xf32> to vector<128x256xbf16>
    %c2 = arith.constant 2 : index
    %c0_21 = arith.constant 0 : index
    %c0_22 = arith.constant 0 : index
    %29 = vector.load %arg4[%c2, %c0_21, %c0_22] : memref<7x256x256xbf16, #tpu.memory_space<vmem>>, vector<1x256x256xbf16>
    %30 = vector.shape_cast %29 : vector<1x256x256xbf16> to vector<256x256xbf16>
    %cst_23 = arith.constant dense<0.000000e+00> : vector<128x256xf32>
    %31 = tpu.matmul %28, %30, %cst_23 {dimension_numbers = #tpu.dot_dimension_numbers<[1], [0], [0], [1], [0, 0, 1, 1], [], []>} : vector<128x256xbf16>, vector<256x256xbf16>, vector<128x256xf32> -> vector<128x256xf32>
    %c2_24 = arith.constant 2 : index
    %c0_25 = arith.constant 0 : index
    %c0_26 = arith.constant 0 : index
    %32 = vector.load %arg5[%c2_24, %c0_25, %c0_26] : memref<7x1x256xf32, #tpu.memory_space<vmem>>, vector<1x1x256xf32>
    %33 = vector.shape_cast %32 : vector<1x1x256xf32> to vector<1x256xf32>
    %34 = vector.broadcast %33 : vector<1x256xf32> to vector<128x256xf32>
    %35 = arith.addf %31, %34 : vector<128x256xf32>
    %cst_27 = arith.constant 0.000000e+00 : f32
    %36 = vector.broadcast %cst_27 : f32 to vector<128x256xf32>
    %37 = arith.maximumf %35, %36 : vector<128x256xf32>
    %38 = arith.truncf %37 : vector<128x256xf32> to vector<128x256xbf16>
    %c3 = arith.constant 3 : index
    %c0_28 = arith.constant 0 : index
    %c0_29 = arith.constant 0 : index
    %39 = vector.load %arg4[%c3, %c0_28, %c0_29] : memref<7x256x256xbf16, #tpu.memory_space<vmem>>, vector<1x256x256xbf16>
    %40 = vector.shape_cast %39 : vector<1x256x256xbf16> to vector<256x256xbf16>
    %cst_30 = arith.constant dense<0.000000e+00> : vector<128x256xf32>
    %41 = tpu.matmul %38, %40, %cst_30 {dimension_numbers = #tpu.dot_dimension_numbers<[1], [0], [0], [1], [0, 0, 1, 1], [], []>} : vector<128x256xbf16>, vector<256x256xbf16>, vector<128x256xf32> -> vector<128x256xf32>
    %c3_31 = arith.constant 3 : index
    %c0_32 = arith.constant 0 : index
    %c0_33 = arith.constant 0 : index
    %42 = vector.load %arg5[%c3_31, %c0_32, %c0_33] : memref<7x1x256xf32, #tpu.memory_space<vmem>>, vector<1x1x256xf32>
    %43 = vector.shape_cast %42 : vector<1x1x256xf32> to vector<1x256xf32>
    %44 = vector.broadcast %43 : vector<1x256xf32> to vector<128x256xf32>
    %45 = arith.addf %41, %44 : vector<128x256xf32>
    %cst_34 = arith.constant 0.000000e+00 : f32
    %46 = vector.broadcast %cst_34 : f32 to vector<128x256xf32>
    %47 = arith.maximumf %45, %46 : vector<128x256xf32>
    %48 = arith.truncf %47 : vector<128x256xf32> to vector<128x256xbf16>
    %c4 = arith.constant 4 : index
    %c0_35 = arith.constant 0 : index
    %c0_36 = arith.constant 0 : index
    %49 = vector.load %arg4[%c4, %c0_35, %c0_36] : memref<7x256x256xbf16, #tpu.memory_space<vmem>>, vector<1x256x256xbf16>
    %50 = vector.shape_cast %49 : vector<1x256x256xbf16> to vector<256x256xbf16>
    %cst_37 = arith.constant dense<0.000000e+00> : vector<128x256xf32>
    %51 = tpu.matmul %48, %50, %cst_37 {dimension_numbers = #tpu.dot_dimension_numbers<[1], [0], [0], [1], [0, 0, 1, 1], [], []>} : vector<128x256xbf16>, vector<256x256xbf16>, vector<128x256xf32> -> vector<128x256xf32>
    %c4_38 = arith.constant 4 : index
    %c0_39 = arith.constant 0 : index
    %c0_40 = arith.constant 0 : index
    %52 = vector.load %arg5[%c4_38, %c0_39, %c0_40] : memref<7x1x256xf32, #tpu.memory_space<vmem>>, vector<1x1x256xf32>
    %53 = vector.shape_cast %52 : vector<1x1x256xf32> to vector<1x256xf32>
    %54 = vector.broadcast %53 : vector<1x256xf32> to vector<128x256xf32>
    %55 = arith.addf %51, %54 : vector<128x256xf32>
    %cst_41 = arith.constant 0.000000e+00 : f32
    %56 = vector.broadcast %cst_41 : f32 to vector<128x256xf32>
    %57 = arith.maximumf %55, %56 : vector<128x256xf32>
    %58 = arith.truncf %57 : vector<128x256xf32> to vector<128x256xbf16>
    %c5 = arith.constant 5 : index
    %c0_42 = arith.constant 0 : index
    %c0_43 = arith.constant 0 : index
    %59 = vector.load %arg4[%c5, %c0_42, %c0_43] : memref<7x256x256xbf16, #tpu.memory_space<vmem>>, vector<1x256x256xbf16>
    %60 = vector.shape_cast %59 : vector<1x256x256xbf16> to vector<256x256xbf16>
    %cst_44 = arith.constant dense<0.000000e+00> : vector<128x256xf32>
    %61 = tpu.matmul %58, %60, %cst_44 {dimension_numbers = #tpu.dot_dimension_numbers<[1], [0], [0], [1], [0, 0, 1, 1], [], []>} : vector<128x256xbf16>, vector<256x256xbf16>, vector<128x256xf32> -> vector<128x256xf32>
    %c5_45 = arith.constant 5 : index
    %c0_46 = arith.constant 0 : index
    %c0_47 = arith.constant 0 : index
    %62 = vector.load %arg5[%c5_45, %c0_46, %c0_47] : memref<7x1x256xf32, #tpu.memory_space<vmem>>, vector<1x1x256xf32>
    %63 = vector.shape_cast %62 : vector<1x1x256xf32> to vector<1x256xf32>
    %64 = vector.broadcast %63 : vector<1x256xf32> to vector<128x256xf32>
    %65 = arith.addf %61, %64 : vector<128x256xf32>
    %cst_48 = arith.constant 0.000000e+00 : f32
    %66 = vector.broadcast %cst_48 : f32 to vector<128x256xf32>
    %67 = arith.maximumf %65, %66 : vector<128x256xf32>
    %68 = arith.truncf %67 : vector<128x256xf32> to vector<128x256xbf16>
    %c6 = arith.constant 6 : index
    %c0_49 = arith.constant 0 : index
    %c0_50 = arith.constant 0 : index
    %69 = vector.load %arg4[%c6, %c0_49, %c0_50] : memref<7x256x256xbf16, #tpu.memory_space<vmem>>, vector<1x256x256xbf16>
    %70 = vector.shape_cast %69 : vector<1x256x256xbf16> to vector<256x256xbf16>
    %cst_51 = arith.constant dense<0.000000e+00> : vector<128x256xf32>
    %71 = tpu.matmul %68, %70, %cst_51 {dimension_numbers = #tpu.dot_dimension_numbers<[1], [0], [0], [1], [0, 0, 1, 1], [], []>} : vector<128x256xbf16>, vector<256x256xbf16>, vector<128x256xf32> -> vector<128x256xf32>
    %c6_52 = arith.constant 6 : index
    %c0_53 = arith.constant 0 : index
    %c0_54 = arith.constant 0 : index
    %72 = vector.load %arg5[%c6_52, %c0_53, %c0_54] : memref<7x1x256xf32, #tpu.memory_space<vmem>>, vector<1x1x256xf32>
    %73 = vector.shape_cast %72 : vector<1x1x256xf32> to vector<1x256xf32>
    %74 = vector.broadcast %73 : vector<1x256xf32> to vector<128x256xf32>
    %75 = arith.addf %71, %74 : vector<128x256xf32>
    %cst_55 = arith.constant 0.000000e+00 : f32
    %76 = vector.broadcast %cst_55 : f32 to vector<128x256xf32>
    %77 = arith.maximumf %75, %76 : vector<128x256xf32>
    %78 = arith.truncf %77 : vector<128x256xf32> to vector<128x256xbf16>
    %c0_56 = arith.constant 0 : index
    %c0_57 = arith.constant 0 : index
    %79 = vector.load %arg6[%c0_56, %c0_57] : memref<256x768xbf16, #tpu.memory_space<vmem>>, vector<256x768xbf16>
    %cst_58 = arith.constant dense<0.000000e+00> : vector<128x768xf32>
    %80 = tpu.matmul %78, %79, %cst_58 {dimension_numbers = #tpu.dot_dimension_numbers<[1], [0], [0], [1], [0, 0, 1, 1], [], []>} : vector<128x256xbf16>, vector<256x768xbf16>, vector<128x768xf32> -> vector<128x768xf32>
    %c0_59 = arith.constant 0 : index
    %c0_60 = arith.constant 0 : index
    %81 = vector.load %arg7[%c0_59, %c0_60] : memref<1x768xf32, #tpu.memory_space<vmem>>, vector<1x768xf32>
    %82 = vector.broadcast %81 : vector<1x768xf32> to vector<128x768xf32>
    %83 = arith.addf %80, %82 : vector<128x768xf32>
    %cst_61 = arith.constant 0.000000e+00 : f32
    %84 = vector.broadcast %cst_61 : f32 to vector<128x768xf32>
    %85 = arith.maximumf %83, %84 : vector<128x768xf32>
    %86 = arith.truncf %85 : vector<128x768xf32> to vector<128x768xbf16>
    %c0_62 = arith.constant 0 : index
    %c0_63 = arith.constant 0 : index
    %87 = vector.load %arg8[%c0_62, %c0_63] : memref<768x128xbf16, #tpu.memory_space<vmem>>, vector<768x128xbf16>
    %cst_64 = arith.constant dense<0.000000e+00> : vector<128x128xf32>
    %88 = tpu.matmul %86, %87, %cst_64 {dimension_numbers = #tpu.dot_dimension_numbers<[1], [0], [0], [1], [0, 0, 1, 1], [], []>} : vector<128x768xbf16>, vector<768x128xbf16>, vector<128x128xf32> -> vector<128x128xf32>
    %c0_65 = arith.constant 0 : index
    %c0_66 = arith.constant 0 : index
    %89 = vector.load %arg9[%c0_65, %c0_66] : memref<1x128xf32, #tpu.memory_space<vmem>>, vector<1x128xf32>
    %90 = vector.broadcast %89 : vector<1x128xf32> to vector<128x128xf32>
    %91 = arith.addf %88, %90 : vector<128x128xf32>
    %92 = arith.truncf %91 : vector<128x128xf32> to vector<128x128xbf16>
    %c0_67 = arith.constant 0 : index
    %c0_68 = arith.constant 0 : index
    %93 = vector.load %arg10[%c0_67, %c0_68] : memref<128x128xbf16, #tpu.memory_space<vmem>>, vector<128x128xbf16>
    tpu.vector_store %arg10[%c0_67, %c0_68], %92 {strides = array<i32>} : memref<128x128xbf16, #tpu.memory_space<vmem>>, vector<128x128xbf16>,
    return
  }
  func.func @transform_0(%arg0: i32) -> (i32, i32) {
    %c0_i32 = arith.constant 0 : i32
    %c0_i32_0 = arith.constant 0 : i32
    return %arg0, %c0_i32 : i32, i32
  }
  func.func @transform_1(%arg0: i32) -> (i32, i32) {
    %c0_i32 = arith.constant 0 : i32
    %c0_i32_0 = arith.constant 0 : i32
    %c0_i32_1 = arith.constant 0 : i32
    return %c0_i32, %c0_i32_0 : i32, i32
  }
  func.func @transform_2(%arg0: i32) -> (i32, i32) {
    %c0_i32 = arith.constant 0 : i32
    %c0_i32_0 = arith.constant 0 : i32
    %c0_i32_1 = arith.constant 0 : i32
    return %c0_i32, %c0_i32_0 : i32, i32
  }
  func.func @transform_3(%arg0: i32) -> (i32, i32, i32) {
    %c0_i32 = arith.constant 0 : i32
    %c0_i32_0 = arith.constant 0 : i32
    %c0_i32_1 = arith.constant 0 : i32
    %c0_i32_2 = arith.constant 0 : i32
    return %c0_i32, %c0_i32_0, %c0_i32_1 : i32, i32, i32
  }
  func.func @transform_4(%arg0: i32) -> (i32, i32, i32) {
    %c0_i32 = arith.constant 0 : i32
    %c0_i32_0 = arith.constant 0 : i32
    %c0_i32_1 = arith.constant 0 : i32
    %c0_i32_2 = arith.constant 0 : i32
    return %c0_i32, %c0_i32_0, %c0_i32_1 : i32, i32, i32
  }
  func.func @transform_5(%arg0: i32) -> (i32, i32) {
    %c0_i32 = arith.constant 0 : i32
    %c0_i32_0 = arith.constant 0 : i32
    %c0_i32_1 = arith.constant 0 : i32
    return %c0_i32, %c0_i32_0 : i32, i32
  }
  func.func @transform_6(%arg0: i32) -> (i32, i32) {
    %c0_i32 = arith.constant 0 : i32
    %c0_i32_0 = arith.constant 0 : i32
    %c0_i32_1 = arith.constant 0 : i32
    return %c0_i32, %c0_i32_0 : i32, i32
  }
  func.func @transform_7(%arg0: i32) -> (i32, i32) {
    %c0_i32 = arith.constant 0 : i32
    %c0_i32_0 = arith.constant 0 : i32
    %c0_i32_1 = arith.constant 0 : i32
    return %c0_i32, %c0_i32_0 : i32, i32
  }
  func.func @transform_8(%arg0: i32) -> (i32, i32) {
    %c0_i32 = arith.constant 0 : i32
    %c0_i32_0 = arith.constant 0 : i32
    %c0_i32_1 = arith.constant 0 : i32
    return %c0_i32, %c0_i32_0 : i32, i32
  }
  func.func @transform_9(%arg0: i32) -> (i32, i32) {
    %c0_i32 = arith.constant 0 : i32
    %c0_i32_0 = arith.constant 0 : i32
    return %arg0, %c0_i32 : i32, i32
  }
}

</mosaic_0001>

<llo_original>
// kernel: tpu_custom_call.1
$region0: #{tpu_custom_call.1}
  #allocation0 [shape = 'u32[]', space=smem, size = 0x4, offset = 0x4, fixed_abs, tag = 'smem constant byte address 0x4 - core index']
  #allocation1 [shape = 'u32[144,128]{1,0:T(1,128)}', space=vmem, size = 0x12000, scoped, tag = 'internal scratch']
  %s0 = inlined_call_operand.hbm [shape: bf16[256,128], index: 0, kind: input, shape index: {}]
  %s1 = inlined_call_operand.hbm [shape: bf16[128,256], index: 1, kind: input, shape index: {}]
  %s2 = inlined_call_operand.hbm [shape: f32[1,256], index: 2, kind: input, shape index: {}]
  %s3 = inlined_call_operand.hbm [shape: bf16[7,256,256], index: 3, kind: input, shape index: {}]
  %s4 = inlined_call_operand.vmem [shape: f32[7,1,256], index: 4, kind: input, shape index: {}]
  %s5 = inlined_call_operand.hbm [shape: bf16[256,768], index: 5, kind: input, shape index: {}]
  %s6 = inlined_call_operand.vmem [shape: f32[1,768], index: 6, kind: input, shape index: {}]
  %s7 = inlined_call_operand.hbm [shape: bf16[768,128], index: 7, kind: input, shape index: {}]
  %s8 = inlined_call_operand.vmem [shape: f32[1,128], index: 8, kind: input, shape index: {}]
  %s9 = inlined_call_operand.hbm [shape: bf16[256,128], index: 9, kind: output, shape index: {}]
  %s10 = sld [smem:[#allocation0]]
  $region93: #{tpu_custom_call.1} parent=0
    _
  %s12 = ssub.s32 1, %s10
  %s13 = scalar_select 0, %s12, %s10
  $region1: #{tpu_custom_call.1} parent=0
    #allocation2 [shape = 'u8[65536]{0}', space=vmem, size = 0x10000, scoped, tag = 'input window, operand 0']
    #allocation3 [shape = 's32[2]{0}', space=sflag, size = 0x8, scoped, tag = 'scoped memory for tpu_custom_call.1']
    #allocation4 [shape = 's32[2]{0}', space=sflag, size = 0x8, scoped, tag = 'scoped memory for tpu_custom_call.1']
    #allocation5 [shape = 'u8[65536]{0}', space=vmem, size = 0x10000, scoped, tag = 'input window, operand 1, single buffered']
    #allocation6 [shape = 's32[1]{0}', space=sflag, size = 0x4, scoped, tag = 'scoped memory for tpu_custom_call.1']
    #allocation7 [shape = 'u8[1024]{0}', space=vmem, size = 0x400, scoped, tag = 'input window, operand 2, single buffered']
    #allocation8 [shape = 'u8[917504]{0}', space=vmem, size = 0xe0000, scoped, tag = 'input window, operand 3, single buffered']
    #allocation9 [shape = 's32[1]{0}', space=sflag, size = 0x4, scoped, tag = 'scoped memory for tpu_custom_call.1']
    #allocation10 [shape = 'u8[393216]{0}', space=vmem, size = 0x60000, scoped, tag = 'input window, operand 5, single buffered']
    #allocation11 [shape = 'u8[196608]{0}', space=vmem, size = 0x30000, scoped, tag = 'input window, operand 7, single buffered']
    #allocation12 [shape = 's32[1]{0}', space=sflag, size = 0x4, scoped, tag = 'scoped memory for tpu_custom_call.1']
    #allocation13 [shape = 'u8[65536]{0}', space=vmem, size = 0x10000, scoped, tag = 'output window, operand 0']
    %14 = vsyncpa [#allocation3], 0
    %s15 = scalar_lea.sflag [#allocation3], 1
    %16 = vsyncpa %s15, 0
    %17 = vsyncpa [#allocation6], 0
    %18 = vsyncpa [#allocation9], 0
    %19 = vsyncpa [#allocation12], 0
    %20 = vsyncpa [#allocation4], 0
    %s21 = scalar_lea.sflag [#allocation4], 1
    %22 = vsyncpa %s21, 0
    loop: start=0, step=1, limit=4
    $region2: #{tpu_custom_call.1} parent=1 // loop_pre_header
      _
    $region3: #{tpu_custom_call.1} parent=1 // loop_header
      %s24 = sphi 0, %s28
      %p25 = scmp.ge.s32.totalorder %s24, 4
      %s34 = sphi 0, %s36
      %s37 = sphi 0, %s34
      %s38 = sphi 0, %s37
      %s54 = sphi 0, %s38
      %s58 = sphi 0, %s58
      %s60 = sphi 0, %s58
      %s61 = sphi 0, %s60
      %s75 = sphi 0, %s61
      %s79 = sphi 0, %s79
      %s81 = sphi 0, %s79
      %s82 = sphi 0, %s81
      %s96 = sphi 0, %s82
      %s100 = sphi 0, %s100
      %s102 = sphi 0, %s100
      %s103 = sphi 0, %s102
      %s117 = sphi 0, %s103
      %s121 = sphi 0, %s121
      %s123 = sphi 0, %s121
      %s124 = sphi 0, %s123
      %s138 = sphi 0, %s124
      %s142 = sphi 0, %s142
      %s144 = sphi 0, %s142
      %s145 = sphi 0, %s144
      %s159 = sphi 0, %s145
      %s163 = sphi 0, %s163
      %s165 = sphi 0, %s163
      %s166 = sphi 0, %s165
      %s180 = sphi 0, %s166
      %s184 = sphi 0, %s184
      %s186 = sphi 0, %s184
      %s187 = sphi 0, %s186
      %s201 = sphi 0, %s187
      %s205 = sphi 0, %s205
      %s207 = sphi 0, %s205
      %s208 = sphi 0, %s207
      %s222 = sphi 0, %s208
      %s228 = sphi 0, %s230
      %s231 = sphi 0, %s228
      %s232 = sphi 0, %s231
      %s248 = sphi 0, %s232
    $region4: #{tpu_custom_call.1} parent=1 // loop_header_branch
      %27 = sbr.rel (%p25) target = $region8
    $region5: #{tpu_custom_call.1} parent=1 // loop_body
      %s29 = ssub.s32 %s24, 1
      %s30 = ssub.s32 %s24, 2
      %s31 = sadd.s32 %s24, 1
      %s32 = ssub.s32 %s24, %s31
      %p33 = scmp.eq.s32.totalorder %s32, 0
      %s35 = sadd.s32 %s34, 1
      %s36 = scalar_select %p33, %s34, %s35
      %p39 = pneg %p33
      %p40 = scmp.eq.s32.totalorder %s24, 1
      %p41 = por %p39, %p40
      %p42 = scmp.ne.s32.totalorder %s34, %s37
      %p43 = scmp.eq.s32.totalorder %s24, 0
      %p44 = por %p42, %p43
      %p45 = scmp.ne.s32.totalorder %s34, %s37
      %p46 = scmp.eq.s32.totalorder %s29, 1
      %p47 = por %p45, %p46
      %p48 = scmp.ne.s32.totalorder %s37, %s38
      %p49 = scmp.eq.s32.totalorder %s29, 0
      %p50 = por %p48, %p49
      %p51 = scmp.ne.s32.totalorder %s37, %s38
      %p52 = scmp.eq.s32.totalorder %s30, 1
      %p53 = por %p51, %p52
      %p55 = scmp.ne.s32.totalorder %s38, %s54
      %p56 = scmp.eq.s32.totalorder %s30, 0
      %p57 = por %p55, %p56
      %s59 = sadd.s32 %s58, 1
      %p62 = scmp.eq.s32.totalorder %s24, 1
      %p63 = scmp.ne.s32.totalorder %s58, %s60
      %p64 = scmp.eq.s32.totalorder %s24, 0
      %p65 = por %p63, %p64
      %p66 = scmp.ne.s32.totalorder %s58, %s60
      %p67 = scmp.eq.s32.totalorder %s29, 1
      %p68 = por %p66, %p67
      %p69 = scmp.ne.s32.totalorder %s60, %s61
      %p70 = scmp.eq.s32.totalorder %s29, 0
      %p71 = por %p69, %p70
      %p72 = scmp.ne.s32.totalorder %s60, %s61
      %p73 = scmp.eq.s32.totalorder %s30, 1
      %p74 = por %p72, %p73
      %p76 = scmp.ne.s32.totalorder %s61, %s75
      %p77 = scmp.eq.s32.totalorder %s30, 0
      %p78 = por %p76, %p77
      %s80 = sadd.s32 %s79, 1
      %p83 = scmp.eq.s32.totalorder %s24, 1
      %p84 = scmp.ne.s32.totalorder %s79, %s81
      %p85 = scmp.eq.s32.totalorder %s24, 0
      %p86 = por %p84, %p85
      %p87 = scmp.ne.s32.totalorder %s79, %s81
      %p88 = scmp.eq.s32.totalorder %s29, 1
      %p89 = por %p87, %p88
      %p90 = scmp.ne.s32.totalorder %s81, %s82
      %p91 = scmp.eq.s32.totalorder %s29, 0
      %p92 = por %p90, %p91
      %p93 = scmp.ne.s32.totalorder %s81, %s82
      %p94 = scmp.eq.s32.totalorder %s30, 1
      %p95 = por %p93, %p94
      %p97 = scmp.ne.s32.totalorder %s82, %s96
      %p98 = scmp.eq.s32.totalorder %s30, 0
      %p99 = por %p97, %p98
      %s101 = sadd.s32 %s100, 1
      %p104 = scmp.eq.s32.totalorder %s24, 1
      %p105 = scmp.ne.s32.totalorder %s100, %s102
      %p106 = scmp.eq.s32.totalorder %s24, 0
      %p107 = por %p105, %p106
      %p108 = scmp.ne.s32.totalorder %s100, %s102
      %p109 = scmp.eq.s32.totalorder %s29, 1
      %p110 = por %p108, %p109
      %p111 = scmp.ne.s32.totalorder %s102, %s103
      %p112 = scmp.eq.s32.totalorder %s29, 0
      %p113 = por %p111, %p112
      %p114 = scmp.ne.s32.totalorder %s102, %s103
      %p115 = scmp.eq.s32.totalorder %s30, 1
      %p116 = por %p114, %p115
      %p118 = scmp.ne.s32.totalorder %s103, %s117
      %p119 = scmp.eq.s32.totalorder %s30, 0
      %p120 = por %p118, %p119
      %s122 = sadd.s32 %s121, 1
      %p125 = scmp.eq.s32.totalorder %s24, 1
      %p126 = scmp.ne.s32.totalorder %s121, %s123
      %p127 = scmp.eq.s32.totalorder %s24, 0
      %p128 = por %p126, %p127
      %p129 = scmp.ne.s32.totalorder %s121, %s123
      %p130 = scmp.eq.s32.totalorder %s29, 1
      %p131 = por %p129, %p130
      %p132 = scmp.ne.s32.totalorder %s123, %s124
      %p133 = scmp.eq.s32.totalorder %s29, 0
      %p134 = por %p132, %p133
      %p135 = scmp.ne.s32.totalorder %s123, %s124
      %p136 = scmp.eq.s32.totalorder %s30, 1
      %p137 = por %p135, %p136
      %p139 = scmp.ne.s32.totalorder %s124, %s138
      %p140 = scmp.eq.s32.totalorder %s30, 0
      %p141 = por %p139, %p140
      %s143 = sadd.s32 %s142, 1
      %p146 = scmp.eq.s32.totalorder %s24, 1
      %p147 = scmp.ne.s32.totalorder %s142, %s144
      %p148 = scmp.eq.s32.totalorder %s24, 0
      %p149 = por %p147, %p148
      %p150 = scmp.ne.s32.totalorder %s142, %s144
      %p151 = scmp.eq.s32.totalorder %s29, 1
      %p152 = por %p150, %p151
      %p153 = scmp.ne.s32.totalorder %s144, %s145
      %p154 = scmp.eq.s32.totalorder %s29, 0
      %p155 = por %p153, %p154
      %p156 = scmp.ne.s32.totalorder %s144, %s145
      %p157 = scmp.eq.s32.totalorder %s30, 1
      %p158 = por %p156, %p157
      %p160 = scmp.ne.s32.totalorder %s145, %s159
      %p161 = scmp.eq.s32.totalorder %s30, 0
      %p162 = por %p160, %p161
      %s164 = sadd.s32 %s163, 1
      %p167 = scmp.eq.s32.totalorder %s24, 1
      %p168 = scmp.ne.s32.totalorder %s163, %s165
      %p169 = scmp.eq.s32.totalorder %s24, 0
      %p170 = por %p168, %p169
      %p171 = scmp.ne.s32.totalorder %s163, %s165
      %p172 = scmp.eq.s32.totalorder %s29, 1
      %p173 = por %p171, %p172
      %p174 = scmp.ne.s32.totalorder %s165, %s166
      %p175 = scmp.eq.s32.totalorder %s29, 0
      %p176 = por %p174, %p175
      %p177 = scmp.ne.s32.totalorder %s165, %s166
      %p178 = scmp.eq.s32.totalorder %s30, 1
      %p179 = por %p177, %p178
      %p181 = scmp.ne.s32.totalorder %s166, %s180
      %p182 = scmp.eq.s32.totalorder %s30, 0
      %p183 = por %p181, %p182
      %s185 = sadd.s32 %s184, 1
      %p188 = scmp.eq.s32.totalorder %s24, 1
      %p189 = scmp.ne.s32.totalorder %s184, %s186
      %p190 = scmp.eq.s32.totalorder %s24, 0
      %p191 = por %p189, %p190
      %p192 = scmp.ne.s32.totalorder %s184, %s186
      %p193 = scmp.eq.s32.totalorder %s29, 1
      %p194 = por %p192, %p193
      %p195 = scmp.ne.s32.totalorder %s186, %s187
      %p196 = scmp.eq.s32.totalorder %s29, 0
      %p197 = por %p195, %p196
      %p198 = scmp.ne.s32.totalorder %s186, %s187
      %p199 = scmp.eq.s32.totalorder %s30, 1
      %p200 = por %p198, %p199
      %p202 = scmp.ne.s32.totalorder %s187, %s201
      %p203 = scmp.eq.s32.totalorder %s30, 0
      %p204 = por %p202, %p203
      %s206 = sadd.s32 %s205, 1
      %p209 = scmp.eq.s32.totalorder %s24, 1
      %p210 = scmp.ne.s32.totalorder %s205, %s207
      %p211 = scmp.eq.s32.totalorder %s24, 0
      %p212 = por %p210, %p211
      %p213 = scmp.ne.s32.totalorder %s205, %s207
      %p214 = scmp.eq.s32.totalorder %s29, 1
      %p215 = por %p213, %p214
      %p216 = scmp.ne.s32.totalorder %s207, %s208
      %p217 = scmp.eq.s32.totalorder %s29, 0
      %p218 = por %p216, %p217
      %p219 = scmp.ne.s32.totalorder %s207, %s208
      %p220 = scmp.eq.s32.totalorder %s30, 1
      %p221 = por %p219, %p220
      %p223 = scmp.ne.s32.totalorder %s208, %s222
      %p224 = scmp.eq.s32.totalorder %s30, 0
      %p225 = por %p223, %p224
      %s226 = ssub.s32 %s24, %s31
      %p227 = scmp.eq.s32.totalorder %s226, 0
      %s229 = sadd.s32 %s228, 1
      %s230 = scalar_select %p227, %s228, %s229
      %p233 = pneg %p227
      %p234 = scmp.eq.s32.totalorder %s24, 1
      %p235 = por %p233, %p234
      %p236 = scmp.ne.s32.totalorder %s228, %s231
      %p237 = scmp.eq.s32.totalorder %s24, 0
      %p238 = por %p236, %p237
      %p239 = scmp.ne.s32.totalorder %s228, %s231
      %p240 = scmp.eq.s32.totalorder %s29, 1
      %p241 = por %p239, %p240
      %p242 = scmp.ne.s32.totalorder %s231, %s232
      %p243 = scmp.eq.s32.totalorder %s29, 0
      %p244 = por %p242, %p243
      %p245 = scmp.ne.s32.totalorder %s231, %s232
      %p246 = scmp.eq.s32.totalorder %s30, 1
      %p247 = por %p245, %p246
      %p249 = scmp.ne.s32.totalorder %s232, %s248
      %p250 = scmp.eq.s32.totalorder %s30, 0
      %p251 = por %p249, %p250
      %p252 = scmp.le.s32.totalorder 1, %s24
      %p253 = scmp.lt.s32.totalorder %s24, 3
      %p254 = pnand %p252, %p253
      %p255 = pneg %p254
      // Predicated region
      $region9: #{tpu_custom_call.1} parent=5 // pred_check
        _
      $region10: #{tpu_custom_call.1} parent=5 // pred_check_branch
        %257 = sbr.rel (%p254) target = $region12
      $region11: #{tpu_custom_call.1} parent=5 // pred_region
        %s258 = ssub.s32 %s24, 1
        // Predicated region
        $region13: #{tpu_custom_call.1} parent=11 // pred_check
          %p259 = pneg %p71
        $region14: #{tpu_custom_call.1} parent=11 // pred_check_branch
          %261 = sbr.rel (%p259) target = $region16
        $region15: #{tpu_custom_call.1} parent=11 // pred_region
          %s263 = ssub.s32 2048, 2048
          %264 = vsyncadd [#allocation6], %s263
          %s265 = sshll.u32 [#allocation5], 4
          %s266 = int_to_ptr.vmem [resolvable:$true] %s265
          %271 = dma.hbm_to_vmem [thread:$0]  %s1, 2048, %s266, [#allocation6], 128, 128, 8
        $region16: #{tpu_custom_call.1} parent=11 // pred_fallthru
          _
        // Predicated region
        $region17: #{tpu_custom_call.1} parent=11 // pred_check
          %p272 = pneg %p92
        $region18: #{tpu_custom_call.1} parent=11 // pred_check_branch
          %274 = sbr.rel (%p272) target = $region20
        $region19: #{tpu_custom_call.1} parent=11 // pred_region
          %s276 = ssub.s32 32, 32
          %277 = vsyncadd [#allocation6], %s276
          %s279 = sshll.u32 [#allocation7], 4
          %s280 = int_to_ptr.vmem [resolvable:$true] %s279
          %282 = dma.hbm_to_vmem [thread:$0]  %s2, 32, %s280, [#allocation6]
        $region20: #{tpu_custom_call.1} parent=11 // pred_fallthru
          _
        // Predicated region
        $region21: #{tpu_custom_call.1} parent=11 // pred_check
          %p283 = pneg %p113
        $region22: #{tpu_custom_call.1} parent=11 // pred_check_branch
          %285 = sbr.rel (%p283) target = $region24
        $region23: #{tpu_custom_call.1} parent=11 // pred_region
          %s287 = ssub.s32 28672, 28672
          %288 = vsyncadd [#allocation9], %s287
          %s289 = sshll.u32 [#allocation8], 4
          %s290 = int_to_ptr.vmem [resolvable:$true] %s289
          %295 = dma.hbm_to_vmem [thread:$0]  %s3, 28672, %s290, [#allocation9], 128, 128, 8
        $region24: #{tpu_custom_call.1} parent=11 // pred_fallthru
          _
        // Predicated region
        $region25: #{tpu_custom_call.1} parent=11 // pred_check
          %p296 = pneg %p134
        $region26: #{tpu_custom_call.1} parent=11 // pred_check_branch
          %298 = sbr.rel (%p296) target = $region28
        $region27: #{tpu_custom_call.1} parent=11 // pred_region
          _
        $region28: #{tpu_custom_call.1} parent=11 // pred_fallthru
          _
        // Predicated region
        $region29: #{tpu_custom_call.1} parent=11 // pred_check
          %p299 = pneg %p155
        $region30: #{tpu_custom_call.1} parent=11 // pred_check_branch
          %301 = sbr.rel (%p299) target = $region32
        $region31: #{tpu_custom_call.1} parent=11 // pred_region
          %s303 = ssub.s32 12288, 12288
          %304 = vsyncadd [#allocation9], %s303
          %s305 = sshll.u32 [#allocation10], 4
          %s306 = int_to_ptr.vmem [resolvable:$true] %s305
          %311 = dma.hbm_to_vmem [thread:$0]  %s5, 12288, %s306, [#allocation9], 384, 384, 24
        $region32: #{tpu_custom_call.1} parent=11 // pred_fallthru
          _
        // Predicated region
        $region33: #{tpu_custom_call.1} parent=11 // pred_check
          %p312 = pneg %p176
        $region34: #{tpu_custom_call.1} parent=11 // pred_check_branch
          %314 = sbr.rel (%p312) target = $region36
        $region35: #{tpu_custom_call.1} parent=11 // pred_region
          _
        $region36: #{tpu_custom_call.1} parent=11 // pred_fallthru
          _
        // Predicated region
        $region37: #{tpu_custom_call.1} parent=11 // pred_check
          %p315 = pneg %p197
        $region38: #{tpu_custom_call.1} parent=11 // pred_check_branch
          %317 = sbr.rel (%p315) target = $region40
        $region39: #{tpu_custom_call.1} parent=11 // pred_region
          %s319 = ssub.s32 6144, 6144
          %320 = vsyncadd [#allocation12], %s319
          %s321 = sshll.u32 [#allocation11], 4
          %s322 = int_to_ptr.vmem [resolvable:$true] %s321
          %327 = dma.hbm_to_vmem [thread:$0]  %s7, 6144, %s322, [#allocation12], 64, 64, 4
        $region40: #{tpu_custom_call.1} parent=11 // pred_fallthru
          _
        // Predicated region
        $region41: #{tpu_custom_call.1} parent=11 // pred_check
          %p328 = pneg %p218
        $region42: #{tpu_custom_call.1} parent=11 // pred_check_branch
          %330 = sbr.rel (%p328) target = $region44
        $region43: #{tpu_custom_call.1} parent=11 // pred_region
          _
        $region44: #{tpu_custom_call.1} parent=11 // pred_fallthru
          _
      $region12: #{tpu_custom_call.1} parent=5 // pred_fallthru
        _
      %p331 = scmp.lt.s32.totalorder %s24, 2
      // Predicated region
      $region45: #{tpu_custom_call.1} parent=5 // pred_check
        %p332 = pneg %p331
      $region46: #{tpu_custom_call.1} parent=5 // pred_check_branch
        %334 = sbr.rel (%p332) target = $region48
      $region47: #{tpu_custom_call.1} parent=5 // pred_region
        // Predicated region
        $region49: #{tpu_custom_call.1} parent=47 // pred_check
          %p335 = pneg %p44
        $region50: #{tpu_custom_call.1} parent=47 // pred_check_branch
          %337 = sbr.rel (%p335) target = $region52
        $region51: #{tpu_custom_call.1} parent=47 // pred_region
          %s338 = sand.u32 %s34, 1
          %s339 = scalar_lea.sflag [#allocation3], %s338
          %s340 = sand.u32 %s34, 1
          %s341 = smul.addr %s340, 64
          %s342 = scalar_lea.vmem [#allocation2], %s341
          %s343 = smul.u32 16, %s24
          %s345 = ssub.s32 1024, 1024
          %346 = vsyncadd %s339, %s345
          %s347 = smul.addr %s343, 64
          %s348 = scalar_lea.hbm %s0, %s347
          %s349 = sshll.u32 %s342, 4
          %s350 = int_to_ptr.vmem [resolvable:$true] %s349
          %355 = dma.hbm_to_vmem [thread:$0]  %s348, 1024, %s350, %s339, 64, 64, 4
        $region52: #{tpu_custom_call.1} parent=47 // pred_fallthru
          _
      $region48: #{tpu_custom_call.1} parent=5 // pred_fallthru
        _
      %p356 = scmp.le.s32.totalorder 1, %s24
      %p357 = scmp.lt.s32.totalorder %s24, 3
      %p358 = pnand %p356, %p357
      %p359 = pneg %p358
      // Predicated region
      $region53: #{tpu_custom_call.1} parent=5 // pred_check
        _
      $region54: #{tpu_custom_call.1} parent=5 // pred_check_branch
        %361 = sbr.rel (%p358) target = $region56
      $region55: #{tpu_custom_call.1} parent=5 // pred_region
        %s362 = ssub.s32 %s24, 1
        %s363 = sand.u32 %s37, 1
        %s364 = scalar_lea.sflag [#allocation3], %s363
        %s365 = sand.u32 %s37, 1
        %s366 = smul.addr %s365, 64
        %s367 = scalar_lea.vmem [#allocation2], %s366
        // Predicated region
        $region57: #{tpu_custom_call.1} parent=55 // pred_check
          %p368 = pneg %p50
        $region58: #{tpu_custom_call.1} parent=55 // pred_check_branch
          %370 = sbr.rel (%p368) target = $region60
        $region59: #{tpu_custom_call.1} parent=55 // pred_region
          %371 = dma.done %s364, 1024
        $region60: #{tpu_custom_call.1} parent=55 // pred_fallthru
          _
        // Predicated region
        $region61: #{tpu_custom_call.1} parent=55 // pred_check
          %p372 = pneg %p71
        $region62: #{tpu_custom_call.1} parent=55 // pred_check_branch
          %374 = sbr.rel (%p372) target = $region64
        $region63: #{tpu_custom_call.1} parent=55 // pred_region
          %375 = dma.done [#allocation6], 2048
        $region64: #{tpu_custom_call.1} parent=55 // pred_fallthru
          _
        // Predicated region
        $region65: #{tpu_custom_call.1} parent=55 // pred_check
          %p376 = pneg %p92
        $region66: #{tpu_custom_call.1} parent=55 // pred_check_branch
          %378 = sbr.rel (%p376) target = $region68
        $region67: #{tpu_custom_call.1} parent=55 // pred_region
          %379 = dma.done [#allocation6], 32
        $region68: #{tpu_custom_call.1} parent=55 // pred_fallthru
          _
        // Predicated region
        $region69: #{tpu_custom_call.1} parent=55 // pred_check
          %p380 = pneg %p113
        $region70: #{tpu_custom_call.1} parent=55 // pred_check_branch
          %382 = sbr.rel (%p380) target = $region72
        $region71: #{tpu_custom_call.1} parent=55 // pred_region
          %383 = dma.done [#allocation9], 28672
        $region72: #{tpu_custom_call.1} parent=55 // pred_fallthru
          _
        // Predicated region
        $region73: #{tpu_custom_call.1} parent=55 // pred_check
          %p384 = pneg %p155
        $region74: #{tpu_custom_call.1} parent=55 // pred_check_branch
          %386 = sbr.rel (%p384) target = $region76
        $region75: #{tpu_custom_call.1} parent=55 // pred_region
          %387 = dma.done [#allocation9], 12288
        $region76: #{tpu_custom_call.1} parent=55 // pred_fallthru
          _
        // Predicated region
        $region77: #{tpu_custom_call.1} parent=55 // pred_check
          %p388 = pneg %p197
        $region78: #{tpu_custom_call.1} parent=55 // pred_check_branch
          %390 = sbr.rel (%p388) target = $region80
        $region79: #{tpu_custom_call.1} parent=55 // pred_region
          %391 = dma.done [#allocation12], 6144
        $region80: #{tpu_custom_call.1} parent=55 // pred_fallthru
          _
        %s392 = sand.u32 %s37, 1
        %s393 = scalar_lea.sflag [#allocation3], %s392
        %s394 = sand.u32 %s37, 1
        %s395 = smul.addr %s394, 64
        %s396 = scalar_lea.vmem [#allocation2], %s395
        %p397 = pneg %p50
        %p398 = pneg %p47
        %p399 = pneg %p71
        %p400 = pneg %p68
        %p401 = pneg %p92
        %p402 = pneg %p89
        %p403 = pneg %p113
        %p404 = pneg %p110
        %p405 = pneg %p134
        %p406 = pneg %p131
        %p407 = pneg %p155
        %p408 = pneg %p152
        %p409 = pneg %p176
        %p410 = pneg %p173
        %p411 = pneg %p197
        %p412 = pneg %p194
        %p413 = pneg %p218
        %p414 = pneg %p215
        %p415 = pneg %p244
        %p416 = pneg %p241
        %s417 = sand.u32 %s231, 1
        %s418 = scalar_lea.sflag [#allocation4], %s417
        %s419 = sand.u32 %s231, 1
        %s420 = smul.addr %s419, 64
        %s421 = scalar_lea.vmem [#allocation13], %s420
        %s422 = smul.u32 16, %s29
        %s423 = smul.u32 16, %s29
        %v425 = vld [vmem:[%s367] sm:$0xf]
        %v426 = vld [vmem:[%s367 + $0x4] sm:$0xf]
        %v427 = vld [vmem:[%s367 + $0x8] sm:$0xf]
        %v428 = vld [vmem:[%s367 + $0xc] sm:$0xf]
        %v429 = vld [vmem:[%s367 + $0x10] sm:$0xf]
        %v430 = vld [vmem:[%s367 + $0x14] sm:$0xf]
        %v431 = vld [vmem:[%s367 + $0x18] sm:$0xf]
        %v432 = vld [vmem:[%s367 + $0x1c] sm:$0xf]
        %v433 = vld [vmem:[%s367 + $0x20] sm:$0xf]
        %v434 = vld [vmem:[%s367 + $0x24] sm:$0xf]
        %v435 = vld [vmem:[%s367 + $0x28] sm:$0xf]
        %v436 = vld [vmem:[%s367 + $0x2c] sm:$0xf]
        %v437 = vld [vmem:[%s367 + $0x30] sm:$0xf]
        %v438 = vld [vmem:[%s367 + $0x34] sm:$0xf]
        %v439 = vld [vmem:[%s367 + $0x38] sm:$0xf]
        %v440 = vld [vmem:[%s367 + $0x3c] sm:$0xf]
        %v441 = vld [vmem:[#allocation5] sm:$0xff]
        %v442 = vld [vmem:[#allocation5 + $0x8] sm:$0xff]
        %v443 = vld [vmem:[#allocation5 + $0x10] sm:$0xff]
        %v444 = vld [vmem:[#allocation5 + $0x18] sm:$0xff]
        %v445 = vld [vmem:[#allocation5 + $0x20] sm:$0xff]
        %v446 = vld [vmem:[#allocation5 + $0x28] sm:$0xff]
        %v447 = vld [vmem:[#allocation5 + $0x30] sm:$0xff]
        %v448 = vld [vmem:[#allocation5 + $0x38] sm:$0xff]
        %v449 = vld [vmem:[#allocation5 + $0x40] sm:$0xff]
        %v450 = vld [vmem:[#allocation5 + $0x48] sm:$0xff]
        %v451 = vld [vmem:[#allocation5 + $0x50] sm:$0xff]
        %v452 = vld [vmem:[#allocation5 + $0x58] sm:$0xff]
        %v453 = vld [vmem:[#allocation5 + $0x60] sm:$0xff]
        %v454 = vld [vmem:[#allocation5 + $0x68] sm:$0xff]
        %v455 = vld [vmem:[#allocation5 + $0x70] sm:$0xff]
        %v456 = vld [vmem:[#allocation5 + $0x78] sm:$0xff]
        %v457 = vld [vmem:[#allocation7] sm:$0x3]
        %v459 = vlaneseq
        %v460 = vshrl.u32 %v459, 7
        %v461 = vsub.s32 0, %v460
        %v462 = vrot.slane %v457, %v461
        %v463 = vlaneseq
        %v464 = vshrl.u32 %v463, 7
        %v465 = vsub.s32 1, %v464
        %v466 = vrot.slane %v457, %v465
        %v485 = vunpack.c.l.b16 %v425
        %v486 = vunpack.c.l.b16 %v426
        %v487 = vunpack.c.l.b16 %v427
        %v488 = vunpack.c.l.b16 %v428
        %v489 = vunpack.c.l.b16 %v429
        %v490 = vunpack.c.l.b16 %v430
        %v491 = vunpack.c.l.b16 %v431
        %v492 = vunpack.c.l.b16 %v432
        %v493 = vunpack.c.l.b16 %v433
        %v494 = vunpack.c.l.b16 %v434
        %v495 = vunpack.c.l.b16 %v435
        %v496 = vunpack.c.l.b16 %v436
        %v497 = vunpack.c.l.b16 %v437
        %v498 = vunpack.c.l.b16 %v438
        %v499 = vunpack.c.l.b16 %v439
        %v500 = vunpack.c.l.b16 %v440
        %v501 = vpack.c.b16 %v486, %v485
        %v502 = vpack.c.b16 %v488, %v487
        %v503 = vpack.c.b16 %v490, %v489
        %v504 = vpack.c.b16 %v492, %v491
        %v505 = vpack.c.b16 %v494, %v493
        %v506 = vpack.c.b16 %v496, %v495
        %v507 = vpack.c.b16 %v498, %v497
        %v508 = vpack.c.b16 %v500, %v499
        %v533 = vunpack.c.l.b16 %v441
        %v534 = vunpack.c.h.b16 %v441
        %v535 = vunpack.c.l.b16 %v442
        %v536 = vunpack.c.h.b16 %v442
        %v537 = vunpack.c.l.b16 %v443
        %v538 = vunpack.c.h.b16 %v443
        %v539 = vunpack.c.l.b16 %v444
        %v540 = vunpack.c.h.b16 %v444
        %v541 = vunpack.c.l.b16 %v445
        %v542 = vunpack.c.h.b16 %v445
        %v543 = vunpack.c.l.b16 %v446
        %v544 = vunpack.c.h.b16 %v446
        %v545 = vunpack.c.l.b16 %v447
        %v546 = vunpack.c.h.b16 %v447
        %v547 = vunpack.c.l.b16 %v448
        %v548 = vunpack.c.h.b16 %v448
        %v549 = vunpack.c.l.b16 %v449
        %v550 = vunpack.c.h.b16 %v449
        %v551 = vunpack.c.l.b16 %v450
        %v552 = vunpack.c.h.b16 %v450
        %v553 = vunpack.c.l.b16 %v451
        %v554 = vunpack.c.h.b16 %v451
        %v555 = vunpack.c.l.b16 %v452
        %v556 = vunpack.c.h.b16 %v452
        %v557 = vunpack.c.l.b16 %v453
        %v558 = vunpack.c.h.b16 %v453
        %v559 = vunpack.c.l.b16 %v454
        %v560 = vunpack.c.h.b16 %v454
        %v561 = vunpack.c.l.b16 %v455
        %v562 = vunpack.c.h.b16 %v455
        %v563 = vunpack.c.l.b16 %v456
        %v564 = vunpack.c.h.b16 %v456
        %v565 = vpack.c.b16 %v535, %v533
        %v566 = vpack.c.b16 %v536, %v534
        %v567 = vpack.c.b16 %v539, %v537
        %v568 = vpack.c.b16 %v540, %v538
        %v569 = vpack.c.b16 %v543, %v541
        %v570 = vpack.c.b16 %v544, %v542
        %v571 = vpack.c.b16 %v547, %v545
        %v572 = vpack.c.b16 %v548, %v546
        %v573 = vpack.c.b16 %v551, %v549
        %v574 = vpack.c.b16 %v552, %v550
        %v575 = vpack.c.b16 %v555, %v553
        %v576 = vpack.c.b16 %v556, %v554
        %v577 = vpack.c.b16 %v559, %v557
        %v578 = vpack.c.b16 %v560, %v558
        %v579 = vpack.c.b16 %v563, %v561
        %v580 = vpack.c.b16 %v564, %v562
        %597 = vmatprep.subr.bf16.mxu0 %v566
        %598 = vmatpush1.bf16.msra.mxu0 %v565
        %599 = vmatprep.subr.bf16.mxu0 %v568
        %600 = vmatpush1.bf16.msra.mxu0 %v567
        %601 = vmatprep.subr.bf16.mxu0 %v570
        %602 = vmatpush1.bf16.msra.mxu0 %v569
        %603 = vmatprep.subr.bf16.mxu0 %v572
        %604 = vmatpush1.bf16.msra.mxu0 %v571
        %605 = vmatprep.subr.bf16.mxu0 %v574
        %606 = vmatpush1.bf16.msra.mxu0 %v573
        %607 = vmatprep.subr.bf16.mxu0 %v576
        %608 = vmatpush1.bf16.msra.mxu0 %v575
        %609 = vmatprep.subr.bf16.mxu0 %v578
        %610 = vmatpush1.bf16.msra.mxu0 %v577
        %611 = vmatprep.subr.bf16.mxu0 %v580
        %612 = vmatpush1.bf16.msra.mxu0 %v579
        %613 = vmatprep.subr.bf16.mxu0 0
        %614 = vmatpush1.bf16.msra.mxu0 0
        %615 = vmatprep.subr.bf16.mxu0 0
        %616 = vmatpush1.bf16.msra.mxu0 0
        %617 = vmatprep.subr.bf16.mxu0 0
        %618 = vmatpush1.bf16.msra.mxu0 0
        %619 = vmatprep.subr.bf16.mxu0 0
        %620 = vmatpush1.bf16.msra.mxu0 0
        %621 = vmatprep.subr.bf16.mxu0 0
        %622 = vmatpush1.bf16.msra.mxu0 0
        %623 = vmatprep.subr.bf16.mxu0 0
        %624 = vmatpush1.bf16.msra.mxu0 0
        %625 = vmatprep.subr.bf16.mxu0 0
        %626 = vmatpush1.bf16.msra.mxu0 0
        %627 = vmatprep.subr.bf16.mxu0 0
        %628 = vmatpush1.bf16.msra.mxu0 0
        %629 = vmatprep.mubr.bf16.mxu0 0
        %630 = vmatmul.mubr.bf16.gmra.mrb[0].mxu0 %v501
        %v631 = vpop.f32.mrb[0].mxu0
        %v632 = vadd.f32 %v462, %v631
        %v633 = vpop.f32.mrb[0].mxu0
        %v634 = vadd.f32 %v466, %v633
        %v635 = vpop.f32.mrb[0].mxu0
        %v636 = vadd.f32 %v462, %v635
        %v637 = vpop.f32.mrb[0].mxu0
        %v638 = vadd.f32 %v466, %v637
        %639 = vmatprep.mubr.bf16.mxu0 0
        %640 = vmatmul.mubr.bf16.gmra.mrb[0].mxu0 %v502
        %v641 = vpop.f32.mrb[0].mxu0
        %v642 = vadd.f32 %v462, %v641
        %v643 = vpop.f32.mrb[0].mxu0
        %v644 = vadd.f32 %v466, %v643
        %v645 = vpop.f32.mrb[0].mxu0
        %v646 = vadd.f32 %v462, %v645
        %v647 = vpop.f32.mrb[0].mxu0
        %v648 = vadd.f32 %v466, %v647
        %649 = vmatprep.mubr.bf16.mxu0 0
        %650 = vmatmul.mubr.bf16.gmra.mrb[0].mxu0 %v503
        %v651 = vpop.f32.mrb[0].mxu0
        %v652 = vadd.f32 %v462, %v651
        %v653 = vpop.f32.mrb[0].mxu0
        %v654 = vadd.f32 %v466, %v653
        %v655 = vpop.f32.mrb[0].mxu0
        %v656 = vadd.f32 %v462, %v655
        %v657 = vpop.f32.mrb[0].mxu0
        %v658 = vadd.f32 %v466, %v657
        %659 = vmatprep.mubr.bf16.mxu0 0
        %660 = vmatmul.mubr.bf16.gmra.mrb[0].mxu0 %v504
        %v661 = vpop.f32.mrb[0].mxu0
        %v662 = vadd.f32 %v462, %v661
        %v663 = vpop.f32.mrb[0].mxu0
        %v664 = vadd.f32 %v466, %v663
        %v665 = vpop.f32.mrb[0].mxu0
        %v666 = vadd.f32 %v462, %v665
        %v667 = vpop.f32.mrb[0].mxu0
        %v668 = vadd.f32 %v466, %v667
        %669 = vmatprep.mubr.bf16.mxu0 0
        %670 = vmatmul.mubr.bf16.gmra.mrb[0].mxu0 %v505
        %v671 = vpop.f32.mrb[0].mxu0
        %v672 = vadd.f32 %v462, %v671
        %v673 = vpop.f32.mrb[0].mxu0
        %v674 = vadd.f32 %v466, %v673
        %v675 = vpop.f32.mrb[0].mxu0
        %v676 = vadd.f32 %v462, %v675
        %v677 = vpop.f32.mrb[0].mxu0
        %v678 = vadd.f32 %v466, %v677
        %679 = vmatprep.mubr.bf16.mxu0 0
        %680 = vmatmul.mubr.bf16.gmra.mrb[0].mxu0 %v506
        %v681 = vpop.f32.mrb[0].mxu0
        %v682 = vadd.f32 %v462, %v681
        %v683 = vpop.f32.mrb[0].mxu0
        %v684 = vadd.f32 %v466, %v683
        %v685 = vpop.f32.mrb[0].mxu0
        %v686 = vadd.f32 %v462, %v685
        %v687 = vpop.f32.mrb[0].mxu0
        %v688 = vadd.f32 %v466, %v687
        %689 = vmatprep.mubr.bf16.mxu0 0
        %690 = vmatmul.mubr.bf16.gmra.mrb[0].mxu0 %v507
        %v691 = vpop.f32.mrb[0].mxu0
        %v692 = vadd.f32 %v462, %v691
        %v693 = vpop.f32.mrb[0].mxu0
        %v694 = vadd.f32 %v466, %v693
        %v695 = vpop.f32.mrb[0].mxu0
        %v696 = vadd.f32 %v462, %v695
        %v697 = vpop.f32.mrb[0].mxu0
        %v698 = vadd.f32 %v466, %v697
        %699 = vmatprep.mubr.bf16.mxu0 0
        %700 = vmatmul.mubr.bf16.gmra.mrb[0].mxu0 %v508
        %v701 = vpop.f32.mrb[0].mxu0
        %v702 = vadd.f32 %v462, %v701
        %v703 = vpop.f32.mrb[0].mxu0
        %v704 = vadd.f32 %v466, %v703
        %v705 = vpop.f32.mrb[0].mxu0
        %v706 = vadd.f32 %v462, %v705
        %v707 = vpop.f32.mrb[0].mxu0
        %v708 = vadd.f32 %v466, %v707
        %709 = vdwg.mxu0
        %v710 = vmax.f32 %v632, 0.0
        %v711 = vmax.f32 %v634, 0.0
        %v712 = vmax.f32 %v636, 0.0
        %v713 = vmax.f32 %v638, 0.0
        %v714 = vmax.f32 %v642, 0.0
        %v715 = vmax.f32 %v644, 0.0
        %v716 = vmax.f32 %v646, 0.0
        %v717 = vmax.f32 %v648, 0.0
        %v718 = vmax.f32 %v652, 0.0
        %v719 = vmax.f32 %v654, 0.0
        %v720 = vmax.f32 %v656, 0.0
        %v721 = vmax.f32 %v658, 0.0
        %v722 = vmax.f32 %v662, 0.0
        %v723 = vmax.f32 %v664, 0.0
        %v724 = vmax.f32 %v666, 0.0
        %v725 = vmax.f32 %v668, 0.0
        %v726 = vmax.f32 %v672, 0.0
        %v727 = vmax.f32 %v674, 0.0
        %v728 = vmax.f32 %v676, 0.0
        %v729 = vmax.f32 %v678, 0.0
        %v730 = vmax.f32 %v682, 0.0
        %v731 = vmax.f32 %v684, 0.0
        %v732 = vmax.f32 %v686, 0.0
        %v733 = vmax.f32 %v688, 0.0
        %v734 = vmax.f32 %v692, 0.0
        %v735 = vmax.f32 %v694, 0.0
        %v736 = vmax.f32 %v696, 0.0
        %v737 = vmax.f32 %v698, 0.0
        %v738 = vmax.f32 %v702, 0.0
        %v739 = vmax.f32 %v704, 0.0
        %v740 = vmax.f32 %v706, 0.0
        %v741 = vmax.f32 %v708, 0.0
        %v742 = vpack.c.bf16 %v712, %v710
        %v743 = vpack.c.bf16 %v713, %v711
        %v744 = vpack.c.bf16 %v716, %v714
        %v745 = vpack.c.bf16 %v717, %v715
        %v746 = vpack.c.bf16 %v720, %v718
        %v747 = vpack.c.bf16 %v721, %v719
        %v748 = vpack.c.bf16 %v724, %v722
        %v749 = vpack.c.bf16 %v725, %v723
        %v750 = vpack.c.bf16 %v728, %v726
        %v751 = vpack.c.bf16 %v729, %v727
        %v752 = vpack.c.bf16 %v732, %v730
        %v753 = vpack.c.bf16 %v733, %v731
        %v754 = vpack.c.bf16 %v736, %v734
        %v755 = vpack.c.bf16 %v737, %v735
        %v756 = vpack.c.bf16 %v740, %v738
        %v757 = vpack.c.bf16 %v741, %v739
        %v758 = vld [vmem:[#allocation8] sm:$0xff]
        %v759 = vld [vmem:[#allocation8 + $0x8] sm:$0xff]
        %v760 = vld [vmem:[#allocation8 + $0x10] sm:$0xff]
        %v761 = vld [vmem:[#allocation8 + $0x18] sm:$0xff]
        %v762 = vld [vmem:[#allocation8 + $0x20] sm:$0xff]
        %v763 = vld [vmem:[#allocation8 + $0x28] sm:$0xff]
        %v764 = vld [vmem:[#allocation8 + $0x30] sm:$0xff]
        %v765 = vld [vmem:[#allocation8 + $0x38] sm:$0xff]
        %v766 = vld [vmem:[#allocation8 + $0x40] sm:$0xff]
        %v767 = vld [vmem:[#allocation8 + $0x48] sm:$0xff]
        %v768 = vld [vmem:[#allocation8 + $0x50] sm:$0xff]
        %v769 = vld [vmem:[#allocation8 + $0x58] sm:$0xff]
        %v770 = vld [vmem:[#allocation8 + $0x60] sm:$0xff]
        %v771 = vld [vmem:[#allocation8 + $0x68] sm:$0xff]
        %v772 = vld [vmem:[#allocation8 + $0x70] sm:$0xff]
        %v773 = vld [vmem:[#allocation8 + $0x78] sm:$0xff]
        %v774 = vld [vmem:[#allocation8 + $0x80] sm:$0xff]
        %v775 = vld [vmem:[#allocation8 + $0x88] sm:$0xff]
        %v776 = vld [vmem:[#allocation8 + $0x90] sm:$0xff]
        %v777 = vld [vmem:[#allocation8 + $0x98] sm:$0xff]
        %v778 = vld [vmem:[#allocation8 + $0xa0] sm:$0xff]
        %v779 = vld [vmem:[#allocation8 + $0xa8] sm:$0xff]
        %v780 = vld [vmem:[#allocation8 + $0xb0] sm:$0xff]
        %v781 = vld [vmem:[#allocation8 + $0xb8] sm:$0xff]
        %v782 = vld [vmem:[#allocation8 + $0xc0] sm:$0xff]
        %v783 = vld [vmem:[#allocation8 + $0xc8] sm:$0xff]
        %v784 = vld [vmem:[#allocation8 + $0xd0] sm:$0xff]
        %v785 = vld [vmem:[#allocation8 + $0xd8] sm:$0xff]
        %v786 = vld [vmem:[#allocation8 + $0xe0] sm:$0xff]
        %v787 = vld [vmem:[#allocation8 + $0xe8] sm:$0xff]
        %v788 = vld [vmem:[#allocation8 + $0xf0] sm:$0xff]
        %v789 = vld [vmem:[#allocation8 + $0xf8] sm:$0xff]
        %v790 = vld [vmem:[%s4] sm:$0x3]
        %v792 = vlaneseq
        %v793 = vshrl.u32 %v792, 7
        %v794 = vsub.s32 0, %v793
        %v795 = vrot.slane %v790, %v794
        %v796 = vlaneseq
        %v797 = vshrl.u32 %v796, 7
        %v798 = vsub.s32 1, %v797
        %v799 = vrot.slane %v790, %v798
        %v834 = vunpack.c.l.b16 %v758
        %v835 = vunpack.c.h.b16 %v758
        %v836 = vunpack.c.l.b16 %v759
        %v837 = vunpack.c.h.b16 %v759
        %v838 = vunpack.c.l.b16 %v760
        %v839 = vunpack.c.h.b16 %v760
        %v840 = vunpack.c.l.b16 %v761
        %v841 = vunpack.c.h.b16 %v761
        %v842 = vunpack.c.l.b16 %v762
        %v843 = vunpack.c.h.b16 %v762
        %v844 = vunpack.c.l.b16 %v763
        %v845 = vunpack.c.h.b16 %v763
        %v846 = vunpack.c.l.b16 %v764
        %v847 = vunpack.c.h.b16 %v764
        %v848 = vunpack.c.l.b16 %v765
        %v849 = vunpack.c.h.b16 %v765
        %v850 = vunpack.c.l.b16 %v766
        %v851 = vunpack.c.h.b16 %v766
        %v852 = vunpack.c.l.b16 %v767
        %v853 = vunpack.c.h.b16 %v767
        %v854 = vunpack.c.l.b16 %v768
        %v855 = vunpack.c.h.b16 %v768
        %v856 = vunpack.c.l.b16 %v769
        %v857 = vunpack.c.h.b16 %v769
        %v858 = vunpack.c.l.b16 %v770
        %v859 = vunpack.c.h.b16 %v770
        %v860 = vunpack.c.l.b16 %v771
        %v861 = vunpack.c.h.b16 %v771
        %v862 = vunpack.c.l.b16 %v772
        %v863 = vunpack.c.h.b16 %v772
        %v864 = vunpack.c.l.b16 %v773
        %v865 = vunpack.c.h.b16 %v773
        %v866 = vunpack.c.l.b16 %v774
        %v867 = vunpack.c.h.b16 %v774
        %v868 = vunpack.c.l.b16 %v775
        %v869 = vunpack.c.h.b16 %v775
        %v870 = vunpack.c.l.b16 %v776
        %v871 = vunpack.c.h.b16 %v776
        %v872 = vunpack.c.l.b16 %v777
        %v873 = vunpack.c.h.b16 %v777
        %v874 = vunpack.c.l.b16 %v778
        %v875 = vunpack.c.h.b16 %v778
        %v876 = vunpack.c.l.b16 %v779
        %v877 = vunpack.c.h.b16 %v779
        %v878 = vunpack.c.l.b16 %v780
        %v879 = vunpack.c.h.b16 %v780
        %v880 = vunpack.c.l.b16 %v781
        %v881 = vunpack.c.h.b16 %v781
        %v882 = vunpack.c.l.b16 %v782
        %v883 = vunpack.c.h.b16 %v782
        %v884 = vunpack.c.l.b16 %v783
        %v885 = vunpack.c.h.b16 %v783
        %v886 = vunpack.c.l.b16 %v784
        %v887 = vunpack.c.h.b16 %v784
        %v888 = vunpack.c.l.b16 %v785
        %v889 = vunpack.c.h.b16 %v785
        %v890 = vunpack.c.l.b16 %v786
        %v891 = vunpack.c.h.b16 %v786
        %v892 = vunpack.c.l.b16 %v787
        %v893 = vunpack.c.h.b16 %v787
        %v894 = vunpack.c.l.b16 %v788
        %v895 = vunpack.c.h.b16 %v788
        %v896 = vunpack.c.l.b16 %v789
        %v897 = vunpack.c.h.b16 %v789
        %v898 = vpack.c.b16 %v836, %v834
        %v899 = vpack.c.b16 %v837, %v835
        %v900 = vpack.c.b16 %v840, %v838
        %v901 = vpack.c.b16 %v841, %v839
        %v902 = vpack.c.b16 %v844, %v842
        %v903 = vpack.c.b16 %v845, %v843
        %v904 = vpack.c.b16 %v848, %v846
        %v905 = vpack.c.b16 %v849, %v847
        %v906 = vpack.c.b16 %v852, %v850
        %v907 = vpack.c.b16 %v853, %v851
        %v908 = vpack.c.b16 %v856, %v854
        %v909 = vpack.c.b16 %v857, %v855
        %v910 = vpack.c.b16 %v860, %v858
        %v911 = vpack.c.b16 %v861, %v859
        %v912 = vpack.c.b16 %v864, %v862
        %v913 = vpack.c.b16 %v865, %v863
        %v914 = vpack.c.b16 %v868, %v866
        %v915 = vpack.c.b16 %v869, %v867
        %v916 = vpack.c.b16 %v872, %v870
        %v917 = vpack.c.b16 %v873, %v871
        %v918 = vpack.c.b16 %v876, %v874
        %v919 = vpack.c.b16 %v877, %v875
        %v920 = vpack.c.b16 %v880, %v878
        %v921 = vpack.c.b16 %v881, %v879
        %v922 = vpack.c.b16 %v884, %v882
        %v923 = vpack.c.b16 %v885, %v883
        %v924 = vpack.c.b16 %v888, %v886
        %v925 = vpack.c.b16 %v889, %v887
        %v926 = vpack.c.b16 %v892, %v890
        %v927 = vpack.c.b16 %v893, %v891
        %v928 = vpack.c.b16 %v896, %v894
        %v929 = vpack.c.b16 %v897, %v895
        %962 = vmatprep.subr.bf16.mxu0 %v899
        %963 = vmatpush1.bf16.msra.mxu0 %v898
        %964 = vmatprep.subr.bf16.mxu0 %v901
        %965 = vmatpush1.bf16.msra.mxu0 %v900
        %966 = vmatprep.subr.bf16.mxu0 %v903
        %967 = vmatpush1.bf16.msra.mxu0 %v902
        %968 = vmatprep.subr.bf16.mxu0 %v905
        %969 = vmatpush1.bf16.msra.mxu0 %v904
        %970 = vmatprep.subr.bf16.mxu0 %v907
        %971 = vmatpush1.bf16.msra.mxu0 %v906
        %972 = vmatprep.subr.bf16.mxu0 %v909
        %973 = vmatpush1.bf16.msra.mxu0 %v908
        %974 = vmatprep.subr.bf16.mxu0 %v911
        %975 = vmatpush1.bf16.msra.mxu0 %v910
        %976 = vmatprep.subr.bf16.mxu0 %v913
        %977 = vmatpush1.bf16.msra.mxu0 %v912
        %978 = vmatprep.subr.bf16.mxu0 %v915
        %979 = vmatpush1.bf16.msra.mxu0 %v914
        %980 = vmatprep.subr.bf16.mxu0 %v917
        %981 = vmatpush1.bf16.msra.mxu0 %v916
        %982 = vmatprep.subr.bf16.mxu0 %v919
        %983 = vmatpush1.bf16.msra.mxu0 %v918
        %984 = vmatprep.subr.bf16.mxu0 %v921
        %985 = vmatpush1.bf16.msra.mxu0 %v920
        %986 = vmatprep.subr.bf16.mxu0 %v923
        %987 = vmatpush1.bf16.msra.mxu0 %v922
        %988 = vmatprep.subr.bf16.mxu0 %v925
        %989 = vmatpush1.bf16.msra.mxu0 %v924
        %990 = vmatprep.subr.bf16.mxu0 %v927
        %991 = vmatpush1.bf16.msra.mxu0 %v926
        %992 = vmatprep.subr.bf16.mxu0 %v929
        %993 = vmatpush1.bf16.msra.mxu0 %v928
        %994 = vmatprep.mubr.bf16.mxu0 %v743
        %995 = vmatmul.mubr.bf16.gmra.mrb[0].mxu0 %v742
        %v996 = vpop.f32.mrb[0].mxu0
        %v997 = vadd.f32 %v795, %v996
        %v998 = vpop.f32.mrb[0].mxu0
        %v999 = vadd.f32 %v799, %v998
        %v1000 = vpop.f32.mrb[0].mxu0
        %v1001 = vadd.f32 %v795, %v1000
        %v1002 = vpop.f32.mrb[0].mxu0
        %v1003 = vadd.f32 %v799, %v1002
        %1004 = vmatprep.mubr.bf16.mxu0 %v745
        %1005 = vmatmul.mubr.bf16.gmra.mrb[0].mxu0 %v744
        %v1006 = vpop.f32.mrb[0].mxu0
        %v1007 = vadd.f32 %v795, %v1006
        %v1008 = vpop.f32.mrb[0].mxu0
        %v1009 = vadd.f32 %v799, %v1008
        %v1010 = vpop.f32.mrb[0].mxu0
        %v1011 = vadd.f32 %v795, %v1010
        %v1012 = vpop.f32.mrb[0].mxu0
        %v1013 = vadd.f32 %v799, %v1012
        %1014 = vmatprep.mubr.bf16.mxu0 %v747
        %1015 = vmatmul.mubr.bf16.gmra.mrb[0].mxu0 %v746
        %v1016 = vpop.f32.mrb[0].mxu0
        %v1017 = vadd.f32 %v795, %v1016
        %v1018 = vpop.f32.mrb[0].mxu0
        %v1019 = vadd.f32 %v799, %v1018
        %v1020 = vpop.f32.mrb[0].mxu0
        %v1021 = vadd.f32 %v795, %v1020
        %v1022 = vpop.f32.mrb[0].mxu0
        %v1023 = vadd.f32 %v799, %v1022
        %1024 = vmatprep.mubr.bf16.mxu0 %v749
        %1025 = vmatmul.mubr.bf16.gmra.mrb[0].mxu0 %v748
        %v1026 = vpop.f32.mrb[0].mxu0
        %v1027 = vadd.f32 %v795, %v1026
        %v1028 = vpop.f32.mrb[0].mxu0
        %v1029 = vadd.f32 %v799, %v1028
        %v1030 = vpop.f32.mrb[0].mxu0
        %v1031 = vadd.f32 %v795, %v1030
        %v1032 = vpop.f32.mrb[0].mxu0
        %v1033 = vadd.f32 %v799, %v1032
        %1034 = vmatprep.mubr.bf16.mxu0 %v751
        %1035 = vmatmul.mubr.bf16.gmra.mrb[0].mxu0 %v750
        %v1036 = vpop.f32.mrb[0].mxu0
        %v1037 = vadd.f32 %v795, %v1036
        %v1038 = vpop.f32.mrb[0].mxu0
        %v1039 = vadd.f32 %v799, %v1038
        %v1040 = vpop.f32.mrb[0].mxu0
        %v1041 = vadd.f32 %v795, %v1040
        %v1042 = vpop.f32.mrb[0].mxu0
        %v1043 = vadd.f32 %v799, %v1042
        %1044 = vmatprep.mubr.bf16.mxu0 %v753
        %1045 = vmatmul.mubr.bf16.gmra.mrb[0].mxu0 %v752
        %v1046 = vpop.f32.mrb[0].mxu0
        %v1047 = vadd.f32 %v795, %v1046
        %v1048 = vpop.f32.mrb[0].mxu0
        %v1049 = vadd.f32 %v799, %v1048
        %v1050 = vpop.f32.mrb[0].mxu0
        %v1051 = vadd.f32 %v795, %v1050
        %v1052 = vpop.f32.mrb[0].mxu0
        %v1053 = vadd.f32 %v799, %v1052
        %1054 = vmatprep.mubr.bf16.mxu0 %v755
        %1055 = vmatmul.mubr.bf16.gmra.mrb[0].mxu0 %v754
        %v1056 = vpop.f32.mrb[0].mxu0
        %v1057 = vadd.f32 %v795, %v1056
        %v1058 = vpop.f32.mrb[0].mxu0
        %v1059 = vadd.f32 %v799, %v1058
        %v1060 = vpop.f32.mrb[0].mxu0
        %v1061 = vadd.f32 %v795, %v1060
        %v1062 = vpop.f32.mrb[0].mxu0
        %v1063 = vadd.f32 %v799, %v1062
        %1064 = vmatprep.mubr.bf16.mxu0 %v757
        %1065 = vmatmul.mubr.bf16.gmra.mrb[0].mxu0 %v756
        %v1066 = vpop.f32.mrb[0].mxu0
        %v1067 = vadd.f32 %v795, %v1066
        %v1068 = vpop.f32.mrb[0].mxu0
        %v1069 = vadd.f32 %v799, %v1068
        %v1070 = vpop.f32.mrb[0].mxu0
        %v1071 = vadd.f32 %v795, %v1070
        %v1072 = vpop.f32.mrb[0].mxu0
        %v1073 = vadd.f32 %v799, %v1072
        %1074 = vdwg.mxu0
        %v1075 = vmax.f32 %v997, 0.0
        %v1076 = vmax.f32 %v999, 0.0
        %v1077 = vmax.f32 %v1001, 0.0
        %v1078 = vmax.f32 %v1003, 0.0
        %v1079 = vmax.f32 %v1007, 0.0
        %v1080 = vmax.f32 %v1009, 0.0
        %v1081 = vmax.f32 %v1011, 0.0
        %v1082 = vmax.f32 %v1013, 0.0
        %v1083 = vmax.f32 %v1017, 0.0
        %v1084 = vmax.f32 %v1019, 0.0
        %v1085 = vmax.f32 %v1021, 0.0
        %v1086 = vmax.f32 %v1023, 0.0
        %v1087 = vmax.f32 %v1027, 0.0
        %v1088 = vmax.f32 %v1029, 0.0
        %v1089 = vmax.f32 %v1031, 0.0
        %v1090 = vmax.f32 %v1033, 0.0
        %v1091 = vmax.f32 %v1037, 0.0
        %v1092 = vmax.f32 %v1039, 0.0
        %v1093 = vmax.f32 %v1041, 0.0
        %v1094 = vmax.f32 %v1043, 0.0
        %v1095 = vmax.f32 %v1047, 0.0
        %v1096 = vmax.f32 %v1049, 0.0
        %v1097 = vmax.f32 %v1051, 0.0
        %v1098 = vmax.f32 %v1053, 0.0
        %v1099 = vmax.f32 %v1057, 0.0
        %v1100 = vmax.f32 %v1059, 0.0
        %v1101 = vmax.f32 %v1061, 0.0
        %v1102 = vmax.f32 %v1063, 0.0
        %v1103 = vmax.f32 %v1067, 0.0
        %v1104 = vmax.f32 %v1069, 0.0
        %v1105 = vmax.f32 %v1071, 0.0
        %v1106 = vmax.f32 %v1073, 0.0
        %v1107 = vpack.c.bf16 %v1077, %v1075
        %v1108 = vpack.c.bf16 %v1078, %v1076
        %v1109 = vpack.c.bf16 %v1081, %v1079
        %v1110 = vpack.c.bf16 %v1082, %v1080
        %v1111 = vpack.c.bf16 %v1085, %v1083
        %v1112 = vpack.c.bf16 %v1086, %v1084
        %v1113 = vpack.c.bf16 %v1089, %v1087
        %v1114 = vpack.c.bf16 %v1090, %v1088
        %v1115 = vpack.c.bf16 %v1093, %v1091
        %v1116 = vpack.c.bf16 %v1094, %v1092
        %v1117 = vpack.c.bf16 %v1097, %v1095
        %v1118 = vpack.c.bf16 %v1098, %v1096
        %v1119 = vpack.c.bf16 %v1101, %v1099
        %v1120 = vpack.c.bf16 %v1102, %v1100
        %v1121 = vpack.c.bf16 %v1105, %v1103
        %v1122 = vpack.c.bf16 %v1106, %v1104
        %s1123 = scalar_lea.vmem [#allocation8], 256
        %v1124 = vld [vmem:[%s1123] sm:$0xff]
        %v1125 = vld [vmem:[%s1123 + $0x8] sm:$0xff]
        %v1126 = vld [vmem:[%s1123 + $0x10] sm:$0xff]
        %v1127 = vld [vmem:[%s1123 + $0x18] sm:$0xff]
        %v1128 = vld [vmem:[%s1123 + $0x20] sm:$0xff]
        %v1129 = vld [vmem:[%s1123 + $0x28] sm:$0xff]
        %v1130 = vld [vmem:[%s1123 + $0x30] sm:$0xff]
        %v1131 = vld [vmem:[%s1123 + $0x38] sm:$0xff]
        %v1132 = vld [vmem:[%s1123 + $0x40] sm:$0xff]
        %v1133 = vld [vmem:[%s1123 + $0x48] sm:$0xff]
        %v1134 = vld [vmem:[%s1123 + $0x50] sm:$0xff]
        %v1135 = vld [vmem:[%s1123 + $0x58] sm:$0xff]
        %v1136 = vld [vmem:[%s1123 + $0x60] sm:$0xff]
        %v1137 = vld [vmem:[%s1123 + $0x68] sm:$0xff]
        %v1138 = vld [vmem:[%s1123 + $0x70] sm:$0xff]
        %v1139 = vld [vmem:[%s1123 + $0x78] sm:$0xff]
        %v1140 = vld [vmem:[%s1123 + $0x80] sm:$0xff]
        %v1141 = vld [vmem:[%s1123 + $0x88] sm:$0xff]
        %v1142 = vld [vmem:[%s1123 + $0x90] sm:$0xff]
        %v1143 = vld [vmem:[%s1123 + $0x98] sm:$0xff]
        %v1144 = vld [vmem:[%s1123 + $0xa0] sm:$0xff]
        %v1145 = vld [vmem:[%s1123 + $0xa8] sm:$0xff]
        %v1146 = vld [vmem:[%s1123 + $0xb0] sm:$0xff]
        %v1147 = vld [vmem:[%s1123 + $0xb8] sm:$0xff]
        %v1148 = vld [vmem:[%s1123 + $0xc0] sm:$0xff]
        %v1149 = vld [vmem:[%s1123 + $0xc8] sm:$0xff]
        %v1150 = vld [vmem:[%s1123 + $0xd0] sm:$0xff]
        %v1151 = vld [vmem:[%s1123 + $0xd8] sm:$0xff]
        %v1152 = vld [vmem:[%s1123 + $0xe0] sm:$0xff]
        %v1153 = vld [vmem:[%s1123 + $0xe8] sm:$0xff]
        %v1154 = vld [vmem:[%s1123 + $0xf0] sm:$0xff]
        %v1155 = vld [vmem:[%s1123 + $0xf8] sm:$0xff]
        %s1156 = scalar_lea.vmem %s4, 2
        %v1157 = vld [vmem:[%s1156] sm:$0x3]
        %v1159 = vlaneseq
        %v1160 = vshrl.u32 %v1159, 7
        %v1161 = vsub.s32 0, %v1160
        %v1162 = vrot.slane %v1157, %v1161
        %v1163 = vlaneseq
        %v1164 = vshrl.u32 %v1163, 7
        %v1165 = vsub.s32 1, %v1164
        %v1166 = vrot.slane %v1157, %v1165
        %v1201 = vunpack.c.l.b16 %v1124
        %v1202 = vunpack.c.h.b16 %v1124
        %v1203 = vunpack.c.l.b16 %v1125
        %v1204 = vunpack.c.h.b16 %v1125
        %v1205 = vunpack.c.l.b16 %v1126
        %v1206 = vunpack.c.h.b16 %v1126
        %v1207 = vunpack.c.l.b16 %v1127
        %v1208 = vunpack.c.h.b16 %v1127
        %v1209 = vunpack.c.l.b16 %v1128
        %v1210 = vunpack.c.h.b16 %v1128
        %v1211 = vunpack.c.l.b16 %v1129
        %v1212 = vunpack.c.h.b16 %v1129
        %v1213 = vunpack.c.l.b16 %v1130
        %v1214 = vunpack.c.h.b16 %v1130
        %v1215 = vunpack.c.l.b16 %v1131
        %v1216 = vunpack.c.h.b16 %v1131
        %v1217 = vunpack.c.l.b16 %v1132
        %v1218 = vunpack.c.h.b16 %v1132
        %v1219 = vunpack.c.l.b16 %v1133
        %v1220 = vunpack.c.h.b16 %v1133
        %v1221 = vunpack.c.l.b16 %v1134
        %v1222 = vunpack.c.h.b16 %v1134
        %v1223 = vunpack.c.l.b16 %v1135
        %v1224 = vunpack.c.h.b16 %v1135
        %v1225 = vunpack.c.l.b16 %v1136
        %v1226 = vunpack.c.h.b16 %v1136
        %v1227 = vunpack.c.l.b16 %v1137
        %v1228 = vunpack.c.h.b16 %v1137
        %v1229 = vunpack.c.l.b16 %v1138
        %v1230 = vunpack.c.h.b16 %v1138
        %v1231 = vunpack.c.l.b16 %v1139
        %v1232 = vunpack.c.h.b16 %v1139
        %v1233 = vunpack.c.l.b16 %v1140
        %v1234 = vunpack.c.h.b16 %v1140
        %v1235 = vunpack.c.l.b16 %v1141
        %v1236 = vunpack.c.h.b16 %v1141
        %v1237 = vunpack.c.l.b16 %v1142
        %v1238 = vunpack.c.h.b16 %v1142
        %v1239 = vunpack.c.l.b16 %v1143
        %v1240 = vunpack.c.h.b16 %v1143
        %v1241 = vunpack.c.l.b16 %v1144
        %v1242 = vunpack.c.h.b16 %v1144
        %v1243 = vunpack.c.l.b16 %v1145
        %v1244 = vunpack.c.h.b16 %v1145
        %v1245 = vunpack.c.l.b16 %v1146
        %v1246 = vunpack.c.h.b16 %v1146
        %v1247 = vunpack.c.l.b16 %v1147
        %v1248 = vunpack.c.h.b16 %v1147
        %v1249 = vunpack.c.l.b16 %v1148
        %v1250 = vunpack.c.h.b16 %v1148
        %v1251 = vunpack.c.l.b16 %v1149
        %v1252 = vunpack.c.h.b16 %v1149
        %v1253 = vunpack.c.l.b16 %v1150
        %v1254 = vunpack.c.h.b16 %v1150
        %v1255 = vunpack.c.l.b16 %v1151
        %v1256 = vunpack.c.h.b16 %v1151
        %v1257 = vunpack.c.l.b16 %v1152
        %v1258 = vunpack.c.h.b16 %v1152
        %v1259 = vunpack.c.l.b16 %v1153
        %v1260 = vunpack.c.h.b16 %v1153
        %v1261 = vunpack.c.l.b16 %v1154
        %v1262 = vunpack.c.h.b16 %v1154
        %v1263 = vunpack.c.l.b16 %v1155
        %v1264 = vunpack.c.h.b16 %v1155
        %v1265 = vpack.c.b16 %v1203, %v1201
        %v1266 = vpack.c.b16 %v1204, %v1202
        %v1267 = vpack.c.b16 %v1207, %v1205
        %v1268 = vpack.c.b16 %v1208, %v1206
        %v1269 = vpack.c.b16 %v1211, %v1209
        %v1270 = vpack.c.b16 %v1212, %v1210
        %v1271 = vpack.c.b16 %v1215, %v1213
        %v1272 = vpack.c.b16 %v1216, %v1214
        %v1273 = vpack.c.b16 %v1219, %v1217
        %v1274 = vpack.c.b16 %v1220, %v1218
        %v1275 = vpack.c.b16 %v1223, %v1221
        %v1276 = vpack.c.b16 %v1224, %v1222
        %v1277 = vpack.c.b16 %v1227, %v1225
        %v1278 = vpack.c.b16 %v1228, %v1226
        %v1279 = vpack.c.b16 %v1231, %v1229
        %v1280 = vpack.c.b16 %v1232, %v1230
        %v1281 = vpack.c.b16 %v1235, %v1233
        %v1282 = vpack.c.b16 %v1236, %v1234
        %v1283 = vpack.c.b16 %v1239, %v1237
        %v1284 = vpack.c.b16 %v1240, %v1238
        %v1285 = vpack.c.b16 %v1243, %v1241
        %v1286 = vpack.c.b16 %v1244, %v1242
        %v1287 = vpack.c.b16 %v1247, %v1245
        %v1288 = vpack.c.b16 %v1248, %v1246
        %v1289 = vpack.c.b16 %v1251, %v1249
        %v1290 = vpack.c.b16 %v1252, %v1250
        %v1291 = vpack.c.b16 %v1255, %v1253
        %v1292 = vpack.c.b16 %v1256, %v1254
        %v1293 = vpack.c.b16 %v1259, %v1257
        %v1294 = vpack.c.b16 %v1260, %v1258
        %v1295 = vpack.c.b16 %v1263, %v1261
        %v1296 = vpack.c.b16 %v1264, %v1262
        %1329 = vmatprep.subr.bf16.mxu0 %v1266
        %1330 = vmatpush1.bf16.msra.mxu0 %v1265
        %1331 = vmatprep.subr.bf16.mxu0 %v1268
        %1332 = vmatpush1.bf16.msra.mxu0 %v1267
        %1333 = vmatprep.subr.bf16.mxu0 %v1270
        %1334 = vmatpush1.bf16.msra.mxu0 %v1269
        %1335 = vmatprep.subr.bf16.mxu0 %v1272
        %1336 = vmatpush1.bf16.msra.mxu0 %v1271
        %1337 = vmatprep.subr.bf16.mxu0 %v1274
        %1338 = vmatpush1.bf16.msra.mxu0 %v1273
        %1339 = vmatprep.subr.bf16.mxu0 %v1276
        %1340 = vmatpush1.bf16.msra.mxu0 %v1275
        %1341 = vmatprep.subr.bf16.mxu0 %v1278
        %1342 = vmatpush1.bf16.msra.mxu0 %v1277
        %1343 = vmatprep.subr.bf16.mxu0 %v1280
        %1344 = vmatpush1.bf16.msra.mxu0 %v1279
        %1345 = vmatprep.subr.bf16.mxu0 %v1282
        %1346 = vmatpush1.bf16.msra.mxu0 %v1281
        %1347 = vmatprep.subr.bf16.mxu0 %v1284
        %1348 = vmatpush1.bf16.msra.mxu0 %v1283
        %1349 = vmatprep.subr.bf16.mxu0 %v1286
        %1350 = vmatpush1.bf16.msra.mxu0 %v1285
        %1351 = vmatprep.subr.bf16.mxu0 %v1288
        %1352 = vmatpush1.bf16.msra.mxu0 %v1287
        %1353 = vmatprep.subr.bf16.mxu0 %v1290
        %1354 = vmatpush1.bf16.msra.mxu0 %v1289
        %1355 = vmatprep.subr.bf16.mxu0 %v1292
        %1356 = vmatpush1.bf16.msra.mxu0 %v1291
        %1357 = vmatprep.subr.bf16.mxu0 %v1294
        %1358 = vmatpush1.bf16.msra.mxu0 %v1293
        %1359 = vmatprep.subr.bf16.mxu0 %v1296
        %1360 = vmatpush1.bf16.msra.mxu0 %v1295
        %1361 = vmatprep.mubr.bf16.mxu0 %v1108
        %1362 = vmatmul.mubr.bf16.gmra.mrb[0].mxu0 %v1107
        %v1363 = vpop.f32.mrb[0].mxu0
        %v1364 = vadd.f32 %v1162, %v1363
        %v1365 = vpop.f32.mrb[0].mxu0
        %v1366 = vadd.f32 %v1166, %v1365
        %v1367 = vpop.f32.mrb[0].mxu0
        %v1368 = vadd.f32 %v1162, %v1367
        %v1369 = vpop.f32.mrb[0].mxu0
        %v1370 = vadd.f32 %v1166, %v1369
        %1371 = vmatprep.mubr.bf16.mxu0 %v1110
        %1372 = vmatmul.mubr.bf16.gmra.mrb[0].mxu0 %v1109
        %v1373 = vpop.f32.mrb[0].mxu0
        %v1374 = vadd.f32 %v1162, %v1373
        %v1375 = vpop.f32.mrb[0].mxu0
        %v1376 = vadd.f32 %v1166, %v1375
        %v1377 = vpop.f32.mrb[0].mxu0
        %v1378 = vadd.f32 %v1162, %v1377
        %v1379 = vpop.f32.mrb[0].mxu0
        %v1380 = vadd.f32 %v1166, %v1379
        %1381 = vmatprep.mubr.bf16.mxu0 %v1112
        %1382 = vmatmul.mubr.bf16.gmra.mrb[0].mxu0 %v1111
        %v1383 = vpop.f32.mrb[0].mxu0
        %v1384 = vadd.f32 %v1162, %v1383
        %v1385 = vpop.f32.mrb[0].mxu0
        %v1386 = vadd.f32 %v1166, %v1385
        %v1387 = vpop.f32.mrb[0].mxu0
        %v1388 = vadd.f32 %v1162, %v1387
        %v1389 = vpop.f32.mrb[0].mxu0
        %v1390 = vadd.f32 %v1166, %v1389
        %1391 = vmatprep.mubr.bf16.mxu0 %v1114
        %1392 = vmatmul.mubr.bf16.gmra.mrb[0].mxu0 %v1113
        %v1393 = vpop.f32.mrb[0].mxu0
        %v1394 = vadd.f32 %v1162, %v1393
        %v1395 = vpop.f32.mrb[0].mxu0
        %v1396 = vadd.f32 %v1166, %v1395
        %v1397 = vpop.f32.mrb[0].mxu0
        %v1398 = vadd.f32 %v1162, %v1397
        %v1399 = vpop.f32.mrb[0].mxu0
        %v1400 = vadd.f32 %v1166, %v1399
        %1401 = vmatprep.mubr.bf16.mxu0 %v1116
        %1402 = vmatmul.mubr.bf16.gmra.mrb[0].mxu0 %v1115
        %v1403 = vpop.f32.mrb[0].mxu0
        %v1404 = vadd.f32 %v1162, %v1403
        %v1405 = vpop.f32.mrb[0].mxu0
        %v1406 = vadd.f32 %v1166, %v1405
        %v1407 = vpop.f32.mrb[0].mxu0
        %v1408 = vadd.f32 %v1162, %v1407
        %v1409 = vpop.f32.mrb[0].mxu0
        %v1410 = vadd.f32 %v1166, %v1409
        %1411 = vmatprep.mubr.bf16.mxu0 %v1118
        %1412 = vmatmul.mubr.bf16.gmra.mrb[0].mxu0 %v1117
        %v1413 = vpop.f32.mrb[0].mxu0
        %v1414 = vadd.f32 %v1162, %v1413
        %v1415 = vpop.f32.mrb[0].mxu0
        %v1416 = vadd.f32 %v1166, %v1415
        %v1417 = vpop.f32.mrb[0].mxu0
        %v1418 = vadd.f32 %v1162, %v1417
        %v1419 = vpop.f32.mrb[0].mxu0
        %v1420 = vadd.f32 %v1166, %v1419
        %1421 = vmatprep.mubr.bf16.mxu0 %v1120
        %1422 = vmatmul.mubr.bf16.gmra.mrb[0].mxu0 %v1119
        %v1423 = vpop.f32.mrb[0].mxu0
        %v1424 = vadd.f32 %v1162, %v1423
        %v1425 = vpop.f32.mrb[0].mxu0
        %v1426 = vadd.f32 %v1166, %v1425
        %v1427 = vpop.f32.mrb[0].mxu0
        %v1428 = vadd.f32 %v1162, %v1427
        %v1429 = vpop.f32.mrb[0].mxu0
        %v1430 = vadd.f32 %v1166, %v1429
        %1431 = vmatprep.mubr.bf16.mxu0 %v1122
        %1432 = vmatmul.mubr.bf16.gmra.mrb[0].mxu0 %v1121
        %v1433 = vpop.f32.mrb[0].mxu0
        %v1434 = vadd.f32 %v1162, %v1433
        %v1435 = vpop.f32.mrb[0].mxu0
        %v1436 = vadd.f32 %v1166, %v1435
        %v1437 = vpop.f32.mrb[0].mxu0
        %v1438 = vadd.f32 %v1162, %v1437
        %v1439 = vpop.f32.mrb[0].mxu0
        %v1440 = vadd.f32 %v1166, %v1439
        %1441 = vdwg.mxu0
        %v1442 = vmax.f32 %v1364, 0.0
        %v1443 = vmax.f32 %v1366, 0.0
        %v1444 = vmax.f32 %v1368, 0.0
        %v1445 = vmax.f32 %v1370, 0.0
        %v1446 = vmax.f32 %v1374, 0.0
        %v1447 = vmax.f32 %v1376, 0.0
        %v1448 = vmax.f32 %v1378, 0.0
        %v1449 = vmax.f32 %v1380, 0.0
        %v1450 = vmax.f32 %v1384, 0.0
        %v1451 = vmax.f32 %v1386, 0.0
        %v1452 = vmax.f32 %v1388, 0.0
        %v1453 = vmax.f32 %v1390, 0.0
        %v1454 = vmax.f32 %v1394, 0.0
        %v1455 = vmax.f32 %v1396, 0.0
        %v1456 = vmax.f32 %v1398, 0.0
        %v1457 = vmax.f32 %v1400, 0.0
        %v1458 = vmax.f32 %v1404, 0.0
        %v1459 = vmax.f32 %v1406, 0.0
        %v1460 = vmax.f32 %v1408, 0.0
        %v1461 = vmax.f32 %v1410, 0.0
        %v1462 = vmax.f32 %v1414, 0.0
        %v1463 = vmax.f32 %v1416, 0.0
        %v1464 = vmax.f32 %v1418, 0.0
        %v1465 = vmax.f32 %v1420, 0.0
        %v1466 = vmax.f32 %v1424, 0.0
        %v1467 = vmax.f32 %v1426, 0.0
        %v1468 = vmax.f32 %v1428, 0.0
        %v1469 = vmax.f32 %v1430, 0.0
        %v1470 = vmax.f32 %v1434, 0.0
        %v1471 = vmax.f32 %v1436, 0.0
        %v1472 = vmax.f32 %v1438, 0.0
        %v1473 = vmax.f32 %v1440, 0.0
        %v1474 = vpack.c.bf16 %v1444, %v1442
        %v1475 = vpack.c.bf16 %v1445, %v1443
        %v1476 = vpack.c.bf16 %v1448, %v1446
        %v1477 = vpack.c.bf16 %v1449, %v1447
        %v1478 = vpack.c.bf16 %v1452, %v1450
        %v1479 = vpack.c.bf16 %v1453, %v1451
        %v1480 = vpack.c.bf16 %v1456, %v1454
        %v1481 = vpack.c.bf16 %v1457, %v1455
        %v1482 = vpack.c.bf16 %v1460, %v1458
        %v1483 = vpack.c.bf16 %v1461, %v1459
        %v1484 = vpack.c.bf16 %v1464, %v1462
        %v1485 = vpack.c.bf16 %v1465, %v1463
        %v1486 = vpack.c.bf16 %v1468, %v1466
        %v1487 = vpack.c.bf16 %v1469, %v1467
        %v1488 = vpack.c.bf16 %v1472, %v1470
        %v1489 = vpack.c.bf16 %v1473, %v1471
        %s1490 = scalar_lea.vmem [#allocation8], 512
        %v1491 = vld [vmem:[%s1490] sm:$0xff]
        %v1492 = vld [vmem:[%s1490 + $0x8] sm:$0xff]
        %v1493 = vld [vmem:[%s1490 + $0x10] sm:$0xff]
        %v1494 = vld [vmem:[%s1490 + $0x18] sm:$0xff]
        %v1495 = vld [vmem:[%s1490 + $0x20] sm:$0xff]
        %v1496 = vld [vmem:[%s1490 + $0x28] sm:$0xff]
        %v1497 = vld [vmem:[%s1490 + $0x30] sm:$0xff]
        %v1498 = vld [vmem:[%s1490 + $0x38] sm:$0xff]
        %v1499 = vld [vmem:[%s1490 + $0x40] sm:$0xff]
        %v1500 = vld [vmem:[%s1490 + $0x48] sm:$0xff]
        %v1501 = vld [vmem:[%s1490 + $0x50] sm:$0xff]
        %v1502 = vld [vmem:[%s1490 + $0x58] sm:$0xff]
        %v1503 = vld [vmem:[%s1490 + $0x60] sm:$0xff]
        %v1504 = vld [vmem:[%s1490 + $0x68] sm:$0xff]
        %v1505 = vld [vmem:[%s1490 + $0x70] sm:$0xff]
        %v1506 = vld [vmem:[%s1490 + $0x78] sm:$0xff]
        %v1507 = vld [vmem:[%s1490 + $0x80] sm:$0xff]
        %v1508 = vld [vmem:[%s1490 + $0x88] sm:$0xff]
        %v1509 = vld [vmem:[%s1490 + $0x90] sm:$0xff]
        %v1510 = vld [vmem:[%s1490 + $0x98] sm:$0xff]
        %v1511 = vld [vmem:[%s1490 + $0xa0] sm:$0xff]
        %v1512 = vld [vmem:[%s1490 + $0xa8] sm:$0xff]
        %v1513 = vld [vmem:[%s1490 + $0xb0] sm:$0xff]
        %v1514 = vld [vmem:[%s1490 + $0xb8] sm:$0xff]
        %v1515 = vld [vmem:[%s1490 + $0xc0] sm:$0xff]
        %v1516 = vld [vmem:[%s1490 + $0xc8] sm:$0xff]
        %v1517 = vld [vmem:[%s1490 + $0xd0] sm:$0xff]
        %v1518 = vld [vmem:[%s1490 + $0xd8] sm:$0xff]
        %v1519 = vld [vmem:[%s1490 + $0xe0] sm:$0xff]
        %v1520 = vld [vmem:[%s1490 + $0xe8] sm:$0xff]
        %v1521 = vld [vmem:[%s1490 + $0xf0] sm:$0xff]
        %v1522 = vld [vmem:[%s1490 + $0xf8] sm:$0xff]
        %s1523 = scalar_lea.vmem %s4, 4
        %v1524 = vld [vmem:[%s1523] sm:$0x3]
        %v1526 = vlaneseq
        %v1527 = vshrl.u32 %v1526, 7
        %v1528 = vsub.s32 0, %v1527
        %v1529 = vrot.slane %v1524, %v1528
        %v1530 = vlaneseq
        %v1531 = vshrl.u32 %v1530, 7
        %v1532 = vsub.s32 1, %v1531
        %v1533 = vrot.slane %v1524, %v1532
        %v1568 = vunpack.c.l.b16 %v1491
        %v1569 = vunpack.c.h.b16 %v1491
        %v1570 = vunpack.c.l.b16 %v1492
        %v1571 = vunpack.c.h.b16 %v1492
        %v1572 = vunpack.c.l.b16 %v1493
        %v1573 = vunpack.c.h.b16 %v1493
        %v1574 = vunpack.c.l.b16 %v1494
        %v1575 = vunpack.c.h.b16 %v1494
        %v1576 = vunpack.c.l.b16 %v1495
        %v1577 = vunpack.c.h.b16 %v1495
        %v1578 = vunpack.c.l.b16 %v1496
        %v1579 = vunpack.c.h.b16 %v1496
        %v1580 = vunpack.c.l.b16 %v1497
        %v1581 = vunpack.c.h.b16 %v1497
        %v1582 = vunpack.c.l.b16 %v1498
        %v1583 = vunpack.c.h.b16 %v1498
        %v1584 = vunpack.c.l.b16 %v1499
        %v1585 = vunpack.c.h.b16 %v1499
        %v1586 = vunpack.c.l.b16 %v1500
        %v1587 = vunpack.c.h.b16 %v1500
        %v1588 = vunpack.c.l.b16 %v1501
        %v1589 = vunpack.c.h.b16 %v1501
        %v1590 = vunpack.c.l.b16 %v1502
        %v1591 = vunpack.c.h.b16 %v1502
        %v1592 = vunpack.c.l.b16 %v1503
        %v1593 = vunpack.c.h.b16 %v1503
        %v1594 = vunpack.c.l.b16 %v1504
        %v1595 = vunpack.c.h.b16 %v1504
        %v1596 = vunpack.c.l.b16 %v1505
        %v1597 = vunpack.c.h.b16 %v1505
        %v1598 = vunpack.c.l.b16 %v1506
        %v1599 = vunpack.c.h.b16 %v1506
        %v1600 = vunpack.c.l.b16 %v1507
        %v1601 = vunpack.c.h.b16 %v1507
        %v1602 = vunpack.c.l.b16 %v1508
        %v1603 = vunpack.c.h.b16 %v1508
        %v1604 = vunpack.c.l.b16 %v1509
        %v1605 = vunpack.c.h.b16 %v1509
        %v1606 = vunpack.c.l.b16 %v1510
        %v1607 = vunpack.c.h.b16 %v1510
        %v1608 = vunpack.c.l.b16 %v1511
        %v1609 = vunpack.c.h.b16 %v1511
        %v1610 = vunpack.c.l.b16 %v1512
        %v1611 = vunpack.c.h.b16 %v1512
        %v1612 = vunpack.c.l.b16 %v1513
        %v1613 = vunpack.c.h.b16 %v1513
        %v1614 = vunpack.c.l.b16 %v1514
        %v1615 = vunpack.c.h.b16 %v1514
        %v1616 = vunpack.c.l.b16 %v1515
        %v1617 = vunpack.c.h.b16 %v1515
        %v1618 = vunpack.c.l.b16 %v1516
        %v1619 = vunpack.c.h.b16 %v1516
        %v1620 = vunpack.c.l.b16 %v1517
        %v1621 = vunpack.c.h.b16 %v1517
        %v1622 = vunpack.c.l.b16 %v1518
        %v1623 = vunpack.c.h.b16 %v1518
        %v1624 = vunpack.c.l.b16 %v1519
        %v1625 = vunpack.c.h.b16 %v1519
        %v1626 = vunpack.c.l.b16 %v1520
        %v1627 = vunpack.c.h.b16 %v1520
        %v1628 = vunpack.c.l.b16 %v1521
        %v1629 = vunpack.c.h.b16 %v1521
        %v1630 = vunpack.c.l.b16 %v1522
        %v1631 = vunpack.c.h.b16 %v1522
        %v1632 = vpack.c.b16 %v1570, %v1568
        %v1633 = vpack.c.b16 %v1571, %v1569
        %v1634 = vpack.c.b16 %v1574, %v1572
        %v1635 = vpack.c.b16 %v1575, %v1573
        %v1636 = vpack.c.b16 %v1578, %v1576
        %v1637 = vpack.c.b16 %v1579, %v1577
        %v1638 = vpack.c.b16 %v1582, %v1580
        %v1639 = vpack.c.b16 %v1583, %v1581
        %v1640 = vpack.c.b16 %v1586, %v1584
        %v1641 = vpack.c.b16 %v1587, %v1585
        %v1642 = vpack.c.b16 %v1590, %v1588
        %v1643 = vpack.c.b16 %v1591, %v1589
        %v1644 = vpack.c.b16 %v1594, %v1592
        %v1645 = vpack.c.b16 %v1595, %v1593
        %v1646 = vpack.c.b16 %v1598, %v1596
        %v1647 = vpack.c.b16 %v1599, %v1597
        %v1648 = vpack.c.b16 %v1602, %v1600
        %v1649 = vpack.c.b16 %v1603, %v1601
        %v1650 = vpack.c.b16 %v1606, %v1604
        %v1651 = vpack.c.b16 %v1607, %v1605
        %v1652 = vpack.c.b16 %v1610, %v1608
        %v1653 = vpack.c.b16 %v1611, %v1609
        %v1654 = vpack.c.b16 %v1614, %v1612
        %v1655 = vpack.c.b16 %v1615, %v1613
        %v1656 = vpack.c.b16 %v1618, %v1616
        %v1657 = vpack.c.b16 %v1619, %v1617
        %v1658 = vpack.c.b16 %v1622, %v1620
        %v1659 = vpack.c.b16 %v1623, %v1621
        %v1660 = vpack.c.b16 %v1626, %v1624
        %v1661 = vpack.c.b16 %v1627, %v1625
        %v1662 = vpack.c.b16 %v1630, %v1628
        %v1663 = vpack.c.b16 %v1631, %v1629
        %1696 = vmatprep.subr.bf16.mxu0 %v1633
        %1697 = vmatpush1.bf16.msra.mxu0 %v1632
        %1698 = vmatprep.subr.bf16.mxu0 %v1635
        %1699 = vmatpush1.bf16.msra.mxu0 %v1634
        %1700 = vmatprep.subr.bf16.mxu0 %v1637
        %1701 = vmatpush1.bf16.msra.mxu0 %v1636
        %1702 = vmatprep.subr.bf16.mxu0 %v1639
        %1703 = vmatpush1.bf16.msra.mxu0 %v1638
        %1704 = vmatprep.subr.bf16.mxu0 %v1641
        %1705 = vmatpush1.bf16.msra.mxu0 %v1640
        %1706 = vmatprep.subr.bf16.mxu0 %v1643
        %1707 = vmatpush1.bf16.msra.mxu0 %v1642
        %1708 = vmatprep.subr.bf16.mxu0 %v1645
        %1709 = vmatpush1.bf16.msra.mxu0 %v1644
        %1710 = vmatprep.subr.bf16.mxu0 %v1647
        %1711 = vmatpush1.bf16.msra.mxu0 %v1646
        %1712 = vmatprep.subr.bf16.mxu0 %v1649
        %1713 = vmatpush1.bf16.msra.mxu0 %v1648
        %1714 = vmatprep.subr.bf16.mxu0 %v1651
        %1715 = vmatpush1.bf16.msra.mxu0 %v1650
        %1716 = vmatprep.subr.bf16.mxu0 %v1653
        %1717 = vmatpush1.bf16.msra.mxu0 %v1652
        %1718 = vmatprep.subr.bf16.mxu0 %v1655
        %1719 = vmatpush1.bf16.msra.mxu0 %v1654
        %1720 = vmatprep.subr.bf16.mxu0 %v1657
        %1721 = vmatpush1.bf16.msra.mxu0 %v1656
        %1722 = vmatprep.subr.bf16.mxu0 %v1659
        %1723 = vmatpush1.bf16.msra.mxu0 %v1658
        %1724 = vmatprep.subr.bf16.mxu0 %v1661
        %1725 = vmatpush1.bf16.msra.mxu0 %v1660
        %1726 = vmatprep.subr.bf16.mxu0 %v1663
        %1727 = vmatpush1.bf16.msra.mxu0 %v1662
        %1728 = vmatprep.mubr.bf16.mxu0 %v1475
        %1729 = vmatmul.mubr.bf16.gmra.mrb[0].mxu0 %v1474
        %v1730 = vpop.f32.mrb[0].mxu0
        %v1731 = vadd.f32 %v1529, %v1730
        %v1732 = vpop.f32.mrb[0].mxu0
        %v1733 = vadd.f32 %v1533, %v1732
        %v1734 = vpop.f32.mrb[0].mxu0
        %v1735 = vadd.f32 %v1529, %v1734
        %v1736 = vpop.f32.mrb[0].mxu0
        %v1737 = vadd.f32 %v1533, %v1736
        %1738 = vmatprep.mubr.bf16.mxu0 %v1477
        %1739 = vmatmul.mubr.bf16.gmra.mrb[0].mxu0 %v1476
        %v1740 = vpop.f32.mrb[0].mxu0
        %v1741 = vadd.f32 %v1529, %v1740
        %v1742 = vpop.f32.mrb[0].mxu0
        %v1743 = vadd.f32 %v1533, %v1742
        %v1744 = vpop.f32.mrb[0].mxu0
        %v1745 = vadd.f32 %v1529, %v1744
        %v1746 = vpop.f32.mrb[0].mxu0
        %v1747 = vadd.f32 %v1533, %v1746
        %1748 = vmatprep.mubr.bf16.mxu0 %v1479
        %1749 = vmatmul.mubr.bf16.gmra.mrb[0].mxu0 %v1478
        %v1750 = vpop.f32.mrb[0].mxu0
        %v1751 = vadd.f32 %v1529, %v1750
        %v1752 = vpop.f32.mrb[0].mxu0
        %v1753 = vadd.f32 %v1533, %v1752
        %v1754 = vpop.f32.mrb[0].mxu0
        %v1755 = vadd.f32 %v1529, %v1754
        %v1756 = vpop.f32.mrb[0].mxu0
        %v1757 = vadd.f32 %v1533, %v1756
        %1758 = vmatprep.mubr.bf16.mxu0 %v1481
        %1759 = vmatmul.mubr.bf16.gmra.mrb[0].mxu0 %v1480
        %v1760 = vpop.f32.mrb[0].mxu0
        %v1761 = vadd.f32 %v1529, %v1760
        %v1762 = vpop.f32.mrb[0].mxu0
        %v1763 = vadd.f32 %v1533, %v1762
        %v1764 = vpop.f32.mrb[0].mxu0
        %v1765 = vadd.f32 %v1529, %v1764
        %v1766 = vpop.f32.mrb[0].mxu0
        %v1767 = vadd.f32 %v1533, %v1766
        %1768 = vmatprep.mubr.bf16.mxu0 %v1483
        %1769 = vmatmul.mubr.bf16.gmra.mrb[0].mxu0 %v1482
        %v1770 = vpop.f32.mrb[0].mxu0
        %v1771 = vadd.f32 %v1529, %v1770
        %v1772 = vpop.f32.mrb[0].mxu0
        %v1773 = vadd.f32 %v1533, %v1772
        %v1774 = vpop.f32.mrb[0].mxu0
        %v1775 = vadd.f32 %v1529, %v1774
        %v1776 = vpop.f32.mrb[0].mxu0
        %v1777 = vadd.f32 %v1533, %v1776
        %1778 = vmatprep.mubr.bf16.mxu0 %v1485
        %1779 = vmatmul.mubr.bf16.gmra.mrb[0].mxu0 %v1484
        %v1780 = vpop.f32.mrb[0].mxu0
        %v1781 = vadd.f32 %v1529, %v1780
        %v1782 = vpop.f32.mrb[0].mxu0
        %v1783 = vadd.f32 %v1533, %v1782
        %v1784 = vpop.f32.mrb[0].mxu0
        %v1785 = vadd.f32 %v1529, %v1784
        %v1786 = vpop.f32.mrb[0].mxu0
        %v1787 = vadd.f32 %v1533, %v1786
        %1788 = vmatprep.mubr.bf16.mxu0 %v1487
        %1789 = vmatmul.mubr.bf16.gmra.mrb[0].mxu0 %v1486
        %v1790 = vpop.f32.mrb[0].mxu0
        %v1791 = vadd.f32 %v1529, %v1790
        %v1792 = vpop.f32.mrb[0].mxu0
        %v1793 = vadd.f32 %v1533, %v1792
        %v1794 = vpop.f32.mrb[0].mxu0
        %v1795 = vadd.f32 %v1529, %v1794
        %v1796 = vpop.f32.mrb[0].mxu0
        %v1797 = vadd.f32 %v1533, %v1796
        %1798 = vmatprep.mubr.bf16.mxu0 %v1489
        %1799 = vmatmul.mubr.bf16.gmra.mrb[0].mxu0 %v1488
        %v1800 = vpop.f32.mrb[0].mxu0
        %v1801 = vadd.f32 %v1529, %v1800
        %v1802 = vpop.f32.mrb[0].mxu0
        %v1803 = vadd.f32 %v1533, %v1802
        %v1804 = vpop.f32.mrb[0].mxu0
        %v1805 = vadd.f32 %v1529, %v1804
        %v1806 = vpop.f32.mrb[0].mxu0
        %v1807 = vadd.f32 %v1533, %v1806
        %1808 = vdwg.mxu0
        %v1809 = vmax.f32 %v1731, 0.0
        %v1810 = vmax.f32 %v1733, 0.0
        %v1811 = vmax.f32 %v1735, 0.0
        %v1812 = vmax.f32 %v1737, 0.0
        %v1813 = vmax.f32 %v1741, 0.0
        %v1814 = vmax.f32 %v1743, 0.0
        %v1815 = vmax.f32 %v1745, 0.0
        %v1816 = vmax.f32 %v1747, 0.0
        %v1817 = vmax.f32 %v1751, 0.0
        %v1818 = vmax.f32 %v1753, 0.0
        %v1819 = vmax.f32 %v1755, 0.0
        %v1820 = vmax.f32 %v1757, 0.0
        %v1821 = vmax.f32 %v1761, 0.0
        %v1822 = vmax.f32 %v1763, 0.0
        %v1823 = vmax.f32 %v1765, 0.0
        %v1824 = vmax.f32 %v1767, 0.0
        %v1825 = vmax.f32 %v1771, 0.0
        %v1826 = vmax.f32 %v1773, 0.0
        %v1827 = vmax.f32 %v1775, 0.0
        %v1828 = vmax.f32 %v1777, 0.0
        %v1829 = vmax.f32 %v1781, 0.0
        %v1830 = vmax.f32 %v1783, 0.0
        %v1831 = vmax.f32 %v1785, 0.0
        %v1832 = vmax.f32 %v1787, 0.0
        %v1833 = vmax.f32 %v1791, 0.0
        %v1834 = vmax.f32 %v1793, 0.0
        %v1835 = vmax.f32 %v1795, 0.0
        %v1836 = vmax.f32 %v1797, 0.0
        %v1837 = vmax.f32 %v1801, 0.0
        %v1838 = vmax.f32 %v1803, 0.0
        %v1839 = vmax.f32 %v1805, 0.0
        %v1840 = vmax.f32 %v1807, 0.0
        %v1841 = vpack.c.bf16 %v1811, %v1809
        %v1842 = vpack.c.bf16 %v1812, %v1810
        %v1843 = vpack.c.bf16 %v1815, %v1813
        %v1844 = vpack.c.bf16 %v1816, %v1814
        %v1845 = vpack.c.bf16 %v1819, %v1817
        %v1846 = vpack.c.bf16 %v1820, %v1818
        %v1847 = vpack.c.bf16 %v1823, %v1821
        %v1848 = vpack.c.bf16 %v1824, %v1822
        %v1849 = vpack.c.bf16 %v1827, %v1825
        %v1850 = vpack.c.bf16 %v1828, %v1826
        %v1851 = vpack.c.bf16 %v1831, %v1829
        %v1852 = vpack.c.bf16 %v1832, %v1830
        %v1853 = vpack.c.bf16 %v1835, %v1833
        %v1854 = vpack.c.bf16 %v1836, %v1834
        %v1855 = vpack.c.bf16 %v1839, %v1837
        %v1856 = vpack.c.bf16 %v1840, %v1838
        %s1857 = scalar_lea.vmem [#allocation8], 768
        %v1858 = vld [vmem:[%s1857] sm:$0xff]
        %v1859 = vld [vmem:[%s1857 + $0x8] sm:$0xff]
        %v1860 = vld [vmem:[%s1857 + $0x10] sm:$0xff]
        %v1861 = vld [vmem:[%s1857 + $0x18] sm:$0xff]
        %v1862 = vld [vmem:[%s1857 + $0x20] sm:$0xff]
        %v1863 = vld [vmem:[%s1857 + $0x28] sm:$0xff]
        %v1864 = vld [vmem:[%s1857 + $0x30] sm:$0xff]
        %v1865 = vld [vmem:[%s1857 + $0x38] sm:$0xff]
        %v1866 = vld [vmem:[%s1857 + $0x40] sm:$0xff]
        %v1867 = vld [vmem:[%s1857 + $0x48] sm:$0xff]
        %v1868 = vld [vmem:[%s1857 + $0x50] sm:$0xff]
        %v1869 = vld [vmem:[%s1857 + $0x58] sm:$0xff]
        %v1870 = vld [vmem:[%s1857 + $0x60] sm:$0xff]
        %v1871 = vld [vmem:[%s1857 + $0x68] sm:$0xff]
        %v1872 = vld [vmem:[%s1857 + $0x70] sm:$0xff]
        %v1873 = vld [vmem:[%s1857 + $0x78] sm:$0xff]
        %v1874 = vld [vmem:[%s1857 + $0x80] sm:$0xff]
        %v1875 = vld [vmem:[%s1857 + $0x88] sm:$0xff]
        %v1876 = vld [vmem:[%s1857 + $0x90] sm:$0xff]
        %v1877 = vld [vmem:[%s1857 + $0x98] sm:$0xff]
        %v1878 = vld [vmem:[%s1857 + $0xa0] sm:$0xff]
        %v1879 = vld [vmem:[%s1857 + $0xa8] sm:$0xff]
        %v1880 = vld [vmem:[%s1857 + $0xb0] sm:$0xff]
        %v1881 = vld [vmem:[%s1857 + $0xb8] sm:$0xff]
        %v1882 = vld [vmem:[%s1857 + $0xc0] sm:$0xff]
        %v1883 = vld [vmem:[%s1857 + $0xc8] sm:$0xff]
        %v1884 = vld [vmem:[%s1857 + $0xd0] sm:$0xff]
        %v1885 = vld [vmem:[%s1857 + $0xd8] sm:$0xff]
        %v1886 = vld [vmem:[%s1857 + $0xe0] sm:$0xff]
        %v1887 = vld [vmem:[%s1857 + $0xe8] sm:$0xff]
        %v1888 = vld [vmem:[%s1857 + $0xf0] sm:$0xff]
        %v1889 = vld [vmem:[%s1857 + $0xf8] sm:$0xff]
        %s1890 = scalar_lea.vmem %s4, 6
        %v1891 = vld [vmem:[%s1890] sm:$0x3]
        %v1893 = vlaneseq
        %v1894 = vshrl.u32 %v1893, 7
        %v1895 = vsub.s32 0, %v1894
        %v1896 = vrot.slane %v1891, %v1895
        %v1897 = vlaneseq
        %v1898 = vshrl.u32 %v1897, 7
        %v1899 = vsub.s32 1, %v1898
        %v1900 = vrot.slane %v1891, %v1899
        %v1935 = vunpack.c.l.b16 %v1858
        %v1936 = vunpack.c.h.b16 %v1858
        %v1937 = vunpack.c.l.b16 %v1859
        %v1938 = vunpack.c.h.b16 %v1859
        %v1939 = vunpack.c.l.b16 %v1860
        %v1940 = vunpack.c.h.b16 %v1860
        %v1941 = vunpack.c.l.b16 %v1861
        %v1942 = vunpack.c.h.b16 %v1861
        %v1943 = vunpack.c.l.b16 %v1862
        %v1944 = vunpack.c.h.b16 %v1862
        %v1945 = vunpack.c.l.b16 %v1863
        %v1946 = vunpack.c.h.b16 %v1863
        %v1947 = vunpack.c.l.b16 %v1864
        %v1948 = vunpack.c.h.b16 %v1864
        %v1949 = vunpack.c.l.b16 %v1865
        %v1950 = vunpack.c.h.b16 %v1865
        %v1951 = vunpack.c.l.b16 %v1866
        %v1952 = vunpack.c.h.b16 %v1866
        %v1953 = vunpack.c.l.b16 %v1867
        %v1954 = vunpack.c.h.b16 %v1867
        %v1955 = vunpack.c.l.b16 %v1868
        %v1956 = vunpack.c.h.b16 %v1868
        %v1957 = vunpack.c.l.b16 %v1869
        %v1958 = vunpack.c.h.b16 %v1869
        %v1959 = vunpack.c.l.b16 %v1870
        %v1960 = vunpack.c.h.b16 %v1870
        %v1961 = vunpack.c.l.b16 %v1871
        %v1962 = vunpack.c.h.b16 %v1871
        %v1963 = vunpack.c.l.b16 %v1872
        %v1964 = vunpack.c.h.b16 %v1872
        %v1965 = vunpack.c.l.b16 %v1873
        %v1966 = vunpack.c.h.b16 %v1873
        %v1967 = vunpack.c.l.b16 %v1874
        %v1968 = vunpack.c.h.b16 %v1874
        %v1969 = vunpack.c.l.b16 %v1875
        %v1970 = vunpack.c.h.b16 %v1875
        %v1971 = vunpack.c.l.b16 %v1876
        %v1972 = vunpack.c.h.b16 %v1876
        %v1973 = vunpack.c.l.b16 %v1877
        %v1974 = vunpack.c.h.b16 %v1877
        %v1975 = vunpack.c.l.b16 %v1878
        %v1976 = vunpack.c.h.b16 %v1878
        %v1977 = vunpack.c.l.b16 %v1879
        %v1978 = vunpack.c.h.b16 %v1879
        %v1979 = vunpack.c.l.b16 %v1880
        %v1980 = vunpack.c.h.b16 %v1880
        %v1981 = vunpack.c.l.b16 %v1881
        %v1982 = vunpack.c.h.b16 %v1881
        %v1983 = vunpack.c.l.b16 %v1882
        %v1984 = vunpack.c.h.b16 %v1882
        %v1985 = vunpack.c.l.b16 %v1883
        %v1986 = vunpack.c.h.b16 %v1883
        %v1987 = vunpack.c.l.b16 %v1884
        %v1988 = vunpack.c.h.b16 %v1884
        %v1989 = vunpack.c.l.b16 %v1885
        %v1990 = vunpack.c.h.b16 %v1885
        %v1991 = vunpack.c.l.b16 %v1886
        %v1992 = vunpack.c.h.b16 %v1886
        %v1993 = vunpack.c.l.b16 %v1887
        %v1994 = vunpack.c.h.b16 %v1887
        %v1995 = vunpack.c.l.b16 %v1888
        %v1996 = vunpack.c.h.b16 %v1888
        %v1997 = vunpack.c.l.b16 %v1889
        %v1998 = vunpack.c.h.b16 %v1889
        %v1999 = vpack.c.b16 %v1937, %v1935
        %v2000 = vpack.c.b16 %v1938, %v1936
        %v2001 = vpack.c.b16 %v1941, %v1939
        %v2002 = vpack.c.b16 %v1942, %v1940
        %v2003 = vpack.c.b16 %v1945, %v1943
        %v2004 = vpack.c.b16 %v1946, %v1944
        %v2005 = vpack.c.b16 %v1949, %v1947
        %v2006 = vpack.c.b16 %v1950, %v1948
        %v2007 = vpack.c.b16 %v1953, %v1951
        %v2008 = vpack.c.b16 %v1954, %v1952
        %v2009 = vpack.c.b16 %v1957, %v1955
        %v2010 = vpack.c.b16 %v1958, %v1956
        %v2011 = vpack.c.b16 %v1961, %v1959
        %v2012 = vpack.c.b16 %v1962, %v1960
        %v2013 = vpack.c.b16 %v1965, %v1963
        %v2014 = vpack.c.b16 %v1966, %v1964
        %v2015 = vpack.c.b16 %v1969, %v1967
        %v2016 = vpack.c.b16 %v1970, %v1968
        %v2017 = vpack.c.b16 %v1973, %v1971
        %v2018 = vpack.c.b16 %v1974, %v1972
        %v2019 = vpack.c.b16 %v1977, %v1975
        %v2020 = vpack.c.b16 %v1978, %v1976
        %v2021 = vpack.c.b16 %v1981, %v1979
        %v2022 = vpack.c.b16 %v1982, %v1980
        %v2023 = vpack.c.b16 %v1985, %v1983
        %v2024 = vpack.c.b16 %v1986, %v1984
        %v2025 = vpack.c.b16 %v1989, %v1987
        %v2026 = vpack.c.b16 %v1990, %v1988
        %v2027 = vpack.c.b16 %v1993, %v1991
        %v2028 = vpack.c.b16 %v1994, %v1992
        %v2029 = vpack.c.b16 %v1997, %v1995
        %v2030 = vpack.c.b16 %v1998, %v1996
        %2063 = vmatprep.subr.bf16.mxu0 %v2000
        %2064 = vmatpush1.bf16.msra.mxu0 %v1999
        %2065 = vmatprep.subr.bf16.mxu0 %v2002
        %2066 = vmatpush1.bf16.msra.mxu0 %v2001
        %2067 = vmatprep.subr.bf16.mxu0 %v2004
        %2068 = vmatpush1.bf16.msra.mxu0 %v2003
        %2069 = vmatprep.subr.bf16.mxu0 %v2006
        %2070 = vmatpush1.bf16.msra.mxu0 %v2005
        %2071 = vmatprep.subr.bf16.mxu0 %v2008
        %2072 = vmatpush1.bf16.msra.mxu0 %v2007
        %2073 = vmatprep.subr.bf16.mxu0 %v2010
        %2074 = vmatpush1.bf16.msra.mxu0 %v2009
        %2075 = vmatprep.subr.bf16.mxu0 %v2012
        %2076 = vmatpush1.bf16.msra.mxu0 %v2011
        %2077 = vmatprep.subr.bf16.mxu0 %v2014
        %2078 = vmatpush1.bf16.msra.mxu0 %v2013
        %2079 = vmatprep.subr.bf16.mxu0 %v2016
        %2080 = vmatpush1.bf16.msra.mxu0 %v2015
        %2081 = vmatprep.subr.bf16.mxu0 %v2018
        %2082 = vmatpush1.bf16.msra.mxu0 %v2017
        %2083 = vmatprep.subr.bf16.mxu0 %v2020
        %2084 = vmatpush1.bf16.msra.mxu0 %v2019
        %2085 = vmatprep.subr.bf16.mxu0 %v2022
        %2086 = vmatpush1.bf16.msra.mxu0 %v2021
        %2087 = vmatprep.subr.bf16.mxu0 %v2024
        %2088 = vmatpush1.bf16.msra.mxu0 %v2023
        %2089 = vmatprep.subr.bf16.mxu0 %v2026
        %2090 = vmatpush1.bf16.msra.mxu0 %v2025
        %2091 = vmatprep.subr.bf16.mxu0 %v2028
        %2092 = vmatpush1.bf16.msra.mxu0 %v2027
        %2093 = vmatprep.subr.bf16.mxu0 %v2030
        %2094 = vmatpush1.bf16.msra.mxu0 %v2029
        %2095 = vmatprep.mubr.bf16.mxu0 %v1842
        %2096 = vmatmul.mubr.bf16.gmra.mrb[0].mxu0 %v1841
        %v2097 = vpop.f32.mrb[0].mxu0
        %v2098 = vadd.f32 %v1896, %v2097
        %v2099 = vpop.f32.mrb[0].mxu0
        %v2100 = vadd.f32 %v1900, %v2099
        %v2101 = vpop.f32.mrb[0].mxu0
        %v2102 = vadd.f32 %v1896, %v2101
        %v2103 = vpop.f32.mrb[0].mxu0
        %v2104 = vadd.f32 %v1900, %v2103
        %2105 = vmatprep.mubr.bf16.mxu0 %v1844
        %2106 = vmatmul.mubr.bf16.gmra.mrb[0].mxu0 %v1843
        %v2107 = vpop.f32.mrb[0].mxu0
        %v2108 = vadd.f32 %v1896, %v2107
        %v2109 = vpop.f32.mrb[0].mxu0
        %v2110 = vadd.f32 %v1900, %v2109
        %v2111 = vpop.f32.mrb[0].mxu0
        %v2112 = vadd.f32 %v1896, %v2111
        %v2113 = vpop.f32.mrb[0].mxu0
        %v2114 = vadd.f32 %v1900, %v2113
        %2115 = vmatprep.mubr.bf16.mxu0 %v1846
        %2116 = vmatmul.mubr.bf16.gmra.mrb[0].mxu0 %v1845
        %v2117 = vpop.f32.mrb[0].mxu0
        %v2118 = vadd.f32 %v1896, %v2117
        %v2119 = vpop.f32.mrb[0].mxu0
        %v2120 = vadd.f32 %v1900, %v2119
        %v2121 = vpop.f32.mrb[0].mxu0
        %v2122 = vadd.f32 %v1896, %v2121
        %v2123 = vpop.f32.mrb[0].mxu0
        %v2124 = vadd.f32 %v1900, %v2123
        %2125 = vmatprep.mubr.bf16.mxu0 %v1848
        %2126 = vmatmul.mubr.bf16.gmra.mrb[0].mxu0 %v1847
        %v2127 = vpop.f32.mrb[0].mxu0
        %v2128 = vadd.f32 %v1896, %v2127
        %v2129 = vpop.f32.mrb[0].mxu0
        %v2130 = vadd.f32 %v1900, %v2129
        %v2131 = vpop.f32.mrb[0].mxu0
        %v2132 = vadd.f32 %v1896, %v2131
        %v2133 = vpop.f32.mrb[0].mxu0
        %v2134 = vadd.f32 %v1900, %v2133
        %2135 = vmatprep.mubr.bf16.mxu0 %v1850
        %2136 = vmatmul.mubr.bf16.gmra.mrb[0].mxu0 %v1849
        %v2137 = vpop.f32.mrb[0].mxu0
        %v2138 = vadd.f32 %v1896, %v2137
        %v2139 = vpop.f32.mrb[0].mxu0
        %v2140 = vadd.f32 %v1900, %v2139
        %v2141 = vpop.f32.mrb[0].mxu0
        %v2142 = vadd.f32 %v1896, %v2141
        %v2143 = vpop.f32.mrb[0].mxu0
        %v2144 = vadd.f32 %v1900, %v2143
        %2145 = vmatprep.mubr.bf16.mxu0 %v1852
        %2146 = vmatmul.mubr.bf16.gmra.mrb[0].mxu0 %v1851
        %v2147 = vpop.f32.mrb[0].mxu0
        %v2148 = vadd.f32 %v1896, %v2147
        %v2149 = vpop.f32.mrb[0].mxu0
        %v2150 = vadd.f32 %v1900, %v2149
        %v2151 = vpop.f32.mrb[0].mxu0
        %v2152 = vadd.f32 %v1896, %v2151
        %v2153 = vpop.f32.mrb[0].mxu0
        %v2154 = vadd.f32 %v1900, %v2153
        %2155 = vmatprep.mubr.bf16.mxu0 %v1854
        %2156 = vmatmul.mubr.bf16.gmra.mrb[0].mxu0 %v1853
        %v2157 = vpop.f32.mrb[0].mxu0
        %v2158 = vadd.f32 %v1896, %v2157
        %v2159 = vpop.f32.mrb[0].mxu0
        %v2160 = vadd.f32 %v1900, %v2159
        %v2161 = vpop.f32.mrb[0].mxu0
        %v2162 = vadd.f32 %v1896, %v2161
        %v2163 = vpop.f32.mrb[0].mxu0
        %v2164 = vadd.f32 %v1900, %v2163
        %2165 = vmatprep.mubr.bf16.mxu0 %v1856
        %2166 = vmatmul.mubr.bf16.gmra.mrb[0].mxu0 %v1855
        %v2167 = vpop.f32.mrb[0].mxu0
        %v2168 = vadd.f32 %v1896, %v2167
        %v2169 = vpop.f32.mrb[0].mxu0
        %v2170 = vadd.f32 %v1900, %v2169
        %v2171 = vpop.f32.mrb[0].mxu0
        %v2172 = vadd.f32 %v1896, %v2171
        %v2173 = vpop.f32.mrb[0].mxu0
        %v2174 = vadd.f32 %v1900, %v2173
        %2175 = vdwg.mxu0
        %v2176 = vmax.f32 %v2098, 0.0
        %v2177 = vmax.f32 %v2100, 0.0
        %v2178 = vmax.f32 %v2102, 0.0
        %v2179 = vmax.f32 %v2104, 0.0
        %v2180 = vmax.f32 %v2108, 0.0
        %v2181 = vmax.f32 %v2110, 0.0
        %v2182 = vmax.f32 %v2112, 0.0
        %v2183 = vmax.f32 %v2114, 0.0
        %v2184 = vmax.f32 %v2118, 0.0
        %v2185 = vmax.f32 %v2120, 0.0
        %v2186 = vmax.f32 %v2122, 0.0
        %v2187 = vmax.f32 %v2124, 0.0
        %v2188 = vmax.f32 %v2128, 0.0
        %v2189 = vmax.f32 %v2130, 0.0
        %v2190 = vmax.f32 %v2132, 0.0
        %v2191 = vmax.f32 %v2134, 0.0
        %v2192 = vmax.f32 %v2138, 0.0
        %v2193 = vmax.f32 %v2140, 0.0
        %v2194 = vmax.f32 %v2142, 0.0
        %v2195 = vmax.f32 %v2144, 0.0
        %v2196 = vmax.f32 %v2148, 0.0
        %v2197 = vmax.f32 %v2150, 0.0
        %v2198 = vmax.f32 %v2152, 0.0
        %v2199 = vmax.f32 %v2154, 0.0
        %v2200 = vmax.f32 %v2158, 0.0
        %v2201 = vmax.f32 %v2160, 0.0
        %v2202 = vmax.f32 %v2162, 0.0
        %v2203 = vmax.f32 %v2164, 0.0
        %v2204 = vmax.f32 %v2168, 0.0
        %v2205 = vmax.f32 %v2170, 0.0
        %v2206 = vmax.f32 %v2172, 0.0
        %v2207 = vmax.f32 %v2174, 0.0
        %v2208 = vpack.c.bf16 %v2178, %v2176
        %v2209 = vpack.c.bf16 %v2179, %v2177
        %v2210 = vpack.c.bf16 %v2182, %v2180
        %v2211 = vpack.c.bf16 %v2183, %v2181
        %v2212 = vpack.c.bf16 %v2186, %v2184
        %v2213 = vpack.c.bf16 %v2187, %v2185
        %v2214 = vpack.c.bf16 %v2190, %v2188
        %v2215 = vpack.c.bf16 %v2191, %v2189
        %v2216 = vpack.c.bf16 %v2194, %v2192
        %v2217 = vpack.c.bf16 %v2195, %v2193
        %v2218 = vpack.c.bf16 %v2198, %v2196
        %v2219 = vpack.c.bf16 %v2199, %v2197
        %v2220 = vpack.c.bf16 %v2202, %v2200
        %v2221 = vpack.c.bf16 %v2203, %v2201
        %v2222 = vpack.c.bf16 %v2206, %v2204
        %v2223 = vpack.c.bf16 %v2207, %v2205
        %s2224 = scalar_lea.vmem [#allocation8], 1024
        %v2225 = vld [vmem:[%s2224] sm:$0xff]
        %v2226 = vld [vmem:[%s2224 + $0x8] sm:$0xff]
        %v2227 = vld [vmem:[%s2224 + $0x10] sm:$0xff]
        %v2228 = vld [vmem:[%s2224 + $0x18] sm:$0xff]
        %v2229 = vld [vmem:[%s2224 + $0x20] sm:$0xff]
        %v2230 = vld [vmem:[%s2224 + $0x28] sm:$0xff]
        %v2231 = vld [vmem:[%s2224 + $0x30] sm:$0xff]
        %v2232 = vld [vmem:[%s2224 + $0x38] sm:$0xff]
        %v2233 = vld [vmem:[%s2224 + $0x40] sm:$0xff]
        %v2234 = vld [vmem:[%s2224 + $0x48] sm:$0xff]
        %v2235 = vld [vmem:[%s2224 + $0x50] sm:$0xff]
        %v2236 = vld [vmem:[%s2224 + $0x58] sm:$0xff]
        %v2237 = vld [vmem:[%s2224 + $0x60] sm:$0xff]
        %v2238 = vld [vmem:[%s2224 + $0x68] sm:$0xff]
        %v2239 = vld [vmem:[%s2224 + $0x70] sm:$0xff]
        %v2240 = vld [vmem:[%s2224 + $0x78] sm:$0xff]
        %v2241 = vld [vmem:[%s2224 + $0x80] sm:$0xff]
        %v2242 = vld [vmem:[%s2224 + $0x88] sm:$0xff]
        %v2243 = vld [vmem:[%s2224 + $0x90] sm:$0xff]
        %v2244 = vld [vmem:[%s2224 + $0x98] sm:$0xff]
        %v2245 = vld [vmem:[%s2224 + $0xa0] sm:$0xff]
        %v2246 = vld [vmem:[%s2224 + $0xa8] sm:$0xff]
        %v2247 = vld [vmem:[%s2224 + $0xb0] sm:$0xff]
        %v2248 = vld [vmem:[%s2224 + $0xb8] sm:$0xff]
        %v2249 = vld [vmem:[%s2224 + $0xc0] sm:$0xff]
        %v2250 = vld [vmem:[%s2224 + $0xc8] sm:$0xff]
        %v2251 = vld [vmem:[%s2224 + $0xd0] sm:$0xff]
        %v2252 = vld [vmem:[%s2224 + $0xd8] sm:$0xff]
        %v2253 = vld [vmem:[%s2224 + $0xe0] sm:$0xff]
        %v2254 = vld [vmem:[%s2224 + $0xe8] sm:$0xff]
        %v2255 = vld [vmem:[%s2224 + $0xf0] sm:$0xff]
        %v2256 = vld [vmem:[%s2224 + $0xf8] sm:$0xff]
        %s2257 = scalar_lea.vmem %s4, 8
        %v2258 = vld [vmem:[%s2257] sm:$0x3]
        %v2260 = vlaneseq
        %v2261 = vshrl.u32 %v2260, 7
        %v2262 = vsub.s32 0, %v2261
        %v2263 = vrot.slane %v2258, %v2262
        %v2264 = vlaneseq
        %v2265 = vshrl.u32 %v2264, 7
        %v2266 = vsub.s32 1, %v2265
        %v2267 = vrot.slane %v2258, %v2266
        %v2302 = vunpack.c.l.b16 %v2225
        %v2303 = vunpack.c.h.b16 %v2225
        %v2304 = vunpack.c.l.b16 %v2226
        %v2305 = vunpack.c.h.b16 %v2226
        %v2306 = vunpack.c.l.b16 %v2227
        %v2307 = vunpack.c.h.b16 %v2227
        %v2308 = vunpack.c.l.b16 %v2228
        %v2309 = vunpack.c.h.b16 %v2228
        %v2310 = vunpack.c.l.b16 %v2229
        %v2311 = vunpack.c.h.b16 %v2229
        %v2312 = vunpack.c.l.b16 %v2230
        %v2313 = vunpack.c.h.b16 %v2230
        %v2314 = vunpack.c.l.b16 %v2231
        %v2315 = vunpack.c.h.b16 %v2231
        %v2316 = vunpack.c.l.b16 %v2232
        %v2317 = vunpack.c.h.b16 %v2232
        %v2318 = vunpack.c.l.b16 %v2233
        %v2319 = vunpack.c.h.b16 %v2233
        %v2320 = vunpack.c.l.b16 %v2234
        %v2321 = vunpack.c.h.b16 %v2234
        %v2322 = vunpack.c.l.b16 %v2235
        %v2323 = vunpack.c.h.b16 %v2235
        %v2324 = vunpack.c.l.b16 %v2236
        %v2325 = vunpack.c.h.b16 %v2236
        %v2326 = vunpack.c.l.b16 %v2237
        %v2327 = vunpack.c.h.b16 %v2237
        %v2328 = vunpack.c.l.b16 %v2238
        %v2329 = vunpack.c.h.b16 %v2238
        %v2330 = vunpack.c.l.b16 %v2239
        %v2331 = vunpack.c.h.b16 %v2239
        %v2332 = vunpack.c.l.b16 %v2240
        %v2333 = vunpack.c.h.b16 %v2240
        %v2334 = vunpack.c.l.b16 %v2241
        %v2335 = vunpack.c.h.b16 %v2241
        %v2336 = vunpack.c.l.b16 %v2242
        %v2337 = vunpack.c.h.b16 %v2242
        %v2338 = vunpack.c.l.b16 %v2243
        %v2339 = vunpack.c.h.b16 %v2243
        %v2340 = vunpack.c.l.b16 %v2244
        %v2341 = vunpack.c.h.b16 %v2244
        %v2342 = vunpack.c.l.b16 %v2245
        %v2343 = vunpack.c.h.b16 %v2245
        %v2344 = vunpack.c.l.b16 %v2246
        %v2345 = vunpack.c.h.b16 %v2246
        %v2346 = vunpack.c.l.b16 %v2247
        %v2347 = vunpack.c.h.b16 %v2247
        %v2348 = vunpack.c.l.b16 %v2248
        %v2349 = vunpack.c.h.b16 %v2248
        %v2350 = vunpack.c.l.b16 %v2249
        %v2351 = vunpack.c.h.b16 %v2249
        %v2352 = vunpack.c.l.b16 %v2250
        %v2353 = vunpack.c.h.b16 %v2250
        %v2354 = vunpack.c.l.b16 %v2251
        %v2355 = vunpack.c.h.b16 %v2251
        %v2356 = vunpack.c.l.b16 %v2252
        %v2357 = vunpack.c.h.b16 %v2252
        %v2358 = vunpack.c.l.b16 %v2253
        %v2359 = vunpack.c.h.b16 %v2253
        %v2360 = vunpack.c.l.b16 %v2254
        %v2361 = vunpack.c.h.b16 %v2254
        %v2362 = vunpack.c.l.b16 %v2255
        %v2363 = vunpack.c.h.b16 %v2255
        %v2364 = vunpack.c.l.b16 %v2256
        %v2365 = vunpack.c.h.b16 %v2256
        %v2366 = vpack.c.b16 %v2304, %v2302
        %v2367 = vpack.c.b16 %v2305, %v2303
        %v2368 = vpack.c.b16 %v2308, %v2306
        %v2369 = vpack.c.b16 %v2309, %v2307
        %v2370 = vpack.c.b16 %v2312, %v2310
        %v2371 = vpack.c.b16 %v2313, %v2311
        %v2372 = vpack.c.b16 %v2316, %v2314
        %v2373 = vpack.c.b16 %v2317, %v2315
        %v2374 = vpack.c.b16 %v2320, %v2318
        %v2375 = vpack.c.b16 %v2321, %v2319
        %v2376 = vpack.c.b16 %v2324, %v2322
        %v2377 = vpack.c.b16 %v2325, %v2323
        %v2378 = vpack.c.b16 %v2328, %v2326
        %v2379 = vpack.c.b16 %v2329, %v2327
        %v2380 = vpack.c.b16 %v2332, %v2330
        %v2381 = vpack.c.b16 %v2333, %v2331
        %v2382 = vpack.c.b16 %v2336, %v2334
        %v2383 = vpack.c.b16 %v2337, %v2335
        %v2384 = vpack.c.b16 %v2340, %v2338
        %v2385 = vpack.c.b16 %v2341, %v2339
        %v2386 = vpack.c.b16 %v2344, %v2342
        %v2387 = vpack.c.b16 %v2345, %v2343
        %v2388 = vpack.c.b16 %v2348, %v2346
        %v2389 = vpack.c.b16 %v2349, %v2347
        %v2390 = vpack.c.b16 %v2352, %v2350
        %v2391 = vpack.c.b16 %v2353, %v2351
        %v2392 = vpack.c.b16 %v2356, %v2354
        %v2393 = vpack.c.b16 %v2357, %v2355
        %v2394 = vpack.c.b16 %v2360, %v2358
        %v2395 = vpack.c.b16 %v2361, %v2359
        %v2396 = vpack.c.b16 %v2364, %v2362
        %v2397 = vpack.c.b16 %v2365, %v2363
        %2430 = vmatprep.subr.bf16.mxu0 %v2367
        %2431 = vmatpush1.bf16.msra.mxu0 %v2366
        %2432 = vmatprep.subr.bf16.mxu0 %v2369
        %2433 = vmatpush1.bf16.msra.mxu0 %v2368
        %2434 = vmatprep.subr.bf16.mxu0 %v2371
        %2435 = vmatpush1.bf16.msra.mxu0 %v2370
        %2436 = vmatprep.subr.bf16.mxu0 %v2373
        %2437 = vmatpush1.bf16.msra.mxu0 %v2372
        %2438 = vmatprep.subr.bf16.mxu0 %v2375
        %2439 = vmatpush1.bf16.msra.mxu0 %v2374
        %2440 = vmatprep.subr.bf16.mxu0 %v2377
        %2441 = vmatpush1.bf16.msra.mxu0 %v2376
        %2442 = vmatprep.subr.bf16.mxu0 %v2379
        %2443 = vmatpush1.bf16.msra.mxu0 %v2378
        %2444 = vmatprep.subr.bf16.mxu0 %v2381
        %2445 = vmatpush1.bf16.msra.mxu0 %v2380
        %2446 = vmatprep.subr.bf16.mxu0 %v2383
        %2447 = vmatpush1.bf16.msra.mxu0 %v2382
        %2448 = vmatprep.subr.bf16.mxu0 %v2385
        %2449 = vmatpush1.bf16.msra.mxu0 %v2384
        %2450 = vmatprep.subr.bf16.mxu0 %v2387
        %2451 = vmatpush1.bf16.msra.mxu0 %v2386
        %2452 = vmatprep.subr.bf16.mxu0 %v2389
        %2453 = vmatpush1.bf16.msra.mxu0 %v2388
        %2454 = vmatprep.subr.bf16.mxu0 %v2391
        %2455 = vmatpush1.bf16.msra.mxu0 %v2390
        %2456 = vmatprep.subr.bf16.mxu0 %v2393
        %2457 = vmatpush1.bf16.msra.mxu0 %v2392
        %2458 = vmatprep.subr.bf16.mxu0 %v2395
        %2459 = vmatpush1.bf16.msra.mxu0 %v2394
        %2460 = vmatprep.subr.bf16.mxu0 %v2397
        %2461 = vmatpush1.bf16.msra.mxu0 %v2396
        %2462 = vmatprep.mubr.bf16.mxu0 %v2209
        %2463 = vmatmul.mubr.bf16.gmra.mrb[0].mxu0 %v2208
        %v2464 = vpop.f32.mrb[0].mxu0
        %v2465 = vadd.f32 %v2263, %v2464
        %v2466 = vpop.f32.mrb[0].mxu0
        %v2467 = vadd.f32 %v2267, %v2466
        %v2468 = vpop.f32.mrb[0].mxu0
        %v2469 = vadd.f32 %v2263, %v2468
        %v2470 = vpop.f32.mrb[0].mxu0
        %v2471 = vadd.f32 %v2267, %v2470
        %2472 = vmatprep.mubr.bf16.mxu0 %v2211
        %2473 = vmatmul.mubr.bf16.gmra.mrb[0].mxu0 %v2210
        %v2474 = vpop.f32.mrb[0].mxu0
        %v2475 = vadd.f32 %v2263, %v2474
        %v2476 = vpop.f32.mrb[0].mxu0
        %v2477 = vadd.f32 %v2267, %v2476
        %v2478 = vpop.f32.mrb[0].mxu0
        %v2479 = vadd.f32 %v2263, %v2478
        %v2480 = vpop.f32.mrb[0].mxu0
        %v2481 = vadd.f32 %v2267, %v2480
        %2482 = vmatprep.mubr.bf16.mxu0 %v2213
        %2483 = vmatmul.mubr.bf16.gmra.mrb[0].mxu0 %v2212
        %v2484 = vpop.f32.mrb[0].mxu0
        %v2485 = vadd.f32 %v2263, %v2484
        %v2486 = vpop.f32.mrb[0].mxu0
        %v2487 = vadd.f32 %v2267, %v2486
        %v2488 = vpop.f32.mrb[0].mxu0
        %v2489 = vadd.f32 %v2263, %v2488
        %v2490 = vpop.f32.mrb[0].mxu0
        %v2491 = vadd.f32 %v2267, %v2490
        %2492 = vmatprep.mubr.bf16.mxu0 %v2215
        %2493 = vmatmul.mubr.bf16.gmra.mrb[0].mxu0 %v2214
        %v2494 = vpop.f32.mrb[0].mxu0
        %v2495 = vadd.f32 %v2263, %v2494
        %v2496 = vpop.f32.mrb[0].mxu0
        %v2497 = vadd.f32 %v2267, %v2496
        %v2498 = vpop.f32.mrb[0].mxu0
        %v2499 = vadd.f32 %v2263, %v2498
        %v2500 = vpop.f32.mrb[0].mxu0
        %v2501 = vadd.f32 %v2267, %v2500
        %2502 = vmatprep.mubr.bf16.mxu0 %v2217
        %2503 = vmatmul.mubr.bf16.gmra.mrb[0].mxu0 %v2216
        %v2504 = vpop.f32.mrb[0].mxu0
        %v2505 = vadd.f32 %v2263, %v2504
        %v2506 = vpop.f32.mrb[0].mxu0
        %v2507 = vadd.f32 %v2267, %v2506
        %v2508 = vpop.f32.mrb[0].mxu0
        %v2509 = vadd.f32 %v2263, %v2508
        %v2510 = vpop.f32.mrb[0].mxu0
        %v2511 = vadd.f32 %v2267, %v2510
        %2512 = vmatprep.mubr.bf16.mxu0 %v2219
        %2513 = vmatmul.mubr.bf16.gmra.mrb[0].mxu0 %v2218
        %v2514 = vpop.f32.mrb[0].mxu0
        %v2515 = vadd.f32 %v2263, %v2514
        %v2516 = vpop.f32.mrb[0].mxu0
        %v2517 = vadd.f32 %v2267, %v2516
        %v2518 = vpop.f32.mrb[0].mxu0
        %v2519 = vadd.f32 %v2263, %v2518
        %v2520 = vpop.f32.mrb[0].mxu0
        %v2521 = vadd.f32 %v2267, %v2520
        %2522 = vmatprep.mubr.bf16.mxu0 %v2221
        %2523 = vmatmul.mubr.bf16.gmra.mrb[0].mxu0 %v2220
        %v2524 = vpop.f32.mrb[0].mxu0
        %v2525 = vadd.f32 %v2263, %v2524
        %v2526 = vpop.f32.mrb[0].mxu0
        %v2527 = vadd.f32 %v2267, %v2526
        %v2528 = vpop.f32.mrb[0].mxu0
        %v2529 = vadd.f32 %v2263, %v2528
        %v2530 = vpop.f32.mrb[0].mxu0
        %v2531 = vadd.f32 %v2267, %v2530
        %2532 = vmatprep.mubr.bf16.mxu0 %v2223
        %2533 = vmatmul.mubr.bf16.gmra.mrb[0].mxu0 %v2222
        %v2534 = vpop.f32.mrb[0].mxu0
        %v2535 = vadd.f32 %v2263, %v2534
        %v2536 = vpop.f32.mrb[0].mxu0
        %v2537 = vadd.f32 %v2267, %v2536
        %v2538 = vpop.f32.mrb[0].mxu0
        %v2539 = vadd.f32 %v2263, %v2538
        %v2540 = vpop.f32.mrb[0].mxu0
        %v2541 = vadd.f32 %v2267, %v2540
        %2542 = vdwg.mxu0
        %v2543 = vmax.f32 %v2465, 0.0
        %v2544 = vmax.f32 %v2467, 0.0
        %v2545 = vmax.f32 %v2469, 0.0
        %v2546 = vmax.f32 %v2471, 0.0
        %v2547 = vmax.f32 %v2475, 0.0
        %v2548 = vmax.f32 %v2477, 0.0
        %v2549 = vmax.f32 %v2479, 0.0
        %v2550 = vmax.f32 %v2481, 0.0
        %v2551 = vmax.f32 %v2485, 0.0
        %v2552 = vmax.f32 %v2487, 0.0
        %v2553 = vmax.f32 %v2489, 0.0
        %v2554 = vmax.f32 %v2491, 0.0
        %v2555 = vmax.f32 %v2495, 0.0
        %v2556 = vmax.f32 %v2497, 0.0
        %v2557 = vmax.f32 %v2499, 0.0
        %v2558 = vmax.f32 %v2501, 0.0
        %v2559 = vmax.f32 %v2505, 0.0
        %v2560 = vmax.f32 %v2507, 0.0
        %v2561 = vmax.f32 %v2509, 0.0
        %v2562 = vmax.f32 %v2511, 0.0
        %v2563 = vmax.f32 %v2515, 0.0
        %v2564 = vmax.f32 %v2517, 0.0
        %v2565 = vmax.f32 %v2519, 0.0
        %v2566 = vmax.f32 %v2521, 0.0
        %v2567 = vmax.f32 %v2525, 0.0
        %v2568 = vmax.f32 %v2527, 0.0
        %v2569 = vmax.f32 %v2529, 0.0
        %v2570 = vmax.f32 %v2531, 0.0
        %v2571 = vmax.f32 %v2535, 0.0
        %v2572 = vmax.f32 %v2537, 0.0
        %v2573 = vmax.f32 %v2539, 0.0
        %v2574 = vmax.f32 %v2541, 0.0
        %v2575 = vpack.c.bf16 %v2545, %v2543
        %v2576 = vpack.c.bf16 %v2546, %v2544
        %v2577 = vpack.c.bf16 %v2549, %v2547
        %v2578 = vpack.c.bf16 %v2550, %v2548
        %v2579 = vpack.c.bf16 %v2553, %v2551
        %v2580 = vpack.c.bf16 %v2554, %v2552
        %v2581 = vpack.c.bf16 %v2557, %v2555
        %v2582 = vpack.c.bf16 %v2558, %v2556
        %v2583 = vpack.c.bf16 %v2561, %v2559
        %v2584 = vpack.c.bf16 %v2562, %v2560
        %v2585 = vpack.c.bf16 %v2565, %v2563
        %v2586 = vpack.c.bf16 %v2566, %v2564
        %v2587 = vpack.c.bf16 %v2569, %v2567
        %v2588 = vpack.c.bf16 %v2570, %v2568
        %v2589 = vpack.c.bf16 %v2573, %v2571
        %v2590 = vpack.c.bf16 %v2574, %v2572
        %s2591 = scalar_lea.vmem [#allocation8], 1280
        %v2592 = vld [vmem:[%s2591] sm:$0xff]
        %v2593 = vld [vmem:[%s2591 + $0x8] sm:$0xff]
        %v2594 = vld [vmem:[%s2591 + $0x10] sm:$0xff]
        %v2595 = vld [vmem:[%s2591 + $0x18] sm:$0xff]
        %v2596 = vld [vmem:[%s2591 + $0x20] sm:$0xff]
        %v2597 = vld [vmem:[%s2591 + $0x28] sm:$0xff]
        %v2598 = vld [vmem:[%s2591 + $0x30] sm:$0xff]
        %v2599 = vld [vmem:[%s2591 + $0x38] sm:$0xff]
        %v2600 = vld [vmem:[%s2591 + $0x40] sm:$0xff]
        %v2601 = vld [vmem:[%s2591 + $0x48] sm:$0xff]
        %v2602 = vld [vmem:[%s2591 + $0x50] sm:$0xff]
        %v2603 = vld [vmem:[%s2591 + $0x58] sm:$0xff]
        %v2604 = vld [vmem:[%s2591 + $0x60] sm:$0xff]
        %v2605 = vld [vmem:[%s2591 + $0x68] sm:$0xff]
        %v2606 = vld [vmem:[%s2591 + $0x70] sm:$0xff]
        %v2607 = vld [vmem:[%s2591 + $0x78] sm:$0xff]
        %v2608 = vld [vmem:[%s2591 + $0x80] sm:$0xff]
        %v2609 = vld [vmem:[%s2591 + $0x88] sm:$0xff]
        %v2610 = vld [vmem:[%s2591 + $0x90] sm:$0xff]
        %v2611 = vld [vmem:[%s2591 + $0x98] sm:$0xff]
        %v2612 = vld [vmem:[%s2591 + $0xa0] sm:$0xff]
        %v2613 = vld [vmem:[%s2591 + $0xa8] sm:$0xff]
        %v2614 = vld [vmem:[%s2591 + $0xb0] sm:$0xff]
        %v2615 = vld [vmem:[%s2591 + $0xb8] sm:$0xff]
        %v2616 = vld [vmem:[%s2591 + $0xc0] sm:$0xff]
        %v2617 = vld [vmem:[%s2591 + $0xc8] sm:$0xff]
        %v2618 = vld [vmem:[%s2591 + $0xd0] sm:$0xff]
        %v2619 = vld [vmem:[%s2591 + $0xd8] sm:$0xff]
        %v2620 = vld [vmem:[%s2591 + $0xe0] sm:$0xff]
        %v2621 = vld [vmem:[%s2591 + $0xe8] sm:$0xff]
        %v2622 = vld [vmem:[%s2591 + $0xf0] sm:$0xff]
        %v2623 = vld [vmem:[%s2591 + $0xf8] sm:$0xff]
        %s2624 = scalar_lea.vmem %s4, 10
        %v2625 = vld [vmem:[%s2624] sm:$0x3]
        %v2627 = vlaneseq
        %v2628 = vshrl.u32 %v2627, 7
        %v2629 = vsub.s32 0, %v2628
        %v2630 = vrot.slane %v2625, %v2629
        %v2631 = vlaneseq
        %v2632 = vshrl.u32 %v2631, 7
        %v2633 = vsub.s32 1, %v2632
        %v2634 = vrot.slane %v2625, %v2633
        %v2669 = vunpack.c.l.b16 %v2592
        %v2670 = vunpack.c.h.b16 %v2592
        %v2671 = vunpack.c.l.b16 %v2593
        %v2672 = vunpack.c.h.b16 %v2593
        %v2673 = vunpack.c.l.b16 %v2594
        %v2674 = vunpack.c.h.b16 %v2594
        %v2675 = vunpack.c.l.b16 %v2595
        %v2676 = vunpack.c.h.b16 %v2595
        %v2677 = vunpack.c.l.b16 %v2596
        %v2678 = vunpack.c.h.b16 %v2596
        %v2679 = vunpack.c.l.b16 %v2597
        %v2680 = vunpack.c.h.b16 %v2597
        %v2681 = vunpack.c.l.b16 %v2598
        %v2682 = vunpack.c.h.b16 %v2598
        %v2683 = vunpack.c.l.b16 %v2599
        %v2684 = vunpack.c.h.b16 %v2599
        %v2685 = vunpack.c.l.b16 %v2600
        %v2686 = vunpack.c.h.b16 %v2600
        %v2687 = vunpack.c.l.b16 %v2601
        %v2688 = vunpack.c.h.b16 %v2601
        %v2689 = vunpack.c.l.b16 %v2602
        %v2690 = vunpack.c.h.b16 %v2602
        %v2691 = vunpack.c.l.b16 %v2603
        %v2692 = vunpack.c.h.b16 %v2603
        %v2693 = vunpack.c.l.b16 %v2604
        %v2694 = vunpack.c.h.b16 %v2604
        %v2695 = vunpack.c.l.b16 %v2605
        %v2696 = vunpack.c.h.b16 %v2605
        %v2697 = vunpack.c.l.b16 %v2606
        %v2698 = vunpack.c.h.b16 %v2606
        %v2699 = vunpack.c.l.b16 %v2607
        %v2700 = vunpack.c.h.b16 %v2607
        %v2701 = vunpack.c.l.b16 %v2608
        %v2702 = vunpack.c.h.b16 %v2608
        %v2703 = vunpack.c.l.b16 %v2609
        %v2704 = vunpack.c.h.b16 %v2609
        %v2705 = vunpack.c.l.b16 %v2610
        %v2706 = vunpack.c.h.b16 %v2610
        %v2707 = vunpack.c.l.b16 %v2611
        %v2708 = vunpack.c.h.b16 %v2611
        %v2709 = vunpack.c.l.b16 %v2612
        %v2710 = vunpack.c.h.b16 %v2612
        %v2711 = vunpack.c.l.b16 %v2613
        %v2712 = vunpack.c.h.b16 %v2613
        %v2713 = vunpack.c.l.b16 %v2614
        %v2714 = vunpack.c.h.b16 %v2614
        %v2715 = vunpack.c.l.b16 %v2615
        %v2716 = vunpack.c.h.b16 %v2615
        %v2717 = vunpack.c.l.b16 %v2616
        %v2718 = vunpack.c.h.b16 %v2616
        %v2719 = vunpack.c.l.b16 %v2617
        %v2720 = vunpack.c.h.b16 %v2617
        %v2721 = vunpack.c.l.b16 %v2618
        %v2722 = vunpack.c.h.b16 %v2618
        %v2723 = vunpack.c.l.b16 %v2619
        %v2724 = vunpack.c.h.b16 %v2619
        %v2725 = vunpack.c.l.b16 %v2620
        %v2726 = vunpack.c.h.b16 %v2620
        %v2727 = vunpack.c.l.b16 %v2621
        %v2728 = vunpack.c.h.b16 %v2621
        %v2729 = vunpack.c.l.b16 %v2622
        %v2730 = vunpack.c.h.b16 %v2622
        %v2731 = vunpack.c.l.b16 %v2623
        %v2732 = vunpack.c.h.b16 %v2623
        %v2733 = vpack.c.b16 %v2671, %v2669
        %v2734 = vpack.c.b16 %v2672, %v2670
        %v2735 = vpack.c.b16 %v2675, %v2673
        %v2736 = vpack.c.b16 %v2676, %v2674
        %v2737 = vpack.c.b16 %v2679, %v2677
        %v2738 = vpack.c.b16 %v2680, %v2678
        %v2739 = vpack.c.b16 %v2683, %v2681
        %v2740 = vpack.c.b16 %v2684, %v2682
        %v2741 = vpack.c.b16 %v2687, %v2685
        %v2742 = vpack.c.b16 %v2688, %v2686
        %v2743 = vpack.c.b16 %v2691, %v2689
        %v2744 = vpack.c.b16 %v2692, %v2690
        %v2745 = vpack.c.b16 %v2695, %v2693
        %v2746 = vpack.c.b16 %v2696, %v2694
        %v2747 = vpack.c.b16 %v2699, %v2697
        %v2748 = vpack.c.b16 %v2700, %v2698
        %v2749 = vpack.c.b16 %v2703, %v2701
        %v2750 = vpack.c.b16 %v2704, %v2702
        %v2751 = vpack.c.b16 %v2707, %v2705
        %v2752 = vpack.c.b16 %v2708, %v2706
        %v2753 = vpack.c.b16 %v2711, %v2709
        %v2754 = vpack.c.b16 %v2712, %v2710
        %v2755 = vpack.c.b16 %v2715, %v2713
        %v2756 = vpack.c.b16 %v2716, %v2714
        %v2757 = vpack.c.b16 %v2719, %v2717
        %v2758 = vpack.c.b16 %v2720, %v2718
        %v2759 = vpack.c.b16 %v2723, %v2721
        %v2760 = vpack.c.b16 %v2724, %v2722
        %v2761 = vpack.c.b16 %v2727, %v2725
        %v2762 = vpack.c.b16 %v2728, %v2726
        %v2763 = vpack.c.b16 %v2731, %v2729
        %v2764 = vpack.c.b16 %v2732, %v2730
        %2797 = vmatprep.subr.bf16.mxu0 %v2734
        %2798 = vmatpush1.bf16.msra.mxu0 %v2733
        %2799 = vmatprep.subr.bf16.mxu0 %v2736
        %2800 = vmatpush1.bf16.msra.mxu0 %v2735
        %2801 = vmatprep.subr.bf16.mxu0 %v2738
        %2802 = vmatpush1.bf16.msra.mxu0 %v2737
        %2803 = vmatprep.subr.bf16.mxu0 %v2740
        %2804 = vmatpush1.bf16.msra.mxu0 %v2739
        %2805 = vmatprep.subr.bf16.mxu0 %v2742
        %2806 = vmatpush1.bf16.msra.mxu0 %v2741
        %2807 = vmatprep.subr.bf16.mxu0 %v2744
        %2808 = vmatpush1.bf16.msra.mxu0 %v2743
        %2809 = vmatprep.subr.bf16.mxu0 %v2746
        %2810 = vmatpush1.bf16.msra.mxu0 %v2745
        %2811 = vmatprep.subr.bf16.mxu0 %v2748
        %2812 = vmatpush1.bf16.msra.mxu0 %v2747
        %2813 = vmatprep.subr.bf16.mxu0 %v2750
        %2814 = vmatpush1.bf16.msra.mxu0 %v2749
        %2815 = vmatprep.subr.bf16.mxu0 %v2752
        %2816 = vmatpush1.bf16.msra.mxu0 %v2751
        %2817 = vmatprep.subr.bf16.mxu0 %v2754
        %2818 = vmatpush1.bf16.msra.mxu0 %v2753
        %2819 = vmatprep.subr.bf16.mxu0 %v2756
        %2820 = vmatpush1.bf16.msra.mxu0 %v2755
        %2821 = vmatprep.subr.bf16.mxu0 %v2758
        %2822 = vmatpush1.bf16.msra.mxu0 %v2757
        %2823 = vmatprep.subr.bf16.mxu0 %v2760
        %2824 = vmatpush1.bf16.msra.mxu0 %v2759
        %2825 = vmatprep.subr.bf16.mxu0 %v2762
        %2826 = vmatpush1.bf16.msra.mxu0 %v2761
        %2827 = vmatprep.subr.bf16.mxu0 %v2764
        %2828 = vmatpush1.bf16.msra.mxu0 %v2763
        %2829 = vmatprep.mubr.bf16.mxu0 %v2576
        %2830 = vmatmul.mubr.bf16.gmra.mrb[0].mxu0 %v2575
        %v2831 = vpop.f32.mrb[0].mxu0
        %v2832 = vadd.f32 %v2630, %v2831
        %v2833 = vpop.f32.mrb[0].mxu0
        %v2834 = vadd.f32 %v2634, %v2833
        %v2835 = vpop.f32.mrb[0].mxu0
        %v2836 = vadd.f32 %v2630, %v2835
        %v2837 = vpop.f32.mrb[0].mxu0
        %v2838 = vadd.f32 %v2634, %v2837
        %2839 = vmatprep.mubr.bf16.mxu0 %v2578
        %2840 = vmatmul.mubr.bf16.gmra.mrb[0].mxu0 %v2577
        %v2841 = vpop.f32.mrb[0].mxu0
        %v2842 = vadd.f32 %v2630, %v2841
        %v2843 = vpop.f32.mrb[0].mxu0
        %v2844 = vadd.f32 %v2634, %v2843
        %v2845 = vpop.f32.mrb[0].mxu0
        %v2846 = vadd.f32 %v2630, %v2845
        %v2847 = vpop.f32.mrb[0].mxu0
        %v2848 = vadd.f32 %v2634, %v2847
        %2849 = vmatprep.mubr.bf16.mxu0 %v2580
        %2850 = vmatmul.mubr.bf16.gmra.mrb[0].mxu0 %v2579
        %v2851 = vpop.f32.mrb[0].mxu0
        %v2852 = vadd.f32 %v2630, %v2851
        %v2853 = vpop.f32.mrb[0].mxu0
        %v2854 = vadd.f32 %v2634, %v2853
        %v2855 = vpop.f32.mrb[0].mxu0
        %v2856 = vadd.f32 %v2630, %v2855
        %v2857 = vpop.f32.mrb[0].mxu0
        %v2858 = vadd.f32 %v2634, %v2857
        %2859 = vmatprep.mubr.bf16.mxu0 %v2582
        %2860 = vmatmul.mubr.bf16.gmra.mrb[0].mxu0 %v2581
        %v2861 = vpop.f32.mrb[0].mxu0
        %v2862 = vadd.f32 %v2630, %v2861
        %v2863 = vpop.f32.mrb[0].mxu0
        %v2864 = vadd.f32 %v2634, %v2863
        %v2865 = vpop.f32.mrb[0].mxu0
        %v2866 = vadd.f32 %v2630, %v2865
        %v2867 = vpop.f32.mrb[0].mxu0
        %v2868 = vadd.f32 %v2634, %v2867
        %2869 = vmatprep.mubr.bf16.mxu0 %v2584
        %2870 = vmatmul.mubr.bf16.gmra.mrb[0].mxu0 %v2583
        %v2871 = vpop.f32.mrb[0].mxu0
        %v2872 = vadd.f32 %v2630, %v2871
        %v2873 = vpop.f32.mrb[0].mxu0
        %v2874 = vadd.f32 %v2634, %v2873
        %v2875 = vpop.f32.mrb[0].mxu0
        %v2876 = vadd.f32 %v2630, %v2875
        %v2877 = vpop.f32.mrb[0].mxu0
        %v2878 = vadd.f32 %v2634, %v2877
        %2879 = vmatprep.mubr.bf16.mxu0 %v2586
        %2880 = vmatmul.mubr.bf16.gmra.mrb[0].mxu0 %v2585
        %v2881 = vpop.f32.mrb[0].mxu0
        %v2882 = vadd.f32 %v2630, %v2881
        %v2883 = vpop.f32.mrb[0].mxu0
        %v2884 = vadd.f32 %v2634, %v2883
        %v2885 = vpop.f32.mrb[0].mxu0
        %v2886 = vadd.f32 %v2630, %v2885
        %v2887 = vpop.f32.mrb[0].mxu0
        %v2888 = vadd.f32 %v2634, %v2887
        %2889 = vmatprep.mubr.bf16.mxu0 %v2588
        %2890 = vmatmul.mubr.bf16.gmra.mrb[0].mxu0 %v2587
        %v2891 = vpop.f32.mrb[0].mxu0
        %v2892 = vadd.f32 %v2630, %v2891
        %v2893 = vpop.f32.mrb[0].mxu0
        %v2894 = vadd.f32 %v2634, %v2893
        %v2895 = vpop.f32.mrb[0].mxu0
        %v2896 = vadd.f32 %v2630, %v2895
        %v2897 = vpop.f32.mrb[0].mxu0
        %v2898 = vadd.f32 %v2634, %v2897
        %2899 = vmatprep.mubr.bf16.mxu0 %v2590
        %2900 = vmatmul.mubr.bf16.gmra.mrb[0].mxu0 %v2589
        %v2901 = vpop.f32.mrb[0].mxu0
        %v2902 = vadd.f32 %v2630, %v2901
        %v2903 = vpop.f32.mrb[0].mxu0
        %v2904 = vadd.f32 %v2634, %v2903
        %v2905 = vpop.f32.mrb[0].mxu0
        %v2906 = vadd.f32 %v2630, %v2905
        %v2907 = vpop.f32.mrb[0].mxu0
        %v2908 = vadd.f32 %v2634, %v2907
        %2909 = vdwg.mxu0
        %v2910 = vmax.f32 %v2832, 0.0
        %v2911 = vmax.f32 %v2834, 0.0
        %v2912 = vmax.f32 %v2836, 0.0
        %v2913 = vmax.f32 %v2838, 0.0
        %v2914 = vmax.f32 %v2842, 0.0
        %v2915 = vmax.f32 %v2844, 0.0
        %v2916 = vmax.f32 %v2846, 0.0
        %v2917 = vmax.f32 %v2848, 0.0
        %v2918 = vmax.f32 %v2852, 0.0
        %v2919 = vmax.f32 %v2854, 0.0
        %v2920 = vmax.f32 %v2856, 0.0
        %v2921 = vmax.f32 %v2858, 0.0
        %v2922 = vmax.f32 %v2862, 0.0
        %v2923 = vmax.f32 %v2864, 0.0
        %v2924 = vmax.f32 %v2866, 0.0
        %v2925 = vmax.f32 %v2868, 0.0
        %v2926 = vmax.f32 %v2872, 0.0
        %v2927 = vmax.f32 %v2874, 0.0
        %v2928 = vmax.f32 %v2876, 0.0
        %v2929 = vmax.f32 %v2878, 0.0
        %v2930 = vmax.f32 %v2882, 0.0
        %v2931 = vmax.f32 %v2884, 0.0
        %v2932 = vmax.f32 %v2886, 0.0
        %v2933 = vmax.f32 %v2888, 0.0
        %v2934 = vmax.f32 %v2892, 0.0
        %v2935 = vmax.f32 %v2894, 0.0
        %v2936 = vmax.f32 %v2896, 0.0
        %v2937 = vmax.f32 %v2898, 0.0
        %v2938 = vmax.f32 %v2902, 0.0
        %v2939 = vmax.f32 %v2904, 0.0
        %v2940 = vmax.f32 %v2906, 0.0
        %v2941 = vmax.f32 %v2908, 0.0
        %v2942 = vpack.c.bf16 %v2912, %v2910
        %v2943 = vpack.c.bf16 %v2913, %v2911
        %v2944 = vpack.c.bf16 %v2916, %v2914
        %v2945 = vpack.c.bf16 %v2917, %v2915
        %v2946 = vpack.c.bf16 %v2920, %v2918
        %v2947 = vpack.c.bf16 %v2921, %v2919
        %v2948 = vpack.c.bf16 %v2924, %v2922
        %v2949 = vpack.c.bf16 %v2925, %v2923
        %v2950 = vpack.c.bf16 %v2928, %v2926
        %v2951 = vpack.c.bf16 %v2929, %v2927
        %v2952 = vpack.c.bf16 %v2932, %v2930
        %v2953 = vpack.c.bf16 %v2933, %v2931
        %v2954 = vpack.c.bf16 %v2936, %v2934
        %v2955 = vpack.c.bf16 %v2937, %v2935
        %v2956 = vpack.c.bf16 %v2940, %v2938
        %v2957 = vpack.c.bf16 %v2941, %v2939
        %s2958 = scalar_lea.vmem [#allocation8], 1536
        %v2959 = vld [vmem:[%s2958] sm:$0xff]
        %v2960 = vld [vmem:[%s2958 + $0x8] sm:$0xff]
        %v2961 = vld [vmem:[%s2958 + $0x10] sm:$0xff]
        %v2962 = vld [vmem:[%s2958 + $0x18] sm:$0xff]
        %v2963 = vld [vmem:[%s2958 + $0x20] sm:$0xff]
        %v2964 = vld [vmem:[%s2958 + $0x28] sm:$0xff]
        %v2965 = vld [vmem:[%s2958 + $0x30] sm:$0xff]
        %v2966 = vld [vmem:[%s2958 + $0x38] sm:$0xff]
        %v2967 = vld [vmem:[%s2958 + $0x40] sm:$0xff]
        %v2968 = vld [vmem:[%s2958 + $0x48] sm:$0xff]
        %v2969 = vld [vmem:[%s2958 + $0x50] sm:$0xff]
        %v2970 = vld [vmem:[%s2958 + $0x58] sm:$0xff]
        %v2971 = vld [vmem:[%s2958 + $0x60] sm:$0xff]
        %v2972 = vld [vmem:[%s2958 + $0x68] sm:$0xff]
        %v2973 = vld [vmem:[%s2958 + $0x70] sm:$0xff]
        %v2974 = vld [vmem:[%s2958 + $0x78] sm:$0xff]
        %v2975 = vld [vmem:[%s2958 + $0x80] sm:$0xff]
        %v2976 = vld [vmem:[%s2958 + $0x88] sm:$0xff]
        %v2977 = vld [vmem:[%s2958 + $0x90] sm:$0xff]
        %v2978 = vld [vmem:[%s2958 + $0x98] sm:$0xff]
        %v2979 = vld [vmem:[%s2958 + $0xa0] sm:$0xff]
        %v2980 = vld [vmem:[%s2958 + $0xa8] sm:$0xff]
        %v2981 = vld [vmem:[%s2958 + $0xb0] sm:$0xff]
        %v2982 = vld [vmem:[%s2958 + $0xb8] sm:$0xff]
        %v2983 = vld [vmem:[%s2958 + $0xc0] sm:$0xff]
        %v2984 = vld [vmem:[%s2958 + $0xc8] sm:$0xff]
        %v2985 = vld [vmem:[%s2958 + $0xd0] sm:$0xff]
        %v2986 = vld [vmem:[%s2958 + $0xd8] sm:$0xff]
        %v2987 = vld [vmem:[%s2958 + $0xe0] sm:$0xff]
        %v2988 = vld [vmem:[%s2958 + $0xe8] sm:$0xff]
        %v2989 = vld [vmem:[%s2958 + $0xf0] sm:$0xff]
        %v2990 = vld [vmem:[%s2958 + $0xf8] sm:$0xff]
        %s2991 = scalar_lea.vmem %s4, 12
        %v2992 = vld [vmem:[%s2991] sm:$0x3]
        %v2994 = vlaneseq
        %v2995 = vshrl.u32 %v2994, 7
        %v2996 = vsub.s32 0, %v2995
        %v2997 = vrot.slane %v2992, %v2996
        %v2998 = vlaneseq
        %v2999 = vshrl.u32 %v2998, 7
        %v3000 = vsub.s32 1, %v2999
        %v3001 = vrot.slane %v2992, %v3000
        %v3036 = vunpack.c.l.b16 %v2959
        %v3037 = vunpack.c.h.b16 %v2959
        %v3038 = vunpack.c.l.b16 %v2960
        %v3039 = vunpack.c.h.b16 %v2960
        %v3040 = vunpack.c.l.b16 %v2961
        %v3041 = vunpack.c.h.b16 %v2961
        %v3042 = vunpack.c.l.b16 %v2962
        %v3043 = vunpack.c.h.b16 %v2962
        %v3044 = vunpack.c.l.b16 %v2963
        %v3045 = vunpack.c.h.b16 %v2963
        %v3046 = vunpack.c.l.b16 %v2964
        %v3047 = vunpack.c.h.b16 %v2964
        %v3048 = vunpack.c.l.b16 %v2965
        %v3049 = vunpack.c.h.b16 %v2965
        %v3050 = vunpack.c.l.b16 %v2966
        %v3051 = vunpack.c.h.b16 %v2966
        %v3052 = vunpack.c.l.b16 %v2967
        %v3053 = vunpack.c.h.b16 %v2967
        %v3054 = vunpack.c.l.b16 %v2968
        %v3055 = vunpack.c.h.b16 %v2968
        %v3056 = vunpack.c.l.b16 %v2969
        %v3057 = vunpack.c.h.b16 %v2969
        %v3058 = vunpack.c.l.b16 %v2970
        %v3059 = vunpack.c.h.b16 %v2970
        %v3060 = vunpack.c.l.b16 %v2971
        %v3061 = vunpack.c.h.b16 %v2971
        %v3062 = vunpack.c.l.b16 %v2972
        %v3063 = vunpack.c.h.b16 %v2972
        %v3064 = vunpack.c.l.b16 %v2973
        %v3065 = vunpack.c.h.b16 %v2973
        %v3066 = vunpack.c.l.b16 %v2974
        %v3067 = vunpack.c.h.b16 %v2974
        %v3068 = vunpack.c.l.b16 %v2975
        %v3069 = vunpack.c.h.b16 %v2975
        %v3070 = vunpack.c.l.b16 %v2976
        %v3071 = vunpack.c.h.b16 %v2976
        %v3072 = vunpack.c.l.b16 %v2977
        %v3073 = vunpack.c.h.b16 %v2977
        %v3074 = vunpack.c.l.b16 %v2978
        %v3075 = vunpack.c.h.b16 %v2978
        %v3076 = vunpack.c.l.b16 %v2979
        %v3077 = vunpack.c.h.b16 %v2979
        %v3078 = vunpack.c.l.b16 %v2980
        %v3079 = vunpack.c.h.b16 %v2980
        %v3080 = vunpack.c.l.b16 %v2981
        %v3081 = vunpack.c.h.b16 %v2981
        %v3082 = vunpack.c.l.b16 %v2982
        %v3083 = vunpack.c.h.b16 %v2982
        %v3084 = vunpack.c.l.b16 %v2983
        %v3085 = vunpack.c.h.b16 %v2983
        %v3086 = vunpack.c.l.b16 %v2984
        %v3087 = vunpack.c.h.b16 %v2984
        %v3088 = vunpack.c.l.b16 %v2985
        %v3089 = vunpack.c.h.b16 %v2985
        %v3090 = vunpack.c.l.b16 %v2986
        %v3091 = vunpack.c.h.b16 %v2986
        %v3092 = vunpack.c.l.b16 %v2987
        %v3093 = vunpack.c.h.b16 %v2987
        %v3094 = vunpack.c.l.b16 %v2988
        %v3095 = vunpack.c.h.b16 %v2988
        %v3096 = vunpack.c.l.b16 %v2989
        %v3097 = vunpack.c.h.b16 %v2989
        %v3098 = vunpack.c.l.b16 %v2990
        %v3099 = vunpack.c.h.b16 %v2990
        %v3100 = vpack.c.b16 %v3038, %v3036
        %v3101 = vpack.c.b16 %v3039, %v3037
        %v3102 = vpack.c.b16 %v3042, %v3040
        %v3103 = vpack.c.b16 %v3043, %v3041
        %v3104 = vpack.c.b16 %v3046, %v3044
        %v3105 = vpack.c.b16 %v3047, %v3045
        %v3106 = vpack.c.b16 %v3050, %v3048
        %v3107 = vpack.c.b16 %v3051, %v3049
        %v3108 = vpack.c.b16 %v3054, %v3052
        %v3109 = vpack.c.b16 %v3055, %v3053
        %v3110 = vpack.c.b16 %v3058, %v3056
        %v3111 = vpack.c.b16 %v3059, %v3057
        %v3112 = vpack.c.b16 %v3062, %v3060
        %v3113 = vpack.c.b16 %v3063, %v3061
        %v3114 = vpack.c.b16 %v3066, %v3064
        %v3115 = vpack.c.b16 %v3067, %v3065
        %v3116 = vpack.c.b16 %v3070, %v3068
        %v3117 = vpack.c.b16 %v3071, %v3069
        %v3118 = vpack.c.b16 %v3074, %v3072
        %v3119 = vpack.c.b16 %v3075, %v3073
        %v3120 = vpack.c.b16 %v3078, %v3076
        %v3121 = vpack.c.b16 %v3079, %v3077
        %v3122 = vpack.c.b16 %v3082, %v3080
        %v3123 = vpack.c.b16 %v3083, %v3081
        %v3124 = vpack.c.b16 %v3086, %v3084
        %v3125 = vpack.c.b16 %v3087, %v3085
        %v3126 = vpack.c.b16 %v3090, %v3088
        %v3127 = vpack.c.b16 %v3091, %v3089
        %v3128 = vpack.c.b16 %v3094, %v3092
        %v3129 = vpack.c.b16 %v3095, %v3093
        %v3130 = vpack.c.b16 %v3098, %v3096
        %v3131 = vpack.c.b16 %v3099, %v3097
        %3164 = vmatprep.subr.bf16.mxu0 %v3101
        %3165 = vmatpush1.bf16.msra.mxu0 %v3100
        %3166 = vmatprep.subr.bf16.mxu0 %v3103
        %3167 = vmatpush1.bf16.msra.mxu0 %v3102
        %3168 = vmatprep.subr.bf16.mxu0 %v3105
        %3169 = vmatpush1.bf16.msra.mxu0 %v3104
        %3170 = vmatprep.subr.bf16.mxu0 %v3107
        %3171 = vmatpush1.bf16.msra.mxu0 %v3106
        %3172 = vmatprep.subr.bf16.mxu0 %v3109
        %3173 = vmatpush1.bf16.msra.mxu0 %v3108
        %3174 = vmatprep.subr.bf16.mxu0 %v3111
        %3175 = vmatpush1.bf16.msra.mxu0 %v3110
        %3176 = vmatprep.subr.bf16.mxu0 %v3113
        %3177 = vmatpush1.bf16.msra.mxu0 %v3112
        %3178 = vmatprep.subr.bf16.mxu0 %v3115
        %3179 = vmatpush1.bf16.msra.mxu0 %v3114
        %3180 = vmatprep.subr.bf16.mxu0 %v3117
        %3181 = vmatpush1.bf16.msra.mxu0 %v3116
        %3182 = vmatprep.subr.bf16.mxu0 %v3119
        %3183 = vmatpush1.bf16.msra.mxu0 %v3118
        %3184 = vmatprep.subr.bf16.mxu0 %v3121
        %3185 = vmatpush1.bf16.msra.mxu0 %v3120
        %3186 = vmatprep.subr.bf16.mxu0 %v3123
        %3187 = vmatpush1.bf16.msra.mxu0 %v3122
        %3188 = vmatprep.subr.bf16.mxu0 %v3125
        %3189 = vmatpush1.bf16.msra.mxu0 %v3124
        %3190 = vmatprep.subr.bf16.mxu0 %v3127
        %3191 = vmatpush1.bf16.msra.mxu0 %v3126
        %3192 = vmatprep.subr.bf16.mxu0 %v3129
        %3193 = vmatpush1.bf16.msra.mxu0 %v3128
        %3194 = vmatprep.subr.bf16.mxu0 %v3131
        %3195 = vmatpush1.bf16.msra.mxu0 %v3130
        %3196 = vmatprep.mubr.bf16.mxu0 %v2943
        %3197 = vmatmul.mubr.bf16.gmra.mrb[0].mxu0 %v2942
        %v3198 = vpop.f32.mrb[0].mxu0
        %v3199 = vadd.f32 %v2997, %v3198
        %v3200 = vpop.f32.mrb[0].mxu0
        %v3201 = vadd.f32 %v3001, %v3200
        %v3202 = vpop.f32.mrb[0].mxu0
        %v3203 = vadd.f32 %v2997, %v3202
        %v3204 = vpop.f32.mrb[0].mxu0
        %v3205 = vadd.f32 %v3001, %v3204
        %3206 = vmatprep.mubr.bf16.mxu0 %v2945
        %3207 = vmatmul.mubr.bf16.gmra.mrb[0].mxu0 %v2944
        %v3208 = vpop.f32.mrb[0].mxu0
        %v3209 = vadd.f32 %v2997, %v3208
        %v3210 = vpop.f32.mrb[0].mxu0
        %v3211 = vadd.f32 %v3001, %v3210
        %v3212 = vpop.f32.mrb[0].mxu0
        %v3213 = vadd.f32 %v2997, %v3212
        %v3214 = vpop.f32.mrb[0].mxu0
        %v3215 = vadd.f32 %v3001, %v3214
        %3216 = vmatprep.mubr.bf16.mxu0 %v2947
        %3217 = vmatmul.mubr.bf16.gmra.mrb[0].mxu0 %v2946
        %v3218 = vpop.f32.mrb[0].mxu0
        %v3219 = vadd.f32 %v2997, %v3218
        %v3220 = vpop.f32.mrb[0].mxu0
        %v3221 = vadd.f32 %v3001, %v3220
        %v3222 = vpop.f32.mrb[0].mxu0
        %v3223 = vadd.f32 %v2997, %v3222
        %v3224 = vpop.f32.mrb[0].mxu0
        %v3225 = vadd.f32 %v3001, %v3224
        %3226 = vmatprep.mubr.bf16.mxu0 %v2949
        %3227 = vmatmul.mubr.bf16.gmra.mrb[0].mxu0 %v2948
        %v3228 = vpop.f32.mrb[0].mxu0
        %v3229 = vadd.f32 %v2997, %v3228
        %v3230 = vpop.f32.mrb[0].mxu0
        %v3231 = vadd.f32 %v3001, %v3230
        %v3232 = vpop.f32.mrb[0].mxu0
        %v3233 = vadd.f32 %v2997, %v3232
        %v3234 = vpop.f32.mrb[0].mxu0
        %v3235 = vadd.f32 %v3001, %v3234
        %3236 = vmatprep.mubr.bf16.mxu0 %v2951
        %3237 = vmatmul.mubr.bf16.gmra.mrb[0].mxu0 %v2950
        %v3238 = vpop.f32.mrb[0].mxu0
        %v3239 = vadd.f32 %v2997, %v3238
        %v3240 = vpop.f32.mrb[0].mxu0
        %v3241 = vadd.f32 %v3001, %v3240
        %v3242 = vpop.f32.mrb[0].mxu0
        %v3243 = vadd.f32 %v2997, %v3242
        %v3244 = vpop.f32.mrb[0].mxu0
        %v3245 = vadd.f32 %v3001, %v3244
        %3246 = vmatprep.mubr.bf16.mxu0 %v2953
        %3247 = vmatmul.mubr.bf16.gmra.mrb[0].mxu0 %v2952
        %v3248 = vpop.f32.mrb[0].mxu0
        %v3249 = vadd.f32 %v2997, %v3248
        %v3250 = vpop.f32.mrb[0].mxu0
        %v3251 = vadd.f32 %v3001, %v3250
        %v3252 = vpop.f32.mrb[0].mxu0
        %v3253 = vadd.f32 %v2997, %v3252
        %v3254 = vpop.f32.mrb[0].mxu0
        %v3255 = vadd.f32 %v3001, %v3254
        %3256 = vmatprep.mubr.bf16.mxu0 %v2955
        %3257 = vmatmul.mubr.bf16.gmra.mrb[0].mxu0 %v2954
        %v3258 = vpop.f32.mrb[0].mxu0
        %v3259 = vadd.f32 %v2997, %v3258
        %v3260 = vpop.f32.mrb[0].mxu0
        %v3261 = vadd.f32 %v3001, %v3260
        %v3262 = vpop.f32.mrb[0].mxu0
        %v3263 = vadd.f32 %v2997, %v3262
        %v3264 = vpop.f32.mrb[0].mxu0
        %v3265 = vadd.f32 %v3001, %v3264
        %3266 = vmatprep.mubr.bf16.mxu0 %v2957
        %3267 = vmatmul.mubr.bf16.gmra.mrb[0].mxu0 %v2956
        %v3268 = vpop.f32.mrb[0].mxu0
        %v3269 = vadd.f32 %v2997, %v3268
        %v3270 = vpop.f32.mrb[0].mxu0
        %v3271 = vadd.f32 %v3001, %v3270
        %v3272 = vpop.f32.mrb[0].mxu0
        %v3273 = vadd.f32 %v2997, %v3272
        %v3274 = vpop.f32.mrb[0].mxu0
        %v3275 = vadd.f32 %v3001, %v3274
        %3276 = vdwg.mxu0
        %v3277 = vmax.f32 %v3199, 0.0
        %v3278 = vmax.f32 %v3201, 0.0
        %v3279 = vmax.f32 %v3203, 0.0
        %v3280 = vmax.f32 %v3205, 0.0
        %v3281 = vmax.f32 %v3209, 0.0
        %v3282 = vmax.f32 %v3211, 0.0
        %v3283 = vmax.f32 %v3213, 0.0
        %v3284 = vmax.f32 %v3215, 0.0
        %v3285 = vmax.f32 %v3219, 0.0
        %v3286 = vmax.f32 %v3221, 0.0
        %v3287 = vmax.f32 %v3223, 0.0
        %v3288 = vmax.f32 %v3225, 0.0
        %v3289 = vmax.f32 %v3229, 0.0
        %v3290 = vmax.f32 %v3231, 0.0
        %v3291 = vmax.f32 %v3233, 0.0
        %v3292 = vmax.f32 %v3235, 0.0
        %v3293 = vmax.f32 %v3239, 0.0
        %v3294 = vmax.f32 %v3241, 0.0
        %v3295 = vmax.f32 %v3243, 0.0
        %v3296 = vmax.f32 %v3245, 0.0
        %v3297 = vmax.f32 %v3249, 0.0
        %v3298 = vmax.f32 %v3251, 0.0
        %v3299 = vmax.f32 %v3253, 0.0
        %v3300 = vmax.f32 %v3255, 0.0
        %v3301 = vmax.f32 %v3259, 0.0
        %v3302 = vmax.f32 %v3261, 0.0
        %v3303 = vmax.f32 %v3263, 0.0
        %v3304 = vmax.f32 %v3265, 0.0
        %v3305 = vmax.f32 %v3269, 0.0
        %v3306 = vmax.f32 %v3271, 0.0
        %v3307 = vmax.f32 %v3273, 0.0
        %v3308 = vmax.f32 %v3275, 0.0
        %v3309 = vpack.c.bf16 %v3279, %v3277
        %v3310 = vpack.c.bf16 %v3280, %v3278
        %v3311 = vpack.c.bf16 %v3283, %v3281
        %v3312 = vpack.c.bf16 %v3284, %v3282
        %v3313 = vpack.c.bf16 %v3287, %v3285
        %v3314 = vpack.c.bf16 %v3288, %v3286
        %v3315 = vpack.c.bf16 %v3291, %v3289
        %v3316 = vpack.c.bf16 %v3292, %v3290
        %v3317 = vpack.c.bf16 %v3295, %v3293
        %v3318 = vpack.c.bf16 %v3296, %v3294
        %v3319 = vpack.c.bf16 %v3299, %v3297
        %v3320 = vpack.c.bf16 %v3300, %v3298
        %v3321 = vpack.c.bf16 %v3303, %v3301
        %v3322 = vpack.c.bf16 %v3304, %v3302
        %v3323 = vpack.c.bf16 %v3307, %v3305
        %v3324 = vpack.c.bf16 %v3308, %v3306
        %v3325 = vld [vmem:[#allocation10] sm:$0xff]
        %v3326 = vld [vmem:[#allocation10 + $0x8] sm:$0xff]
        %v3327 = vld [vmem:[#allocation10 + $0x10] sm:$0xff]
        %v3328 = vld [vmem:[#allocation10 + $0x18] sm:$0xff]
        %v3329 = vld [vmem:[#allocation10 + $0x20] sm:$0xff]
        %v3330 = vld [vmem:[#allocation10 + $0x28] sm:$0xff]
        %v3331 = vld [vmem:[#allocation10 + $0x30] sm:$0xff]
        %v3332 = vld [vmem:[#allocation10 + $0x38] sm:$0xff]
        %v3333 = vld [vmem:[#allocation10 + $0x40] sm:$0xff]
        %v3334 = vld [vmem:[#allocation10 + $0x48] sm:$0xff]
        %v3335 = vld [vmem:[#allocation10 + $0x50] sm:$0xff]
        %v3336 = vld [vmem:[#allocation10 + $0x58] sm:$0xff]
        %v3337 = vld [vmem:[#allocation10 + $0x60] sm:$0xff]
        %v3338 = vld [vmem:[#allocation10 + $0x68] sm:$0xff]
        %v3339 = vld [vmem:[#allocation10 + $0x70] sm:$0xff]
        %v3340 = vld [vmem:[#allocation10 + $0x78] sm:$0xff]
        %v3341 = vld [vmem:[#allocation10 + $0x80] sm:$0xff]
        %v3342 = vld [vmem:[#allocation10 + $0x88] sm:$0xff]
        %v3343 = vld [vmem:[#allocation10 + $0x90] sm:$0xff]
        %v3344 = vld [vmem:[#allocation10 + $0x98] sm:$0xff]
        %v3345 = vld [vmem:[#allocation10 + $0xa0] sm:$0xff]
        %v3346 = vld [vmem:[#allocation10 + $0xa8] sm:$0xff]
        %v3347 = vld [vmem:[#allocation10 + $0xb0] sm:$0xff]
        %v3348 = vld [vmem:[#allocation10 + $0xb8] sm:$0xff]
        %v3349 = vld [vmem:[#allocation10 + $0xc0] sm:$0xff]
        %v3350 = vld [vmem:[#allocation10 + $0xc8] sm:$0xff]
        %v3351 = vld [vmem:[#allocation10 + $0xd0] sm:$0xff]
        %v3352 = vld [vmem:[#allocation10 + $0xd8] sm:$0xff]
        %v3353 = vld [vmem:[#allocation10 + $0xe0] sm:$0xff]
        %v3354 = vld [vmem:[#allocation10 + $0xe8] sm:$0xff]
        %v3355 = vld [vmem:[#allocation10 + $0xf0] sm:$0xff]
        %v3356 = vld [vmem:[#allocation10 + $0xf8] sm:$0xff]
        %v3357 = vld [vmem:[#allocation10 + $0x100] sm:$0xff]
        %v3358 = vld [vmem:[#allocation10 + $0x108] sm:$0xff]
        %v3359 = vld [vmem:[#allocation10 + $0x110] sm:$0xff]
        %v3360 = vld [vmem:[#allocation10 + $0x118] sm:$0xff]
        %v3361 = vld [vmem:[#allocation10 + $0x120] sm:$0xff]
        %v3362 = vld [vmem:[#allocation10 + $0x128] sm:$0xff]
        %v3363 = vld [vmem:[#allocation10 + $0x130] sm:$0xff]
        %v3364 = vld [vmem:[#allocation10 + $0x138] sm:$0xff]
        %v3365 = vld [vmem:[#allocation10 + $0x140] sm:$0xff]
        %v3366 = vld [vmem:[#allocation10 + $0x148] sm:$0xff]
        %v3367 = vld [vmem:[#allocation10 + $0x150] sm:$0xff]
        %v3368 = vld [vmem:[#allocation10 + $0x158] sm:$0xff]
        %v3369 = vld [vmem:[#allocation10 + $0x160] sm:$0xff]
        %v3370 = vld [vmem:[#allocation10 + $0x168] sm:$0xff]
        %v3371 = vld [vmem:[#allocation10 + $0x170] sm:$0xff]
        %v3372 = vld [vmem:[#allocation10 + $0x178] sm:$0xff]
        %v3373 = vld [vmem:[#allocation10 + $0x180] sm:$0xff]
        %v3374 = vld [vmem:[#allocation10 + $0x188] sm:$0xff]
        %v3375 = vld [vmem:[#allocation10 + $0x190] sm:$0xff]
        %v3376 = vld [vmem:[#allocation10 + $0x198] sm:$0xff]
        %v3377 = vld [vmem:[#allocation10 + $0x1a0] sm:$0xff]
        %v3378 = vld [vmem:[#allocation10 + $0x1a8] sm:$0xff]
        %v3379 = vld [vmem:[#allocation10 + $0x1b0] sm:$0xff]
        %v3380 = vld [vmem:[#allocation10 + $0x1b8] sm:$0xff]
        %v3381 = vld [vmem:[#allocation10 + $0x1c0] sm:$0xff]
        %v3382 = vld [vmem:[#allocation10 + $0x1c8] sm:$0xff]
        %v3383 = vld [vmem:[#allocation10 + $0x1d0] sm:$0xff]
        %v3384 = vld [vmem:[#allocation10 + $0x1d8] sm:$0xff]
        %v3385 = vld [vmem:[#allocation10 + $0x1e0] sm:$0xff]
        %v3386 = vld [vmem:[#allocation10 + $0x1e8] sm:$0xff]
        %v3387 = vld [vmem:[#allocation10 + $0x1f0] sm:$0xff]
        %v3388 = vld [vmem:[#allocation10 + $0x1f8] sm:$0xff]
        %v3389 = vld [vmem:[#allocation10 + $0x200] sm:$0xff]
        %v3390 = vld [vmem:[#allocation10 + $0x208] sm:$0xff]
        %v3391 = vld [vmem:[#allocation10 + $0x210] sm:$0xff]
        %v3392 = vld [vmem:[#allocation10 + $0x218] sm:$0xff]
        %v3393 = vld [vmem:[#allocation10 + $0x220] sm:$0xff]
        %v3394 = vld [vmem:[#allocation10 + $0x228] sm:$0xff]
        %v3395 = vld [vmem:[#allocation10 + $0x230] sm:$0xff]
        %v3396 = vld [vmem:[#allocation10 + $0x238] sm:$0xff]
        %v3397 = vld [vmem:[#allocation10 + $0x240] sm:$0xff]
        %v3398 = vld [vmem:[#allocation10 + $0x248] sm:$0xff]
        %v3399 = vld [vmem:[#allocation10 + $0x250] sm:$0xff]
        %v3400 = vld [vmem:[#allocation10 + $0x258] sm:$0xff]
        %v3401 = vld [vmem:[#allocation10 + $0x260] sm:$0xff]
        %v3402 = vld [vmem:[#allocation10 + $0x268] sm:$0xff]
        %v3403 = vld [vmem:[#allocation10 + $0x270] sm:$0xff]
        %v3404 = vld [vmem:[#allocation10 + $0x278] sm:$0xff]
        %v3405 = vld [vmem:[#allocation10 + $0x280] sm:$0xff]
        %v3406 = vld [vmem:[#allocation10 + $0x288] sm:$0xff]
        %v3407 = vld [vmem:[#allocation10 + $0x290] sm:$0xff]
        %v3408 = vld [vmem:[#allocation10 + $0x298] sm:$0xff]
        %v3409 = vld [vmem:[#allocation10 + $0x2a0] sm:$0xff]
        %v3410 = vld [vmem:[#allocation10 + $0x2a8] sm:$0xff]
        %v3411 = vld [vmem:[#allocation10 + $0x2b0] sm:$0xff]
        %v3412 = vld [vmem:[#allocation10 + $0x2b8] sm:$0xff]
        %v3413 = vld [vmem:[#allocation10 + $0x2c0] sm:$0xff]
        %v3414 = vld [vmem:[#allocation10 + $0x2c8] sm:$0xff]
        %v3415 = vld [vmem:[#allocation10 + $0x2d0] sm:$0xff]
        %v3416 = vld [vmem:[#allocation10 + $0x2d8] sm:$0xff]
        %v3417 = vld [vmem:[#allocation10 + $0x2e0] sm:$0xff]
        %v3418 = vld [vmem:[#allocation10 + $0x2e8] sm:$0xff]
        %v3419 = vld [vmem:[#allocation10 + $0x2f0] sm:$0xff]
        %v3420 = vld [vmem:[#allocation10 + $0x2f8] sm:$0xff]
        %v3421 = vld [vmem:[%s6] sm:$0x3f]
        %v3423 = vlaneseq
        %v3424 = vshrl.u32 %v3423, 7
        %v3425 = vsub.s32 0, %v3424
        %v3426 = vrot.slane %v3421, %v3425
        %v3427 = vlaneseq
        %v3428 = vshrl.u32 %v3427, 7
        %v3429 = vsub.s32 1, %v3428
        %v3430 = vrot.slane %v3421, %v3429
        %v3431 = vlaneseq
        %v3432 = vshrl.u32 %v3431, 7
        %v3433 = vsub.s32 2, %v3432
        %v3434 = vrot.slane %v3421, %v3433
        %v3435 = vlaneseq
        %v3436 = vshrl.u32 %v3435, 7
        %v3437 = vsub.s32 3, %v3436
        %v3438 = vrot.slane %v3421, %v3437
        %v3439 = vlaneseq
        %v3440 = vshrl.u32 %v3439, 7
        %v3441 = vsub.s32 4, %v3440
        %v3442 = vrot.slane %v3421, %v3441
        %v3443 = vlaneseq
        %v3444 = vshrl.u32 %v3443, 7
        %v3445 = vsub.s32 5, %v3444
        %v3446 = vrot.slane %v3421, %v3445
        %v3549 = vunpack.c.l.b16 %v3325
        %v3550 = vunpack.c.h.b16 %v3325
        %v3551 = vunpack.c.l.b16 %v3326
        %v3552 = vunpack.c.h.b16 %v3326
        %v3553 = vunpack.c.l.b16 %v3327
        %v3554 = vunpack.c.h.b16 %v3327
        %v3555 = vunpack.c.l.b16 %v3328
        %v3556 = vunpack.c.h.b16 %v3328
        %v3557 = vunpack.c.l.b16 %v3329
        %v3558 = vunpack.c.h.b16 %v3329
        %v3559 = vunpack.c.l.b16 %v3330
        %v3560 = vunpack.c.h.b16 %v3330
        %v3561 = vunpack.c.l.b16 %v3331
        %v3562 = vunpack.c.h.b16 %v3331
        %v3563 = vunpack.c.l.b16 %v3332
        %v3564 = vunpack.c.h.b16 %v3332
        %v3565 = vunpack.c.l.b16 %v3333
        %v3566 = vunpack.c.h.b16 %v3333
        %v3567 = vunpack.c.l.b16 %v3334
        %v3568 = vunpack.c.h.b16 %v3334
        %v3569 = vunpack.c.l.b16 %v3335
        %v3570 = vunpack.c.h.b16 %v3335
        %v3571 = vunpack.c.l.b16 %v3336
        %v3572 = vunpack.c.h.b16 %v3336
        %v3573 = vunpack.c.l.b16 %v3337
        %v3574 = vunpack.c.h.b16 %v3337
        %v3575 = vunpack.c.l.b16 %v3338
        %v3576 = vunpack.c.h.b16 %v3338
        %v3577 = vunpack.c.l.b16 %v3339
        %v3578 = vunpack.c.h.b16 %v3339
        %v3579 = vunpack.c.l.b16 %v3340
        %v3580 = vunpack.c.h.b16 %v3340
        %v3581 = vunpack.c.l.b16 %v3341
        %v3582 = vunpack.c.h.b16 %v3341
        %v3583 = vunpack.c.l.b16 %v3342
        %v3584 = vunpack.c.h.b16 %v3342
        %v3585 = vunpack.c.l.b16 %v3343
        %v3586 = vunpack.c.h.b16 %v3343
        %v3587 = vunpack.c.l.b16 %v3344
        %v3588 = vunpack.c.h.b16 %v3344
        %v3589 = vunpack.c.l.b16 %v3345
        %v3590 = vunpack.c.h.b16 %v3345
        %v3591 = vunpack.c.l.b16 %v3346
        %v3592 = vunpack.c.h.b16 %v3346
        %v3593 = vunpack.c.l.b16 %v3347
        %v3594 = vunpack.c.h.b16 %v3347
        %v3595 = vunpack.c.l.b16 %v3348
        %v3596 = vunpack.c.h.b16 %v3348
        %v3597 = vunpack.c.l.b16 %v3349
        %v3598 = vunpack.c.h.b16 %v3349
        %v3599 = vunpack.c.l.b16 %v3350
        %v3600 = vunpack.c.h.b16 %v3350
        %v3601 = vunpack.c.l.b16 %v3351
        %v3602 = vunpack.c.h.b16 %v3351
        %v3603 = vunpack.c.l.b16 %v3352
        %v3604 = vunpack.c.h.b16 %v3352
        %v3605 = vunpack.c.l.b16 %v3353
        %v3606 = vunpack.c.h.b16 %v3353
        %v3607 = vunpack.c.l.b16 %v3354
        %v3608 = vunpack.c.h.b16 %v3354
        %v3609 = vunpack.c.l.b16 %v3355
        %v3610 = vunpack.c.h.b16 %v3355
        %v3611 = vunpack.c.l.b16 %v3356
        %v3612 = vunpack.c.h.b16 %v3356
        %v3613 = vunpack.c.l.b16 %v3357
        %v3614 = vunpack.c.h.b16 %v3357
        %v3615 = vunpack.c.l.b16 %v3358
        %v3616 = vunpack.c.h.b16 %v3358
        %v3617 = vunpack.c.l.b16 %v3359
        %v3618 = vunpack.c.h.b16 %v3359
        %v3619 = vunpack.c.l.b16 %v3360
        %v3620 = vunpack.c.h.b16 %v3360
        %v3621 = vunpack.c.l.b16 %v3361
        %v3622 = vunpack.c.h.b16 %v3361
        %v3623 = vunpack.c.l.b16 %v3362
        %v3624 = vunpack.c.h.b16 %v3362
        %v3625 = vunpack.c.l.b16 %v3363
        %v3626 = vunpack.c.h.b16 %v3363
        %v3627 = vunpack.c.l.b16 %v3364
        %v3628 = vunpack.c.h.b16 %v3364
        %v3629 = vunpack.c.l.b16 %v3365
        %v3630 = vunpack.c.h.b16 %v3365
        %v3631 = vunpack.c.l.b16 %v3366
        %v3632 = vunpack.c.h.b16 %v3366
        %v3633 = vunpack.c.l.b16 %v3367
        %v3634 = vunpack.c.h.b16 %v3367
        %v3635 = vunpack.c.l.b16 %v3368
        %v3636 = vunpack.c.h.b16 %v3368
        %v3637 = vunpack.c.l.b16 %v3369
        %v3638 = vunpack.c.h.b16 %v3369
        %v3639 = vunpack.c.l.b16 %v3370
        %v3640 = vunpack.c.h.b16 %v3370
        %v3641 = vunpack.c.l.b16 %v3371
        %v3642 = vunpack.c.h.b16 %v3371
        %v3643 = vunpack.c.l.b16 %v3372
        %v3644 = vunpack.c.h.b16 %v3372
        %v3645 = vunpack.c.l.b16 %v3373
        %v3646 = vunpack.c.h.b16 %v3373
        %v3647 = vunpack.c.l.b16 %v3374
        %v3648 = vunpack.c.h.b16 %v3374
        %v3649 = vunpack.c.l.b16 %v3375
        %v3650 = vunpack.c.h.b16 %v3375
        %v3651 = vunpack.c.l.b16 %v3376
        %v3652 = vunpack.c.h.b16 %v3376
        %v3653 = vunpack.c.l.b16 %v3377
        %v3654 = vunpack.c.h.b16 %v3377
        %v3655 = vunpack.c.l.b16 %v3378
        %v3656 = vunpack.c.h.b16 %v3378
        %v3657 = vunpack.c.l.b16 %v3379
        %v3658 = vunpack.c.h.b16 %v3379
        %v3659 = vunpack.c.l.b16 %v3380
        %v3660 = vunpack.c.h.b16 %v3380
        %v3661 = vunpack.c.l.b16 %v3381
        %v3662 = vunpack.c.h.b16 %v3381
        %v3663 = vunpack.c.l.b16 %v3382
        %v3664 = vunpack.c.h.b16 %v3382
        %v3665 = vunpack.c.l.b16 %v3383
        %v3666 = vunpack.c.h.b16 %v3383
        %v3667 = vunpack.c.l.b16 %v3384
        %v3668 = vunpack.c.h.b16 %v3384
        %v3669 = vunpack.c.l.b16 %v3385
        %v3670 = vunpack.c.h.b16 %v3385
        %v3671 = vunpack.c.l.b16 %v3386
        %v3672 = vunpack.c.h.b16 %v3386
        %v3673 = vunpack.c.l.b16 %v3387
        %v3674 = vunpack.c.h.b16 %v3387
        %v3675 = vunpack.c.l.b16 %v3388
        %v3676 = vunpack.c.h.b16 %v3388
        %v3677 = vunpack.c.l.b16 %v3389
        %v3678 = vunpack.c.h.b16 %v3389
        %v3679 = vunpack.c.l.b16 %v3390
        %v3680 = vunpack.c.h.b16 %v3390
        %v3681 = vunpack.c.l.b16 %v3391
        %v3682 = vunpack.c.h.b16 %v3391
        %v3683 = vunpack.c.l.b16 %v3392
        %v3684 = vunpack.c.h.b16 %v3392
        %v3685 = vunpack.c.l.b16 %v3393
        %v3686 = vunpack.c.h.b16 %v3393
        %v3687 = vunpack.c.l.b16 %v3394
        %v3688 = vunpack.c.h.b16 %v3394
        %v3689 = vunpack.c.l.b16 %v3395
        %v3690 = vunpack.c.h.b16 %v3395
        %v3691 = vunpack.c.l.b16 %v3396
        %v3692 = vunpack.c.h.b16 %v3396
        %v3693 = vunpack.c.l.b16 %v3397
        %v3694 = vunpack.c.h.b16 %v3397
        %v3695 = vunpack.c.l.b16 %v3398
        %v3696 = vunpack.c.h.b16 %v3398
        %v3697 = vunpack.c.l.b16 %v3399
        %v3698 = vunpack.c.h.b16 %v3399
        %v3699 = vunpack.c.l.b16 %v3400
        %v3700 = vunpack.c.h.b16 %v3400
        %v3701 = vunpack.c.l.b16 %v3401
        %v3702 = vunpack.c.h.b16 %v3401
        %v3703 = vunpack.c.l.b16 %v3402
        %v3704 = vunpack.c.h.b16 %v3402
        %v3705 = vunpack.c.l.b16 %v3403
        %v3706 = vunpack.c.h.b16 %v3403
        %v3707 = vunpack.c.l.b16 %v3404
        %v3708 = vunpack.c.h.b16 %v3404
        %v3709 = vunpack.c.l.b16 %v3405
        %v3710 = vunpack.c.h.b16 %v3405
        %v3711 = vunpack.c.l.b16 %v3406
        %v3712 = vunpack.c.h.b16 %v3406
        %v3713 = vunpack.c.l.b16 %v3407
        %v3714 = vunpack.c.h.b16 %v3407
        %v3715 = vunpack.c.l.b16 %v3408
        %v3716 = vunpack.c.h.b16 %v3408
        %v3717 = vunpack.c.l.b16 %v3409
        %v3718 = vunpack.c.h.b16 %v3409
        %v3719 = vunpack.c.l.b16 %v3410
        %v3720 = vunpack.c.h.b16 %v3410
        %v3721 = vunpack.c.l.b16 %v3411
        %v3722 = vunpack.c.h.b16 %v3411
        %v3723 = vunpack.c.l.b16 %v3412
        %v3724 = vunpack.c.h.b16 %v3412
        %v3725 = vunpack.c.l.b16 %v3413
        %v3726 = vunpack.c.h.b16 %v3413
        %v3727 = vunpack.c.l.b16 %v3414
        %v3728 = vunpack.c.h.b16 %v3414
        %v3729 = vunpack.c.l.b16 %v3415
        %v3730 = vunpack.c.h.b16 %v3415
        %v3731 = vunpack.c.l.b16 %v3416
        %v3732 = vunpack.c.h.b16 %v3416
        %v3733 = vunpack.c.l.b16 %v3417
        %v3734 = vunpack.c.h.b16 %v3417
        %v3735 = vunpack.c.l.b16 %v3418
        %v3736 = vunpack.c.h.b16 %v3418
        %v3737 = vunpack.c.l.b16 %v3419
        %v3738 = vunpack.c.h.b16 %v3419
        %v3739 = vunpack.c.l.b16 %v3420
        %v3740 = vunpack.c.h.b16 %v3420
        %v3741 = vpack.c.b16 %v3555, %v3549
        %v3742 = vpack.c.b16 %v3556, %v3550
        %v3743 = vpack.c.b16 %v3557, %v3551
        %v3744 = vpack.c.b16 %v3558, %v3552
        %v3745 = vpack.c.b16 %v3559, %v3553
        %v3746 = vpack.c.b16 %v3560, %v3554
        %v3747 = vpack.c.b16 %v3567, %v3561
        %v3748 = vpack.c.b16 %v3568, %v3562
        %v3749 = vpack.c.b16 %v3569, %v3563
        %v3750 = vpack.c.b16 %v3570, %v3564
        %v3751 = vpack.c.b16 %v3571, %v3565
        %v3752 = vpack.c.b16 %v3572, %v3566
        %v3753 = vpack.c.b16 %v3579, %v3573
        %v3754 = vpack.c.b16 %v3580, %v3574
        %v3755 = vpack.c.b16 %v3581, %v3575
        %v3756 = vpack.c.b16 %v3582, %v3576
        %v3757 = vpack.c.b16 %v3583, %v3577
        %v3758 = vpack.c.b16 %v3584, %v3578
        %v3759 = vpack.c.b16 %v3591, %v3585
        %v3760 = vpack.c.b16 %v3592, %v3586
        %v3761 = vpack.c.b16 %v3593, %v3587
        %v3762 = vpack.c.b16 %v3594, %v3588
        %v3763 = vpack.c.b16 %v3595, %v3589
        %v3764 = vpack.c.b16 %v3596, %v3590
        %v3765 = vpack.c.b16 %v3603, %v3597
        %v3766 = vpack.c.b16 %v3604, %v3598
        %v3767 = vpack.c.b16 %v3605, %v3599
        %v3768 = vpack.c.b16 %v3606, %v3600
        %v3769 = vpack.c.b16 %v3607, %v3601
        %v3770 = vpack.c.b16 %v3608, %v3602
        %v3771 = vpack.c.b16 %v3615, %v3609
        %v3772 = vpack.c.b16 %v3616, %v3610
        %v3773 = vpack.c.b16 %v3617, %v3611
        %v3774 = vpack.c.b16 %v3618, %v3612
        %v3775 = vpack.c.b16 %v3619, %v3613
        %v3776 = vpack.c.b16 %v3620, %v3614
        %v3777 = vpack.c.b16 %v3627, %v3621
        %v3778 = vpack.c.b16 %v3628, %v3622
        %v3779 = vpack.c.b16 %v3629, %v3623
        %v3780 = vpack.c.b16 %v3630, %v3624
        %v3781 = vpack.c.b16 %v3631, %v3625
        %v3782 = vpack.c.b16 %v3632, %v3626
        %v3783 = vpack.c.b16 %v3639, %v3633
        %v3784 = vpack.c.b16 %v3640, %v3634
        %v3785 = vpack.c.b16 %v3641, %v3635
        %v3786 = vpack.c.b16 %v3642, %v3636
        %v3787 = vpack.c.b16 %v3643, %v3637
        %v3788 = vpack.c.b16 %v3644, %v3638
        %v3789 = vpack.c.b16 %v3651, %v3645
        %v3790 = vpack.c.b16 %v3652, %v3646
        %v3791 = vpack.c.b16 %v3653, %v3647
        %v3792 = vpack.c.b16 %v3654, %v3648
        %v3793 = vpack.c.b16 %v3655, %v3649
        %v3794 = vpack.c.b16 %v3656, %v3650
        %v3795 = vpack.c.b16 %v3663, %v3657
        %v3796 = vpack.c.b16 %v3664, %v3658
        %v3797 = vpack.c.b16 %v3665, %v3659
        %v3798 = vpack.c.b16 %v3666, %v3660
        %v3799 = vpack.c.b16 %v3667, %v3661
        %v3800 = vpack.c.b16 %v3668, %v3662
        %v3801 = vpack.c.b16 %v3675, %v3669
        %v3802 = vpack.c.b16 %v3676, %v3670
        %v3803 = vpack.c.b16 %v3677, %v3671
        %v3804 = vpack.c.b16 %v3678, %v3672
        %v3805 = vpack.c.b16 %v3679, %v3673
        %v3806 = vpack.c.b16 %v3680, %v3674
        %v3807 = vpack.c.b16 %v3687, %v3681
        %v3808 = vpack.c.b16 %v3688, %v3682
        %v3809 = vpack.c.b16 %v3689, %v3683
        %v3810 = vpack.c.b16 %v3690, %v3684
        %v3811 = vpack.c.b16 %v3691, %v3685
        %v3812 = vpack.c.b16 %v3692, %v3686
        %v3813 = vpack.c.b16 %v3699, %v3693
        %v3814 = vpack.c.b16 %v3700, %v3694
        %v3815 = vpack.c.b16 %v3701, %v3695
        %v3816 = vpack.c.b16 %v3702, %v3696
        %v3817 = vpack.c.b16 %v3703, %v3697
        %v3818 = vpack.c.b16 %v3704, %v3698
        %v3819 = vpack.c.b16 %v3711, %v3705
        %v3820 = vpack.c.b16 %v3712, %v3706
        %v3821 = vpack.c.b16 %v3713, %v3707
        %v3822 = vpack.c.b16 %v3714, %v3708
        %v3823 = vpack.c.b16 %v3715, %v3709
        %v3824 = vpack.c.b16 %v3716, %v3710
        %v3825 = vpack.c.b16 %v3723, %v3717
        %v3826 = vpack.c.b16 %v3724, %v3718
        %v3827 = vpack.c.b16 %v3725, %v3719
        %v3828 = vpack.c.b16 %v3726, %v3720
        %v3829 = vpack.c.b16 %v3727, %v3721
        %v3830 = vpack.c.b16 %v3728, %v3722
        %v3831 = vpack.c.b16 %v3735, %v3729
        %v3832 = vpack.c.b16 %v3736, %v3730
        %v3833 = vpack.c.b16 %v3737, %v3731
        %v3834 = vpack.c.b16 %v3738, %v3732
        %v3835 = vpack.c.b16 %v3739, %v3733
        %v3836 = vpack.c.b16 %v3740, %v3734
        %3933 = vmatprep.subr.bf16.mxu0 %v3742
        %3934 = vmatpush1.bf16.msra.mxu0 %v3741
        %3935 = vmatprep.subr.bf16.mxu0 %v3748
        %3936 = vmatpush1.bf16.msra.mxu0 %v3747
        %3937 = vmatprep.subr.bf16.mxu0 %v3754
        %3938 = vmatpush1.bf16.msra.mxu0 %v3753
        %3939 = vmatprep.subr.bf16.mxu0 %v3760
        %3940 = vmatpush1.bf16.msra.mxu0 %v3759
        %3941 = vmatprep.subr.bf16.mxu0 %v3766
        %3942 = vmatpush1.bf16.msra.mxu0 %v3765
        %3943 = vmatprep.subr.bf16.mxu0 %v3772
        %3944 = vmatpush1.bf16.msra.mxu0 %v3771
        %3945 = vmatprep.subr.bf16.mxu0 %v3778
        %3946 = vmatpush1.bf16.msra.mxu0 %v3777
        %3947 = vmatprep.subr.bf16.mxu0 %v3784
        %3948 = vmatpush1.bf16.msra.mxu0 %v3783
        %3949 = vmatprep.subr.bf16.mxu0 %v3790
        %3950 = vmatpush1.bf16.msra.mxu0 %v3789
        %3951 = vmatprep.subr.bf16.mxu0 %v3796
        %3952 = vmatpush1.bf16.msra.mxu0 %v3795
        %3953 = vmatprep.subr.bf16.mxu0 %v3802
        %3954 = vmatpush1.bf16.msra.mxu0 %v3801
        %3955 = vmatprep.subr.bf16.mxu0 %v3808
        %3956 = vmatpush1.bf16.msra.mxu0 %v3807
        %3957 = vmatprep.subr.bf16.mxu0 %v3814
        %3958 = vmatpush1.bf16.msra.mxu0 %v3813
        %3959 = vmatprep.subr.bf16.mxu0 %v3820
        %3960 = vmatpush1.bf16.msra.mxu0 %v3819
        %3961 = vmatprep.subr.bf16.mxu0 %v3826
        %3962 = vmatpush1.bf16.msra.mxu0 %v3825
        %3963 = vmatprep.subr.bf16.mxu0 %v3832
        %3964 = vmatpush1.bf16.msra.mxu0 %v3831
        %3965 = vmatprep.mubr.bf16.mxu0 %v3310
        %3966 = vmatmul.mubr.bf16.gmra.mrb[0].mxu0 %v3309
        %v3967 = vpop.f32.mrb[0].mxu0
        %v3968 = vadd.f32 %v3426, %v3967
        %v3969 = vpop.f32.mrb[0].mxu0
        %v3970 = vadd.f32 %v3430, %v3969
        %v3971 = vpop.f32.mrb[0].mxu0
        %v3972 = vadd.f32 %v3426, %v3971
        %v3973 = vpop.f32.mrb[0].mxu0
        %v3974 = vadd.f32 %v3430, %v3973
        %3975 = vmatprep.mubr.bf16.mxu0 %v3312
        %3976 = vmatmul.mubr.bf16.gmra.mrb[0].mxu0 %v3311
        %v3977 = vpop.f32.mrb[0].mxu0
        %v3978 = vadd.f32 %v3426, %v3977
        %v3979 = vpop.f32.mrb[0].mxu0
        %v3980 = vadd.f32 %v3430, %v3979
        %v3981 = vpop.f32.mrb[0].mxu0
        %v3982 = vadd.f32 %v3426, %v3981
        %v3983 = vpop.f32.mrb[0].mxu0
        %v3984 = vadd.f32 %v3430, %v3983
        %3985 = vmatprep.mubr.bf16.mxu0 %v3314
        %3986 = vmatmul.mubr.bf16.gmra.mrb[0].mxu0 %v3313
        %v3987 = vpop.f32.mrb[0].mxu0
        %v3988 = vadd.f32 %v3426, %v3987
        %v3989 = vpop.f32.mrb[0].mxu0
        %v3990 = vadd.f32 %v3430, %v3989
        %v3991 = vpop.f32.mrb[0].mxu0
        %v3992 = vadd.f32 %v3426, %v3991
        %v3993 = vpop.f32.mrb[0].mxu0
        %v3994 = vadd.f32 %v3430, %v3993
        %3995 = vmatprep.mubr.bf16.mxu0 %v3316
        %3996 = vmatmul.mubr.bf16.gmra.mrb[0].mxu0 %v3315
        %v3997 = vpop.f32.mrb[0].mxu0
        %v3998 = vadd.f32 %v3426, %v3997
        %v3999 = vpop.f32.mrb[0].mxu0
        %v4000 = vadd.f32 %v3430, %v3999
        %v4001 = vpop.f32.mrb[0].mxu0
        %v4002 = vadd.f32 %v3426, %v4001
        %v4003 = vpop.f32.mrb[0].mxu0
        %v4004 = vadd.f32 %v3430, %v4003
        %4005 = vmatprep.mubr.bf16.mxu0 %v3318
        %4006 = vmatmul.mubr.bf16.gmra.mrb[0].mxu0 %v3317
        %v4007 = vpop.f32.mrb[0].mxu0
        %v4008 = vadd.f32 %v3426, %v4007
        %v4009 = vpop.f32.mrb[0].mxu0
        %v4010 = vadd.f32 %v3430, %v4009
        %v4011 = vpop.f32.mrb[0].mxu0
        %v4012 = vadd.f32 %v3426, %v4011
        %v4013 = vpop.f32.mrb[0].mxu0
        %v4014 = vadd.f32 %v3430, %v4013
        %4015 = vmatprep.mubr.bf16.mxu0 %v3320
        %4016 = vmatmul.mubr.bf16.gmra.mrb[0].mxu0 %v3319
        %v4017 = vpop.f32.mrb[0].mxu0
        %v4018 = vadd.f32 %v3426, %v4017
        %v4019 = vpop.f32.mrb[0].mxu0
        %v4020 = vadd.f32 %v3430, %v4019
        %v4021 = vpop.f32.mrb[0].mxu0
        %v4022 = vadd.f32 %v3426, %v4021
        %v4023 = vpop.f32.mrb[0].mxu0
        %v4024 = vadd.f32 %v3430, %v4023
        %4025 = vmatprep.mubr.bf16.mxu0 %v3322
        %4026 = vmatmul.mubr.bf16.gmra.mrb[0].mxu0 %v3321
        %v4027 = vpop.f32.mrb[0].mxu0
        %v4028 = vadd.f32 %v3426, %v4027
        %v4029 = vpop.f32.mrb[0].mxu0
        %v4030 = vadd.f32 %v3430, %v4029
        %v4031 = vpop.f32.mrb[0].mxu0
        %v4032 = vadd.f32 %v3426, %v4031
        %v4033 = vpop.f32.mrb[0].mxu0
        %v4034 = vadd.f32 %v3430, %v4033
        %4035 = vmatprep.mubr.bf16.mxu0 %v3324
        %4036 = vmatmul.mubr.bf16.gmra.mrb[0].mxu0 %v3323
        %v4037 = vpop.f32.mrb[0].mxu0
        %v4038 = vadd.f32 %v3426, %v4037
        %v4039 = vpop.f32.mrb[0].mxu0
        %v4040 = vadd.f32 %v3430, %v4039
        %v4041 = vpop.f32.mrb[0].mxu0
        %v4042 = vadd.f32 %v3426, %v4041
        %v4043 = vpop.f32.mrb[0].mxu0
        %v4044 = vadd.f32 %v3430, %v4043
        %4045 = vdwg.mxu0
        %4046 = vmatprep.subr.bf16.mxu0 %v3744
        %4047 = vmatpush1.bf16.msra.mxu0 %v3743
        %4048 = vmatprep.subr.bf16.mxu0 %v3750
        %4049 = vmatpush1.bf16.msra.mxu0 %v3749
        %4050 = vmatprep.subr.bf16.mxu0 %v3756
        %4051 = vmatpush1.bf16.msra.mxu0 %v3755
        %4052 = vmatprep.subr.bf16.mxu0 %v3762
        %4053 = vmatpush1.bf16.msra.mxu0 %v3761
        %4054 = vmatprep.subr.bf16.mxu0 %v3768
        %4055 = vmatpush1.bf16.msra.mxu0 %v3767
        %4056 = vmatprep.subr.bf16.mxu0 %v3774
        %4057 = vmatpush1.bf16.msra.mxu0 %v3773
        %4058 = vmatprep.subr.bf16.mxu0 %v3780
        %4059 = vmatpush1.bf16.msra.mxu0 %v3779
        %4060 = vmatprep.subr.bf16.mxu0 %v3786
        %4061 = vmatpush1.bf16.msra.mxu0 %v3785
        %4062 = vmatprep.subr.bf16.mxu0 %v3792
        %4063 = vmatpush1.bf16.msra.mxu0 %v3791
        %4064 = vmatprep.subr.bf16.mxu0 %v3798
        %4065 = vmatpush1.bf16.msra.mxu0 %v3797
        %4066 = vmatprep.subr.bf16.mxu0 %v3804
        %4067 = vmatpush1.bf16.msra.mxu0 %v3803
        %4068 = vmatprep.subr.bf16.mxu0 %v3810
        %4069 = vmatpush1.bf16.msra.mxu0 %v3809
        %4070 = vmatprep.subr.bf16.mxu0 %v3816
        %4071 = vmatpush1.bf16.msra.mxu0 %v3815
        %4072 = vmatprep.subr.bf16.mxu0 %v3822
        %4073 = vmatpush1.bf16.msra.mxu0 %v3821
        %4074 = vmatprep.subr.bf16.mxu0 %v3828
        %4075 = vmatpush1.bf16.msra.mxu0 %v3827
        %4076 = vmatprep.subr.bf16.mxu0 %v3834
        %4077 = vmatpush1.bf16.msra.mxu0 %v3833
        %4078 = vmatprep.mubr.bf16.mxu0 %v3310
        %4079 = vmatmul.mubr.bf16.gmra.mrb[0].mxu0 %v3309
        %v4080 = vpop.f32.mrb[0].mxu0
        %v4081 = vadd.f32 %v3434, %v4080
        %v4082 = vpop.f32.mrb[0].mxu0
        %v4083 = vadd.f32 %v3438, %v4082
        %v4084 = vpop.f32.mrb[0].mxu0
        %v4085 = vadd.f32 %v3434, %v4084
        %v4086 = vpop.f32.mrb[0].mxu0
        %v4087 = vadd.f32 %v3438, %v4086
        %4088 = vmatprep.mubr.bf16.mxu0 %v3312
        %4089 = vmatmul.mubr.bf16.gmra.mrb[0].mxu0 %v3311
        %v4090 = vpop.f32.mrb[0].mxu0
        %v4091 = vadd.f32 %v3434, %v4090
        %v4092 = vpop.f32.mrb[0].mxu0
        %v4093 = vadd.f32 %v3438, %v4092
        %v4094 = vpop.f32.mrb[0].mxu0
        %v4095 = vadd.f32 %v3434, %v4094
        %v4096 = vpop.f32.mrb[0].mxu0
        %v4097 = vadd.f32 %v3438, %v4096
        %4098 = vmatprep.mubr.bf16.mxu0 %v3314
        %4099 = vmatmul.mubr.bf16.gmra.mrb[0].mxu0 %v3313
        %v4100 = vpop.f32.mrb[0].mxu0
        %v4101 = vadd.f32 %v3434, %v4100
        %v4102 = vpop.f32.mrb[0].mxu0
        %v4103 = vadd.f32 %v3438, %v4102
        %v4104 = vpop.f32.mrb[0].mxu0
        %v4105 = vadd.f32 %v3434, %v4104
        %v4106 = vpop.f32.mrb[0].mxu0
        %v4107 = vadd.f32 %v3438, %v4106
        %4108 = vmatprep.mubr.bf16.mxu0 %v3316
        %4109 = vmatmul.mubr.bf16.gmra.mrb[0].mxu0 %v3315
        %v4110 = vpop.f32.mrb[0].mxu0
        %v4111 = vadd.f32 %v3434, %v4110
        %v4112 = vpop.f32.mrb[0].mxu0
        %v4113 = vadd.f32 %v3438, %v4112
        %v4114 = vpop.f32.mrb[0].mxu0
        %v4115 = vadd.f32 %v3434, %v4114
        %v4116 = vpop.f32.mrb[0].mxu0
        %v4117 = vadd.f32 %v3438, %v4116
        %4118 = vmatprep.mubr.bf16.mxu0 %v3318
        %4119 = vmatmul.mubr.bf16.gmra.mrb[0].mxu0 %v3317
        %v4120 = vpop.f32.mrb[0].mxu0
        %v4121 = vadd.f32 %v3434, %v4120
        %v4122 = vpop.f32.mrb[0].mxu0
        %v4123 = vadd.f32 %v3438, %v4122
        %v4124 = vpop.f32.mrb[0].mxu0
        %v4125 = vadd.f32 %v3434, %v4124
        %v4126 = vpop.f32.mrb[0].mxu0
        %v4127 = vadd.f32 %v3438, %v4126
        %4128 = vmatprep.mubr.bf16.mxu0 %v3320
        %4129 = vmatmul.mubr.bf16.gmra.mrb[0].mxu0 %v3319
        %v4130 = vpop.f32.mrb[0].mxu0
        %v4131 = vadd.f32 %v3434, %v4130
        %v4132 = vpop.f32.mrb[0].mxu0
        %v4133 = vadd.f32 %v3438, %v4132
        %v4134 = vpop.f32.mrb[0].mxu0
        %v4135 = vadd.f32 %v3434, %v4134
        %v4136 = vpop.f32.mrb[0].mxu0
        %v4137 = vadd.f32 %v3438, %v4136
        %4138 = vmatprep.mubr.bf16.mxu0 %v3322
        %4139 = vmatmul.mubr.bf16.gmra.mrb[0].mxu0 %v3321
        %v4140 = vpop.f32.mrb[0].mxu0
        %v4141 = vadd.f32 %v3434, %v4140
        %v4142 = vpop.f32.mrb[0].mxu0
        %v4143 = vadd.f32 %v3438, %v4142
        %v4144 = vpop.f32.mrb[0].mxu0
        %v4145 = vadd.f32 %v3434, %v4144
        %v4146 = vpop.f32.mrb[0].mxu0
        %v4147 = vadd.f32 %v3438, %v4146
        %4148 = vmatprep.mubr.bf16.mxu0 %v3324
        %4149 = vmatmul.mubr.bf16.gmra.mrb[0].mxu0 %v3323
        %v4150 = vpop.f32.mrb[0].mxu0
        %v4151 = vadd.f32 %v3434, %v4150
        %v4152 = vpop.f32.mrb[0].mxu0
        %v4153 = vadd.f32 %v3438, %v4152
        %v4154 = vpop.f32.mrb[0].mxu0
        %v4155 = vadd.f32 %v3434, %v4154
        %v4156 = vpop.f32.mrb[0].mxu0
        %v4157 = vadd.f32 %v3438, %v4156
        %4158 = vdwg.mxu0
        %4159 = vmatprep.subr.bf16.mxu0 %v3746
        %4160 = vmatpush1.bf16.msra.mxu0 %v3745
        %4161 = vmatprep.subr.bf16.mxu0 %v3752
        %4162 = vmatpush1.bf16.msra.mxu0 %v3751
        %4163 = vmatprep.subr.bf16.mxu0 %v3758
        %4164 = vmatpush1.bf16.msra.mxu0 %v3757
        %4165 = vmatprep.subr.bf16.mxu0 %v3764
        %4166 = vmatpush1.bf16.msra.mxu0 %v3763
        %4167 = vmatprep.subr.bf16.mxu0 %v3770
        %4168 = vmatpush1.bf16.msra.mxu0 %v3769
        %4169 = vmatprep.subr.bf16.mxu0 %v3776
        %4170 = vmatpush1.bf16.msra.mxu0 %v3775
        %4171 = vmatprep.subr.bf16.mxu0 %v3782
        %4172 = vmatpush1.bf16.msra.mxu0 %v3781
        %4173 = vmatprep.subr.bf16.mxu0 %v3788
        %4174 = vmatpush1.bf16.msra.mxu0 %v3787
        %4175 = vmatprep.subr.bf16.mxu0 %v3794
        %4176 = vmatpush1.bf16.msra.mxu0 %v3793
        %4177 = vmatprep.subr.bf16.mxu0 %v3800
        %4178 = vmatpush1.bf16.msra.mxu0 %v3799
        %4179 = vmatprep.subr.bf16.mxu0 %v3806
        %4180 = vmatpush1.bf16.msra.mxu0 %v3805
        %4181 = vmatprep.subr.bf16.mxu0 %v3812
        %4182 = vmatpush1.bf16.msra.mxu0 %v3811
        %4183 = vmatprep.subr.bf16.mxu0 %v3818
        %4184 = vmatpush1.bf16.msra.mxu0 %v3817
        %4185 = vmatprep.subr.bf16.mxu0 %v3824
        %4186 = vmatpush1.bf16.msra.mxu0 %v3823
        %4187 = vmatprep.subr.bf16.mxu0 %v3830
        %4188 = vmatpush1.bf16.msra.mxu0 %v3829
        %4189 = vmatprep.subr.bf16.mxu0 %v3836
        %4190 = vmatpush1.bf16.msra.mxu0 %v3835
        %4191 = vmatprep.mubr.bf16.mxu0 %v3310
        %4192 = vmatmul.mubr.bf16.gmra.mrb[0].mxu0 %v3309
        %v4193 = vpop.f32.mrb[0].mxu0
        %v4194 = vadd.f32 %v3442, %v4193
        %v4195 = vpop.f32.mrb[0].mxu0
        %v4196 = vadd.f32 %v3446, %v4195
        %v4197 = vpop.f32.mrb[0].mxu0
        %v4198 = vadd.f32 %v3442, %v4197
        %v4199 = vpop.f32.mrb[0].mxu0
        %v4200 = vadd.f32 %v3446, %v4199
        %4201 = vmatprep.mubr.bf16.mxu0 %v3312
        %4202 = vmatmul.mubr.bf16.gmra.mrb[0].mxu0 %v3311
        %v4203 = vpop.f32.mrb[0].mxu0
        %v4204 = vadd.f32 %v3442, %v4203
        %v4205 = vpop.f32.mrb[0].mxu0
        %v4206 = vadd.f32 %v3446, %v4205
        %v4207 = vpop.f32.mrb[0].mxu0
        %v4208 = vadd.f32 %v3442, %v4207
        %v4209 = vpop.f32.mrb[0].mxu0
        %v4210 = vadd.f32 %v3446, %v4209
        %4211 = vmatprep.mubr.bf16.mxu0 %v3314
        %4212 = vmatmul.mubr.bf16.gmra.mrb[0].mxu0 %v3313
        %v4213 = vpop.f32.mrb[0].mxu0
        %v4214 = vadd.f32 %v3442, %v4213
        %v4215 = vpop.f32.mrb[0].mxu0
        %v4216 = vadd.f32 %v3446, %v4215
        %v4217 = vpop.f32.mrb[0].mxu0
        %v4218 = vadd.f32 %v3442, %v4217
        %v4219 = vpop.f32.mrb[0].mxu0
        %v4220 = vadd.f32 %v3446, %v4219
        %4221 = vmatprep.mubr.bf16.mxu0 %v3316
        %4222 = vmatmul.mubr.bf16.gmra.mrb[0].mxu0 %v3315
        %v4223 = vpop.f32.mrb[0].mxu0
        %v4224 = vadd.f32 %v3442, %v4223
        %v4225 = vpop.f32.mrb[0].mxu0
        %v4226 = vadd.f32 %v3446, %v4225
        %v4227 = vpop.f32.mrb[0].mxu0
        %v4228 = vadd.f32 %v3442, %v4227
        %v4229 = vpop.f32.mrb[0].mxu0
        %v4230 = vadd.f32 %v3446, %v4229
        %4231 = vmatprep.mubr.bf16.mxu0 %v3318
        %4232 = vmatmul.mubr.bf16.gmra.mrb[0].mxu0 %v3317
        %v4233 = vpop.f32.mrb[0].mxu0
        %v4234 = vadd.f32 %v3442, %v4233
        %v4235 = vpop.f32.mrb[0].mxu0
        %v4236 = vadd.f32 %v3446, %v4235
        %v4237 = vpop.f32.mrb[0].mxu0
        %v4238 = vadd.f32 %v3442, %v4237
        %v4239 = vpop.f32.mrb[0].mxu0
        %v4240 = vadd.f32 %v3446, %v4239
        %4241 = vmatprep.mubr.bf16.mxu0 %v3320
        %4242 = vmatmul.mubr.bf16.gmra.mrb[0].mxu0 %v3319
        %v4243 = vpop.f32.mrb[0].mxu0
        %v4244 = vadd.f32 %v3442, %v4243
        %v4245 = vpop.f32.mrb[0].mxu0
        %v4246 = vadd.f32 %v3446, %v4245
        %v4247 = vpop.f32.mrb[0].mxu0
        %v4248 = vadd.f32 %v3442, %v4247
        %v4249 = vpop.f32.mrb[0].mxu0
        %v4250 = vadd.f32 %v3446, %v4249
        %4251 = vmatprep.mubr.bf16.mxu0 %v3322
        %4252 = vmatmul.mubr.bf16.gmra.mrb[0].mxu0 %v3321
        %v4253 = vpop.f32.mrb[0].mxu0
        %v4254 = vadd.f32 %v3442, %v4253
        %v4255 = vpop.f32.mrb[0].mxu0
        %v4256 = vadd.f32 %v3446, %v4255
        %v4257 = vpop.f32.mrb[0].mxu0
        %v4258 = vadd.f32 %v3442, %v4257
        %v4259 = vpop.f32.mrb[0].mxu0
        %v4260 = vadd.f32 %v3446, %v4259
        %4261 = vmatprep.mubr.bf16.mxu0 %v3324
        %4262 = vmatmul.mubr.bf16.gmra.mrb[0].mxu0 %v3323
        %v4263 = vpop.f32.mrb[0].mxu0
        %v4264 = vadd.f32 %v3442, %v4263
        %v4265 = vpop.f32.mrb[0].mxu0
        %v4266 = vadd.f32 %v3446, %v4265
        %v4267 = vpop.f32.mrb[0].mxu0
        %v4268 = vadd.f32 %v3442, %v4267
        %v4269 = vpop.f32.mrb[0].mxu0
        %v4270 = vadd.f32 %v3446, %v4269
        %4271 = vdwg.mxu0
        %v4272 = vmax.f32 %v3968, 0.0
        %v4273 = vmax.f32 %v3970, 0.0
        %v4274 = vmax.f32 %v4081, 0.0
        %v4275 = vmax.f32 %v4083, 0.0
        %v4276 = vmax.f32 %v4194, 0.0
        %v4277 = vmax.f32 %v4196, 0.0
        %v4278 = vmax.f32 %v3972, 0.0
        %v4279 = vmax.f32 %v3974, 0.0
        %v4280 = vmax.f32 %v4085, 0.0
        %v4281 = vmax.f32 %v4087, 0.0
        %v4282 = vmax.f32 %v4198, 0.0
        %v4283 = vmax.f32 %v4200, 0.0
        %v4284 = vmax.f32 %v3978, 0.0
        %v4285 = vmax.f32 %v3980, 0.0
        %v4286 = vmax.f32 %v4091, 0.0
        %v4287 = vmax.f32 %v4093, 0.0
        %v4288 = vmax.f32 %v4204, 0.0
        %v4289 = vmax.f32 %v4206, 0.0
        %v4290 = vmax.f32 %v3982, 0.0
        %v4291 = vmax.f32 %v3984, 0.0
        %v4292 = vmax.f32 %v4095, 0.0
        %v4293 = vmax.f32 %v4097, 0.0
        %v4294 = vmax.f32 %v4208, 0.0
        %v4295 = vmax.f32 %v4210, 0.0
        %v4296 = vmax.f32 %v3988, 0.0
        %v4297 = vmax.f32 %v3990, 0.0
        %v4298 = vmax.f32 %v4101, 0.0
        %v4299 = vmax.f32 %v4103, 0.0
        %v4300 = vmax.f32 %v4214, 0.0
        %v4301 = vmax.f32 %v4216, 0.0
        %v4302 = vmax.f32 %v3992, 0.0
        %v4303 = vmax.f32 %v3994, 0.0
        %v4304 = vmax.f32 %v4105, 0.0
        %v4305 = vmax.f32 %v4107, 0.0
        %v4306 = vmax.f32 %v4218, 0.0
        %v4307 = vmax.f32 %v4220, 0.0
        %v4308 = vmax.f32 %v3998, 0.0
        %v4309 = vmax.f32 %v4000, 0.0
        %v4310 = vmax.f32 %v4111, 0.0
        %v4311 = vmax.f32 %v4113, 0.0
        %v4312 = vmax.f32 %v4224, 0.0
        %v4313 = vmax.f32 %v4226, 0.0
        %v4314 = vmax.f32 %v4002, 0.0
        %v4315 = vmax.f32 %v4004, 0.0
        %v4316 = vmax.f32 %v4115, 0.0
        %v4317 = vmax.f32 %v4117, 0.0
        %v4318 = vmax.f32 %v4228, 0.0
        %v4319 = vmax.f32 %v4230, 0.0
        %v4320 = vmax.f32 %v4008, 0.0
        %v4321 = vmax.f32 %v4010, 0.0
        %v4322 = vmax.f32 %v4121, 0.0
        %v4323 = vmax.f32 %v4123, 0.0
        %v4324 = vmax.f32 %v4234, 0.0
        %v4325 = vmax.f32 %v4236, 0.0
        %v4326 = vmax.f32 %v4012, 0.0
        %v4327 = vmax.f32 %v4014, 0.0
        %v4328 = vmax.f32 %v4125, 0.0
        %v4329 = vmax.f32 %v4127, 0.0
        %v4330 = vmax.f32 %v4238, 0.0
        %v4331 = vmax.f32 %v4240, 0.0
        %v4332 = vmax.f32 %v4018, 0.0
        %v4333 = vmax.f32 %v4020, 0.0
        %v4334 = vmax.f32 %v4131, 0.0
        %v4335 = vmax.f32 %v4133, 0.0
        %v4336 = vmax.f32 %v4244, 0.0
        %v4337 = vmax.f32 %v4246, 0.0
        %v4338 = vmax.f32 %v4022, 0.0
        %v4339 = vmax.f32 %v4024, 0.0
        %v4340 = vmax.f32 %v4135, 0.0
        %v4341 = vmax.f32 %v4137, 0.0
        %v4342 = vmax.f32 %v4248, 0.0
        %v4343 = vmax.f32 %v4250, 0.0
        %v4344 = vmax.f32 %v4028, 0.0
        %v4345 = vmax.f32 %v4030, 0.0
        %v4346 = vmax.f32 %v4141, 0.0
        %v4347 = vmax.f32 %v4143, 0.0
        %v4348 = vmax.f32 %v4254, 0.0
        %v4349 = vmax.f32 %v4256, 0.0
        %v4350 = vmax.f32 %v4032, 0.0
        %v4351 = vmax.f32 %v4034, 0.0
        %v4352 = vmax.f32 %v4145, 0.0
        %v4353 = vmax.f32 %v4147, 0.0
        %v4354 = vmax.f32 %v4258, 0.0
        %v4355 = vmax.f32 %v4260, 0.0
        %v4356 = vmax.f32 %v4038, 0.0
        %v4357 = vmax.f32 %v4040, 0.0
        %v4358 = vmax.f32 %v4151, 0.0
        %v4359 = vmax.f32 %v4153, 0.0
        %v4360 = vmax.f32 %v4264, 0.0
        %v4361 = vmax.f32 %v4266, 0.0
        %v4362 = vmax.f32 %v4042, 0.0
        %v4363 = vmax.f32 %v4044, 0.0
        %v4364 = vmax.f32 %v4155, 0.0
        %v4365 = vmax.f32 %v4157, 0.0
        %v4366 = vmax.f32 %v4268, 0.0
        %v4367 = vmax.f32 %v4270, 0.0
        %v4368 = vpack.c.bf16 %v4278, %v4272
        %v4369 = vpack.c.bf16 %v4279, %v4273
        %v4370 = vpack.c.bf16 %v4280, %v4274
        %v4371 = vpack.c.bf16 %v4281, %v4275
        %v4372 = vpack.c.bf16 %v4282, %v4276
        %v4373 = vpack.c.bf16 %v4283, %v4277
        %v4374 = vpack.c.bf16 %v4290, %v4284
        %v4375 = vpack.c.bf16 %v4291, %v4285
        %v4376 = vpack.c.bf16 %v4292, %v4286
        %v4377 = vpack.c.bf16 %v4293, %v4287
        %v4378 = vpack.c.bf16 %v4294, %v4288
        %v4379 = vpack.c.bf16 %v4295, %v4289
        %v4380 = vpack.c.bf16 %v4302, %v4296
        %v4381 = vpack.c.bf16 %v4303, %v4297
        %v4382 = vpack.c.bf16 %v4304, %v4298
        %v4383 = vpack.c.bf16 %v4305, %v4299
        %v4384 = vpack.c.bf16 %v4306, %v4300
        %v4385 = vpack.c.bf16 %v4307, %v4301
        %v4386 = vpack.c.bf16 %v4314, %v4308
        %v4387 = vpack.c.bf16 %v4315, %v4309
        %v4388 = vpack.c.bf16 %v4316, %v4310
        %v4389 = vpack.c.bf16 %v4317, %v4311
        %v4390 = vpack.c.bf16 %v4318, %v4312
        %v4391 = vpack.c.bf16 %v4319, %v4313
        %v4392 = vpack.c.bf16 %v4326, %v4320
        %v4393 = vpack.c.bf16 %v4327, %v4321
        %v4394 = vpack.c.bf16 %v4328, %v4322
        %v4395 = vpack.c.bf16 %v4329, %v4323
        %v4396 = vpack.c.bf16 %v4330, %v4324
        %v4397 = vpack.c.bf16 %v4331, %v4325
        %v4398 = vpack.c.bf16 %v4338, %v4332
        %v4399 = vpack.c.bf16 %v4339, %v4333
        %v4400 = vpack.c.bf16 %v4340, %v4334
        %v4401 = vpack.c.bf16 %v4341, %v4335
        %v4402 = vpack.c.bf16 %v4342, %v4336
        %v4403 = vpack.c.bf16 %v4343, %v4337
        %v4404 = vpack.c.bf16 %v4350, %v4344
        %v4405 = vpack.c.bf16 %v4351, %v4345
        %v4406 = vpack.c.bf16 %v4352, %v4346
        %v4407 = vpack.c.bf16 %v4353, %v4347
        %v4408 = vpack.c.bf16 %v4354, %v4348
        %v4409 = vpack.c.bf16 %v4355, %v4349
        %v4410 = vpack.c.bf16 %v4362, %v4356
        %v4411 = vpack.c.bf16 %v4363, %v4357
        %v4412 = vpack.c.bf16 %v4364, %v4358
        %v4413 = vpack.c.bf16 %v4365, %v4359
        %v4414 = vpack.c.bf16 %v4366, %v4360
        %v4415 = vpack.c.bf16 %v4367, %v4361
        %v4416 = vld [vmem:[#allocation11] sm:$0xf]
        %v4417 = vld [vmem:[#allocation11 + $0x4] sm:$0xf]
        %v4418 = vld [vmem:[#allocation11 + $0x8] sm:$0xf]
        %v4419 = vld [vmem:[#allocation11 + $0xc] sm:$0xf]
        %v4420 = vld [vmem:[#allocation11 + $0x10] sm:$0xf]
        %v4421 = vld [vmem:[#allocation11 + $0x14] sm:$0xf]
        %v4422 = vld [vmem:[#allocation11 + $0x18] sm:$0xf]
        %v4423 = vld [vmem:[#allocation11 + $0x1c] sm:$0xf]
        %v4424 = vld [vmem:[#allocation11 + $0x20] sm:$0xf]
        %v4425 = vld [vmem:[#allocation11 + $0x24] sm:$0xf]
        %v4426 = vld [vmem:[#allocation11 + $0x28] sm:$0xf]
        %v4427 = vld [vmem:[#allocation11 + $0x2c] sm:$0xf]
        %v4428 = vld [vmem:[#allocation11 + $0x30] sm:$0xf]
        %v4429 = vld [vmem:[#allocation11 + $0x34] sm:$0xf]
        %v4430 = vld [vmem:[#allocation11 + $0x38] sm:$0xf]
        %v4431 = vld [vmem:[#allocation11 + $0x3c] sm:$0xf]
        %v4432 = vld [vmem:[#allocation11 + $0x40] sm:$0xf]
        %v4433 = vld [vmem:[#allocation11 + $0x44] sm:$0xf]
        %v4434 = vld [vmem:[#allocation11 + $0x48] sm:$0xf]
        %v4435 = vld [vmem:[#allocation11 + $0x4c] sm:$0xf]
        %v4436 = vld [vmem:[#allocation11 + $0x50] sm:$0xf]
        %v4437 = vld [vmem:[#allocation11 + $0x54] sm:$0xf]
        %v4438 = vld [vmem:[#allocation11 + $0x58] sm:$0xf]
        %v4439 = vld [vmem:[#allocation11 + $0x5c] sm:$0xf]
        %v4440 = vld [vmem:[#allocation11 + $0x60] sm:$0xf]
        %v4441 = vld [vmem:[#allocation11 + $0x64] sm:$0xf]
        %v4442 = vld [vmem:[#allocation11 + $0x68] sm:$0xf]
        %v4443 = vld [vmem:[#allocation11 + $0x6c] sm:$0xf]
        %v4444 = vld [vmem:[#allocation11 + $0x70] sm:$0xf]
        %v4445 = vld [vmem:[#allocation11 + $0x74] sm:$0xf]
        %v4446 = vld [vmem:[#allocation11 + $0x78] sm:$0xf]
        %v4447 = vld [vmem:[#allocation11 + $0x7c] sm:$0xf]
        %v4448 = vld [vmem:[#allocation11 + $0x80] sm:$0xf]
        %v4449 = vld [vmem:[#allocation11 + $0x84] sm:$0xf]
        %v4450 = vld [vmem:[#allocation11 + $0x88] sm:$0xf]
        %v4451 = vld [vmem:[#allocation11 + $0x8c] sm:$0xf]
        %v4452 = vld [vmem:[#allocation11 + $0x90] sm:$0xf]
        %v4453 = vld [vmem:[#allocation11 + $0x94] sm:$0xf]
        %v4454 = vld [vmem:[#allocation11 + $0x98] sm:$0xf]
        %v4455 = vld [vmem:[#allocation11 + $0x9c] sm:$0xf]
        %v4456 = vld [vmem:[#allocation11 + $0xa0] sm:$0xf]
        %v4457 = vld [vmem:[#allocation11 + $0xa4] sm:$0xf]
        %v4458 = vld [vmem:[#allocation11 + $0xa8] sm:$0xf]
        %v4459 = vld [vmem:[#allocation11 + $0xac] sm:$0xf]
        %v4460 = vld [vmem:[#allocation11 + $0xb0] sm:$0xf]
        %v4461 = vld [vmem:[#allocation11 + $0xb4] sm:$0xf]
        %v4462 = vld [vmem:[#allocation11 + $0xb8] sm:$0xf]
        %v4463 = vld [vmem:[#allocation11 + $0xbc] sm:$0xf]
        %v4464 = vld [vmem:[#allocation11 + $0xc0] sm:$0xf]
        %v4465 = vld [vmem:[#allocation11 + $0xc4] sm:$0xf]
        %v4466 = vld [vmem:[#allocation11 + $0xc8] sm:$0xf]
        %v4467 = vld [vmem:[#allocation11 + $0xcc] sm:$0xf]
        %v4468 = vld [vmem:[#allocation11 + $0xd0] sm:$0xf]
        %v4469 = vld [vmem:[#allocation11 + $0xd4] sm:$0xf]
        %v4470 = vld [vmem:[#allocation11 + $0xd8] sm:$0xf]
        %v4471 = vld [vmem:[#allocation11 + $0xdc] sm:$0xf]
        %v4472 = vld [vmem:[#allocation11 + $0xe0] sm:$0xf]
        %v4473 = vld [vmem:[#allocation11 + $0xe4] sm:$0xf]
        %v4474 = vld [vmem:[#allocation11 + $0xe8] sm:$0xf]
        %v4475 = vld [vmem:[#allocation11 + $0xec] sm:$0xf]
        %v4476 = vld [vmem:[#allocation11 + $0xf0] sm:$0xf]
        %v4477 = vld [vmem:[#allocation11 + $0xf4] sm:$0xf]
        %v4478 = vld [vmem:[#allocation11 + $0xf8] sm:$0xf]
        %v4479 = vld [vmem:[#allocation11 + $0xfc] sm:$0xf]
        %v4480 = vld [vmem:[#allocation11 + $0x100] sm:$0xf]
        %v4481 = vld [vmem:[#allocation11 + $0x104] sm:$0xf]
        %v4482 = vld [vmem:[#allocation11 + $0x108] sm:$0xf]
        %v4483 = vld [vmem:[#allocation11 + $0x10c] sm:$0xf]
        %v4484 = vld [vmem:[#allocation11 + $0x110] sm:$0xf]
        %v4485 = vld [vmem:[#allocation11 + $0x114] sm:$0xf]
        %v4486 = vld [vmem:[#allocation11 + $0x118] sm:$0xf]
        %v4487 = vld [vmem:[#allocation11 + $0x11c] sm:$0xf]
        %v4488 = vld [vmem:[#allocation11 + $0x120] sm:$0xf]
        %v4489 = vld [vmem:[#allocation11 + $0x124] sm:$0xf]
        %v4490 = vld [vmem:[#allocation11 + $0x128] sm:$0xf]
        %v4491 = vld [vmem:[#allocation11 + $0x12c] sm:$0xf]
        %v4492 = vld [vmem:[#allocation11 + $0x130] sm:$0xf]
        %v4493 = vld [vmem:[#allocation11 + $0x134] sm:$0xf]
        %v4494 = vld [vmem:[#allocation11 + $0x138] sm:$0xf]
        %v4495 = vld [vmem:[#allocation11 + $0x13c] sm:$0xf]
        %v4496 = vld [vmem:[#allocation11 + $0x140] sm:$0xf]
        %v4497 = vld [vmem:[#allocation11 + $0x144] sm:$0xf]
        %v4498 = vld [vmem:[#allocation11 + $0x148] sm:$0xf]
        %v4499 = vld [vmem:[#allocation11 + $0x14c] sm:$0xf]
        %v4500 = vld [vmem:[#allocation11 + $0x150] sm:$0xf]
        %v4501 = vld [vmem:[#allocation11 + $0x154] sm:$0xf]
        %v4502 = vld [vmem:[#allocation11 + $0x158] sm:$0xf]
        %v4503 = vld [vmem:[#allocation11 + $0x15c] sm:$0xf]
        %v4504 = vld [vmem:[#allocation11 + $0x160] sm:$0xf]
        %v4505 = vld [vmem:[#allocation11 + $0x164] sm:$0xf]
        %v4506 = vld [vmem:[#allocation11 + $0x168] sm:$0xf]
        %v4507 = vld [vmem:[#allocation11 + $0x16c] sm:$0xf]
        %v4508 = vld [vmem:[#allocation11 + $0x170] sm:$0xf]
        %v4509 = vld [vmem:[#allocation11 + $0x174] sm:$0xf]
        %v4510 = vld [vmem:[#allocation11 + $0x178] sm:$0xf]
        %v4511 = vld [vmem:[#allocation11 + $0x17c] sm:$0xf]
        %v4512 = vld [vmem:[%s8] sm:$0x1]
        %v4514 = vlaneseq
        %v4515 = vshrl.u32 %v4514, 7
        %v4516 = vsub.s32 0, %v4515
        %v4517 = vrot.slane %v4512, %v4516
        %v4615 = vunpack.c.l.b16 %v4416
        %v4616 = vunpack.c.l.b16 %v4417
        %v4617 = vunpack.c.l.b16 %v4418
        %v4618 = vunpack.c.l.b16 %v4419
        %v4619 = vunpack.c.l.b16 %v4420
        %v4620 = vunpack.c.l.b16 %v4421
        %v4621 = vunpack.c.l.b16 %v4422
        %v4622 = vunpack.c.l.b16 %v4423
        %v4623 = vunpack.c.l.b16 %v4424
        %v4624 = vunpack.c.l.b16 %v4425
        %v4625 = vunpack.c.l.b16 %v4426
        %v4626 = vunpack.c.l.b16 %v4427
        %v4627 = vunpack.c.l.b16 %v4428
        %v4628 = vunpack.c.l.b16 %v4429
        %v4629 = vunpack.c.l.b16 %v4430
        %v4630 = vunpack.c.l.b16 %v4431
        %v4631 = vunpack.c.l.b16 %v4432
        %v4632 = vunpack.c.l.b16 %v4433
        %v4633 = vunpack.c.l.b16 %v4434
        %v4634 = vunpack.c.l.b16 %v4435
        %v4635 = vunpack.c.l.b16 %v4436
        %v4636 = vunpack.c.l.b16 %v4437
        %v4637 = vunpack.c.l.b16 %v4438
        %v4638 = vunpack.c.l.b16 %v4439
        %v4639 = vunpack.c.l.b16 %v4440
        %v4640 = vunpack.c.l.b16 %v4441
        %v4641 = vunpack.c.l.b16 %v4442
        %v4642 = vunpack.c.l.b16 %v4443
        %v4643 = vunpack.c.l.b16 %v4444
        %v4644 = vunpack.c.l.b16 %v4445
        %v4645 = vunpack.c.l.b16 %v4446
        %v4646 = vunpack.c.l.b16 %v4447
        %v4647 = vunpack.c.l.b16 %v4448
        %v4648 = vunpack.c.l.b16 %v4449
        %v4649 = vunpack.c.l.b16 %v4450
        %v4650 = vunpack.c.l.b16 %v4451
        %v4651 = vunpack.c.l.b16 %v4452
        %v4652 = vunpack.c.l.b16 %v4453
        %v4653 = vunpack.c.l.b16 %v4454
        %v4654 = vunpack.c.l.b16 %v4455
        %v4655 = vunpack.c.l.b16 %v4456
        %v4656 = vunpack.c.l.b16 %v4457
        %v4657 = vunpack.c.l.b16 %v4458
        %v4658 = vunpack.c.l.b16 %v4459
        %v4659 = vunpack.c.l.b16 %v4460
        %v4660 = vunpack.c.l.b16 %v4461
        %v4661 = vunpack.c.l.b16 %v4462
        %v4662 = vunpack.c.l.b16 %v4463
        %v4663 = vunpack.c.l.b16 %v4464
        %v4664 = vunpack.c.l.b16 %v4465
        %v4665 = vunpack.c.l.b16 %v4466
        %v4666 = vunpack.c.l.b16 %v4467
        %v4667 = vunpack.c.l.b16 %v4468
        %v4668 = vunpack.c.l.b16 %v4469
        %v4669 = vunpack.c.l.b16 %v4470
        %v4670 = vunpack.c.l.b16 %v4471
        %v4671 = vunpack.c.l.b16 %v4472
        %v4672 = vunpack.c.l.b16 %v4473
        %v4673 = vunpack.c.l.b16 %v4474
        %v4674 = vunpack.c.l.b16 %v4475
        %v4675 = vunpack.c.l.b16 %v4476
        %v4676 = vunpack.c.l.b16 %v4477
        %v4677 = vunpack.c.l.b16 %v4478
        %v4678 = vunpack.c.l.b16 %v4479
        %v4679 = vunpack.c.l.b16 %v4480
        %v4680 = vunpack.c.l.b16 %v4481
        %v4681 = vunpack.c.l.b16 %v4482
        %v4682 = vunpack.c.l.b16 %v4483
        %v4683 = vunpack.c.l.b16 %v4484
        %v4684 = vunpack.c.l.b16 %v4485
        %v4685 = vunpack.c.l.b16 %v4486
        %v4686 = vunpack.c.l.b16 %v4487
        %v4687 = vunpack.c.l.b16 %v4488
        %v4688 = vunpack.c.l.b16 %v4489
        %v4689 = vunpack.c.l.b16 %v4490
        %v4690 = vunpack.c.l.b16 %v4491
        %v4691 = vunpack.c.l.b16 %v4492
        %v4692 = vunpack.c.l.b16 %v4493
        %v4693 = vunpack.c.l.b16 %v4494
        %v4694 = vunpack.c.l.b16 %v4495
        %v4695 = vunpack.c.l.b16 %v4496
        %v4696 = vunpack.c.l.b16 %v4497
        %v4697 = vunpack.c.l.b16 %v4498
        %v4698 = vunpack.c.l.b16 %v4499
        %v4699 = vunpack.c.l.b16 %v4500
        %v4700 = vunpack.c.l.b16 %v4501
        %v4701 = vunpack.c.l.b16 %v4502
        %v4702 = vunpack.c.l.b16 %v4503
        %v4703 = vunpack.c.l.b16 %v4504
        %v4704 = vunpack.c.l.b16 %v4505
        %v4705 = vunpack.c.l.b16 %v4506
        %v4706 = vunpack.c.l.b16 %v4507
        %v4707 = vunpack.c.l.b16 %v4508
        %v4708 = vunpack.c.l.b16 %v4509
        %v4709 = vunpack.c.l.b16 %v4510
        %v4710 = vunpack.c.l.b16 %v4511
        %v4711 = vpack.c.b16 %v4616, %v4615
        %v4712 = vpack.c.b16 %v4618, %v4617
        %v4713 = vpack.c.b16 %v4620, %v4619
        %v4714 = vpack.c.b16 %v4622, %v4621
        %v4715 = vpack.c.b16 %v4624, %v4623
        %v4716 = vpack.c.b16 %v4626, %v4625
        %v4717 = vpack.c.b16 %v4628, %v4627
        %v4718 = vpack.c.b16 %v4630, %v4629
        %v4719 = vpack.c.b16 %v4632, %v4631
        %v4720 = vpack.c.b16 %v4634, %v4633
        %v4721 = vpack.c.b16 %v4636, %v4635
        %v4722 = vpack.c.b16 %v4638, %v4637
        %v4723 = vpack.c.b16 %v4640, %v4639
        %v4724 = vpack.c.b16 %v4642, %v4641
        %v4725 = vpack.c.b16 %v4644, %v4643
        %v4726 = vpack.c.b16 %v4646, %v4645
        %v4727 = vpack.c.b16 %v4648, %v4647
        %v4728 = vpack.c.b16 %v4650, %v4649
        %v4729 = vpack.c.b16 %v4652, %v4651
        %v4730 = vpack.c.b16 %v4654, %v4653
        %v4731 = vpack.c.b16 %v4656, %v4655
        %v4732 = vpack.c.b16 %v4658, %v4657
        %v4733 = vpack.c.b16 %v4660, %v4659
        %v4734 = vpack.c.b16 %v4662, %v4661
        %v4735 = vpack.c.b16 %v4664, %v4663
        %v4736 = vpack.c.b16 %v4666, %v4665
        %v4737 = vpack.c.b16 %v4668, %v4667
        %v4738 = vpack.c.b16 %v4670, %v4669
        %v4739 = vpack.c.b16 %v4672, %v4671
        %v4740 = vpack.c.b16 %v4674, %v4673
        %v4741 = vpack.c.b16 %v4676, %v4675
        %v4742 = vpack.c.b16 %v4678, %v4677
        %v4743 = vpack.c.b16 %v4680, %v4679
        %v4744 = vpack.c.b16 %v4682, %v4681
        %v4745 = vpack.c.b16 %v4684, %v4683
        %v4746 = vpack.c.b16 %v4686, %v4685
        %v4747 = vpack.c.b16 %v4688, %v4687
        %v4748 = vpack.c.b16 %v4690, %v4689
        %v4749 = vpack.c.b16 %v4692, %v4691
        %v4750 = vpack.c.b16 %v4694, %v4693
        %v4751 = vpack.c.b16 %v4696, %v4695
        %v4752 = vpack.c.b16 %v4698, %v4697
        %v4753 = vpack.c.b16 %v4700, %v4699
        %v4754 = vpack.c.b16 %v4702, %v4701
        %v4755 = vpack.c.b16 %v4704, %v4703
        %v4756 = vpack.c.b16 %v4706, %v4705
        %v4757 = vpack.c.b16 %v4708, %v4707
        %v4758 = vpack.c.b16 %v4710, %v4709
        %4807 = vmatprep.subr.bf16.mxu0 0
        %4808 = vmatpush1.bf16.msra.mxu0 %v4711
        %4809 = vmatprep.subr.bf16.mxu0 0
        %4810 = vmatpush1.bf16.msra.mxu0 %v4712
        %4811 = vmatprep.subr.bf16.mxu0 0
        %4812 = vmatpush1.bf16.msra.mxu0 %v4713
        %4813 = vmatprep.subr.bf16.mxu0 0
        %4814 = vmatpush1.bf16.msra.mxu0 %v4714
        %4815 = vmatprep.subr.bf16.mxu0 0
        %4816 = vmatpush1.bf16.msra.mxu0 %v4715
        %4817 = vmatprep.subr.bf16.mxu0 0
        %4818 = vmatpush1.bf16.msra.mxu0 %v4716
        %4819 = vmatprep.subr.bf16.mxu0 0
        %4820 = vmatpush1.bf16.msra.mxu0 %v4717
        %4821 = vmatprep.subr.bf16.mxu0 0
        %4822 = vmatpush1.bf16.msra.mxu0 %v4718
        %4823 = vmatprep.subr.bf16.mxu0 0
        %4824 = vmatpush1.bf16.msra.mxu0 %v4719
        %4825 = vmatprep.subr.bf16.mxu0 0
        %4826 = vmatpush1.bf16.msra.mxu0 %v4720
        %4827 = vmatprep.subr.bf16.mxu0 0
        %4828 = vmatpush1.bf16.msra.mxu0 %v4721
        %4829 = vmatprep.subr.bf16.mxu0 0
        %4830 = vmatpush1.bf16.msra.mxu0 %v4722
        %4831 = vmatprep.subr.bf16.mxu0 0
        %4832 = vmatpush1.bf16.msra.mxu0 %v4723
        %4833 = vmatprep.subr.bf16.mxu0 0
        %4834 = vmatpush1.bf16.msra.mxu0 %v4724
        %4835 = vmatprep.subr.bf16.mxu0 0
        %4836 = vmatpush1.bf16.msra.mxu0 %v4725
        %4837 = vmatprep.subr.bf16.mxu0 0
        %4838 = vmatpush1.bf16.msra.mxu0 %v4726
        %4839 = vmatprep.mubr.bf16.mxu0 %v4369
        %4840 = vmatmul.mubr.bf16.gmra.mrb[0].mxu0 %v4368
        %v4841 = vpop.f32.mrb[0].mxu0
        %v4842 = vadd.f32 %v4517, %v4841
        %v4843 = vpop.f32.mrb[0].mxu0
        %v4844 = vpop.f32.mrb[0].mxu0
        %v4845 = vadd.f32 %v4517, %v4844
        %v4846 = vpop.f32.mrb[0].mxu0
        %4847 = vmatprep.mubr.bf16.mxu0 %v4375
        %4848 = vmatmul.mubr.bf16.gmra.mrb[0].mxu0 %v4374
        %v4849 = vpop.f32.mrb[0].mxu0
        %v4850 = vadd.f32 %v4517, %v4849
        %v4851 = vpop.f32.mrb[0].mxu0
        %v4852 = vpop.f32.mrb[0].mxu0
        %v4853 = vadd.f32 %v4517, %v4852
        %v4854 = vpop.f32.mrb[0].mxu0
        %4855 = vmatprep.mubr.bf16.mxu0 %v4381
        %4856 = vmatmul.mubr.bf16.gmra.mrb[0].mxu0 %v4380
        %v4857 = vpop.f32.mrb[0].mxu0
        %v4858 = vadd.f32 %v4517, %v4857
        %v4859 = vpop.f32.mrb[0].mxu0
        %v4860 = vpop.f32.mrb[0].mxu0
        %v4861 = vadd.f32 %v4517, %v4860
        %v4862 = vpop.f32.mrb[0].mxu0
        %4863 = vmatprep.mubr.bf16.mxu0 %v4387
        %4864 = vmatmul.mubr.bf16.gmra.mrb[0].mxu0 %v4386
        %v4865 = vpop.f32.mrb[0].mxu0
        %v4866 = vadd.f32 %v4517, %v4865
        %v4867 = vpop.f32.mrb[0].mxu0
        %v4868 = vpop.f32.mrb[0].mxu0
        %v4869 = vadd.f32 %v4517, %v4868
        %v4870 = vpop.f32.mrb[0].mxu0
        %4871 = vmatprep.mubr.bf16.mxu0 %v4393
        %4872 = vmatmul.mubr.bf16.gmra.mrb[0].mxu0 %v4392
        %v4873 = vpop.f32.mrb[0].mxu0
        %v4874 = vadd.f32 %v4517, %v4873
        %v4875 = vpop.f32.mrb[0].mxu0
        %v4876 = vpop.f32.mrb[0].mxu0
        %v4877 = vadd.f32 %v4517, %v4876
        %v4878 = vpop.f32.mrb[0].mxu0
        %4879 = vmatprep.mubr.bf16.mxu0 %v4399
        %4880 = vmatmul.mubr.bf16.gmra.mrb[0].mxu0 %v4398
        %v4881 = vpop.f32.mrb[0].mxu0
        %v4882 = vadd.f32 %v4517, %v4881
        %v4883 = vpop.f32.mrb[0].mxu0
        %v4884 = vpop.f32.mrb[0].mxu0
        %v4885 = vadd.f32 %v4517, %v4884
        %v4886 = vpop.f32.mrb[0].mxu0
        %4887 = vmatprep.mubr.bf16.mxu0 %v4405
        %4888 = vmatmul.mubr.bf16.gmra.mrb[0].mxu0 %v4404
        %v4889 = vpop.f32.mrb[0].mxu0
        %v4890 = vadd.f32 %v4517, %v4889
        %v4891 = vpop.f32.mrb[0].mxu0
        %v4892 = vpop.f32.mrb[0].mxu0
        %v4893 = vadd.f32 %v4517, %v4892
        %v4894 = vpop.f32.mrb[0].mxu0
        %4895 = vmatprep.mubr.bf16.mxu0 %v4411
        %4896 = vmatmul.mubr.bf16.gmra.mrb[0].mxu0 %v4410
        %v4897 = vpop.f32.mrb[0].mxu0
        %v4898 = vadd.f32 %v4517, %v4897
        %v4899 = vpop.f32.mrb[0].mxu0
        %v4900 = vpop.f32.mrb[0].mxu0
        %v4901 = vadd.f32 %v4517, %v4900
        %v4902 = vpop.f32.mrb[0].mxu0
        %4903 = vdwg.mxu0
        %4904 = vmatprep.subr.bf16.mxu0 0
        %4905 = vmatpush1.bf16.msra.mxu0 %v4727
        %4906 = vmatprep.subr.bf16.mxu0 0
        %4907 = vmatpush1.bf16.msra.mxu0 %v4728
        %4908 = vmatprep.subr.bf16.mxu0 0
        %4909 = vmatpush1.bf16.msra.mxu0 %v4729
        %4910 = vmatprep.subr.bf16.mxu0 0
        %4911 = vmatpush1.bf16.msra.mxu0 %v4730
        %4912 = vmatprep.subr.bf16.mxu0 0
        %4913 = vmatpush1.bf16.msra.mxu0 %v4731
        %4914 = vmatprep.subr.bf16.mxu0 0
        %4915 = vmatpush1.bf16.msra.mxu0 %v4732
        %4916 = vmatprep.subr.bf16.mxu0 0
        %4917 = vmatpush1.bf16.msra.mxu0 %v4733
        %4918 = vmatprep.subr.bf16.mxu0 0
        %4919 = vmatpush1.bf16.msra.mxu0 %v4734
        %4920 = vmatprep.subr.bf16.mxu0 0
        %4921 = vmatpush1.bf16.msra.mxu0 %v4735
        %4922 = vmatprep.subr.bf16.mxu0 0
        %4923 = vmatpush1.bf16.msra.mxu0 %v4736
        %4924 = vmatprep.subr.bf16.mxu0 0
        %4925 = vmatpush1.bf16.msra.mxu0 %v4737
        %4926 = vmatprep.subr.bf16.mxu0 0
        %4927 = vmatpush1.bf16.msra.mxu0 %v4738
        %4928 = vmatprep.subr.bf16.mxu0 0
        %4929 = vmatpush1.bf16.msra.mxu0 %v4739
        %4930 = vmatprep.subr.bf16.mxu0 0
        %4931 = vmatpush1.bf16.msra.mxu0 %v4740
        %4932 = vmatprep.subr.bf16.mxu0 0
        %4933 = vmatpush1.bf16.msra.mxu0 %v4741
        %4934 = vmatprep.subr.bf16.mxu0 0
        %4935 = vmatpush1.bf16.msra.mxu0 %v4742
        %4936 = vmatprep.mubr.bf16.mxu0 %v4371
        %4937 = vmatmul.mubr.bf16.gmra.mrb[0].mxu0 %v4370
        %v4938 = vpop.f32.mrb[0].mxu0
        %v4939 = vadd.f32 %v4842, %v4938
        %v4940 = vpop.f32.mrb[0].mxu0
        %v4941 = vpop.f32.mrb[0].mxu0
        %v4942 = vadd.f32 %v4845, %v4941
        %v4943 = vpop.f32.mrb[0].mxu0
        %4944 = vmatprep.mubr.bf16.mxu0 %v4377
        %4945 = vmatmul.mubr.bf16.gmra.mrb[0].mxu0 %v4376
        %v4946 = vpop.f32.mrb[0].mxu0
        %v4947 = vadd.f32 %v4850, %v4946
        %v4948 = vpop.f32.mrb[0].mxu0
        %v4949 = vpop.f32.mrb[0].mxu0
        %v4950 = vadd.f32 %v4853, %v4949
        %v4951 = vpop.f32.mrb[0].mxu0
        %4952 = vmatprep.mubr.bf16.mxu0 %v4383
        %4953 = vmatmul.mubr.bf16.gmra.mrb[0].mxu0 %v4382
        %v4954 = vpop.f32.mrb[0].mxu0
        %v4955 = vadd.f32 %v4858, %v4954
        %v4956 = vpop.f32.mrb[0].mxu0
        %v4957 = vpop.f32.mrb[0].mxu0
        %v4958 = vadd.f32 %v4861, %v4957
        %v4959 = vpop.f32.mrb[0].mxu0
        %4960 = vmatprep.mubr.bf16.mxu0 %v4389
        %4961 = vmatmul.mubr.bf16.gmra.mrb[0].mxu0 %v4388
        %v4962 = vpop.f32.mrb[0].mxu0
        %v4963 = vadd.f32 %v4866, %v4962
        %v4964 = vpop.f32.mrb[0].mxu0
        %v4965 = vpop.f32.mrb[0].mxu0
        %v4966 = vadd.f32 %v4869, %v4965
        %v4967 = vpop.f32.mrb[0].mxu0
        %4968 = vmatprep.mubr.bf16.mxu0 %v4395
        %4969 = vmatmul.mubr.bf16.gmra.mrb[0].mxu0 %v4394
        %v4970 = vpop.f32.mrb[0].mxu0
        %v4971 = vadd.f32 %v4874, %v4970
        %v4972 = vpop.f32.mrb[0].mxu0
        %v4973 = vpop.f32.mrb[0].mxu0
        %v4974 = vadd.f32 %v4877, %v4973
        %v4975 = vpop.f32.mrb[0].mxu0
        %4976 = vmatprep.mubr.bf16.mxu0 %v4401
        %4977 = vmatmul.mubr.bf16.gmra.mrb[0].mxu0 %v4400
        %v4978 = vpop.f32.mrb[0].mxu0
        %v4979 = vadd.f32 %v4882, %v4978
        %v4980 = vpop.f32.mrb[0].mxu0
        %v4981 = vpop.f32.mrb[0].mxu0
        %v4982 = vadd.f32 %v4885, %v4981
        %v4983 = vpop.f32.mrb[0].mxu0
        %4984 = vmatprep.mubr.bf16.mxu0 %v4407
        %4985 = vmatmul.mubr.bf16.gmra.mrb[0].mxu0 %v4406
        %v4986 = vpop.f32.mrb[0].mxu0
        %v4987 = vadd.f32 %v4890, %v4986
        %v4988 = vpop.f32.mrb[0].mxu0
        %v4989 = vpop.f32.mrb[0].mxu0
        %v4990 = vadd.f32 %v4893, %v4989
        %v4991 = vpop.f32.mrb[0].mxu0
        %4992 = vmatprep.mubr.bf16.mxu0 %v4413
        %4993 = vmatmul.mubr.bf16.gmra.mrb[0].mxu0 %v4412
        %v4994 = vpop.f32.mrb[0].mxu0
        %v4995 = vadd.f32 %v4898, %v4994
        %v4996 = vpop.f32.mrb[0].mxu0
        %v4997 = vpop.f32.mrb[0].mxu0
        %v4998 = vadd.f32 %v4901, %v4997
        %v4999 = vpop.f32.mrb[0].mxu0
        %5000 = vdwg.mxu0
        %5001 = vmatprep.subr.bf16.mxu0 0
        %5002 = vmatpush1.bf16.msra.mxu0 %v4743
        %5003 = vmatprep.subr.bf16.mxu0 0
        %5004 = vmatpush1.bf16.msra.mxu0 %v4744
        %5005 = vmatprep.subr.bf16.mxu0 0
        %5006 = vmatpush1.bf16.msra.mxu0 %v4745
        %5007 = vmatprep.subr.bf16.mxu0 0
        %5008 = vmatpush1.bf16.msra.mxu0 %v4746
        %5009 = vmatprep.subr.bf16.mxu0 0
        %5010 = vmatpush1.bf16.msra.mxu0 %v4747
        %5011 = vmatprep.subr.bf16.mxu0 0
        %5012 = vmatpush1.bf16.msra.mxu0 %v4748
        %5013 = vmatprep.subr.bf16.mxu0 0
        %5014 = vmatpush1.bf16.msra.mxu0 %v4749
        %5015 = vmatprep.subr.bf16.mxu0 0
        %5016 = vmatpush1.bf16.msra.mxu0 %v4750
        %5017 = vmatprep.subr.bf16.mxu0 0
        %5018 = vmatpush1.bf16.msra.mxu0 %v4751
        %5019 = vmatprep.subr.bf16.mxu0 0
        %5020 = vmatpush1.bf16.msra.mxu0 %v4752
        %5021 = vmatprep.subr.bf16.mxu0 0
        %5022 = vmatpush1.bf16.msra.mxu0 %v4753
        %5023 = vmatprep.subr.bf16.mxu0 0
        %5024 = vmatpush1.bf16.msra.mxu0 %v4754
        %5025 = vmatprep.subr.bf16.mxu0 0
        %5026 = vmatpush1.bf16.msra.mxu0 %v4755
        %5027 = vmatprep.subr.bf16.mxu0 0
        %5028 = vmatpush1.bf16.msra.mxu0 %v4756
        %5029 = vmatprep.subr.bf16.mxu0 0
        %5030 = vmatpush1.bf16.msra.mxu0 %v4757
        %5031 = vmatprep.subr.bf16.mxu0 0
        %5032 = vmatpush1.bf16.msra.mxu0 %v4758
        %5033 = vmatprep.mubr.bf16.mxu0 %v4373
        %5034 = vmatmul.mubr.bf16.gmra.mrb[0].mxu0 %v4372
        %v5035 = vpop.f32.mrb[0].mxu0
        %v5036 = vadd.f32 %v4939, %v5035
        %v5037 = vpop.f32.mrb[0].mxu0
        %v5038 = vpop.f32.mrb[0].mxu0
        %v5039 = vadd.f32 %v4942, %v5038
        %v5040 = vpop.f32.mrb[0].mxu0
        %5041 = vmatprep.mubr.bf16.mxu0 %v4379
        %5042 = vmatmul.mubr.bf16.gmra.mrb[0].mxu0 %v4378
        %v5043 = vpop.f32.mrb[0].mxu0
        %v5044 = vadd.f32 %v4947, %v5043
        %v5045 = vpop.f32.mrb[0].mxu0
        %v5046 = vpop.f32.mrb[0].mxu0
        %v5047 = vadd.f32 %v4950, %v5046
        %v5048 = vpop.f32.mrb[0].mxu0
        %5049 = vmatprep.mubr.bf16.mxu0 %v4385
        %5050 = vmatmul.mubr.bf16.gmra.mrb[0].mxu0 %v4384
        %v5051 = vpop.f32.mrb[0].mxu0
        %v5052 = vadd.f32 %v4955, %v5051
        %v5053 = vpop.f32.mrb[0].mxu0
        %v5054 = vpop.f32.mrb[0].mxu0
        %v5055 = vadd.f32 %v4958, %v5054
        %v5056 = vpop.f32.mrb[0].mxu0
        %5057 = vmatprep.mubr.bf16.mxu0 %v4391
        %5058 = vmatmul.mubr.bf16.gmra.mrb[0].mxu0 %v4390
        %v5059 = vpop.f32.mrb[0].mxu0
        %v5060 = vadd.f32 %v4963, %v5059
        %v5061 = vpop.f32.mrb[0].mxu0
        %v5062 = vpop.f32.mrb[0].mxu0
        %v5063 = vadd.f32 %v4966, %v5062
        %v5064 = vpop.f32.mrb[0].mxu0
        %5065 = vmatprep.mubr.bf16.mxu0 %v4397
        %5066 = vmatmul.mubr.bf16.gmra.mrb[0].mxu0 %v4396
        %v5067 = vpop.f32.mrb[0].mxu0
        %v5068 = vadd.f32 %v4971, %v5067
        %v5069 = vpop.f32.mrb[0].mxu0
        %v5070 = vpop.f32.mrb[0].mxu0
        %v5071 = vadd.f32 %v4974, %v5070
        %v5072 = vpop.f32.mrb[0].mxu0
        %5073 = vmatprep.mubr.bf16.mxu0 %v4403
        %5074 = vmatmul.mubr.bf16.gmra.mrb[0].mxu0 %v4402
        %v5075 = vpop.f32.mrb[0].mxu0
        %v5076 = vadd.f32 %v4979, %v5075
        %v5077 = vpop.f32.mrb[0].mxu0
        %v5078 = vpop.f32.mrb[0].mxu0
        %v5079 = vadd.f32 %v4982, %v5078
        %v5080 = vpop.f32.mrb[0].mxu0
        %5081 = vmatprep.mubr.bf16.mxu0 %v4409
        %5082 = vmatmul.mubr.bf16.gmra.mrb[0].mxu0 %v4408
        %v5083 = vpop.f32.mrb[0].mxu0
        %v5084 = vadd.f32 %v4987, %v5083
        %v5085 = vpop.f32.mrb[0].mxu0
        %v5086 = vpop.f32.mrb[0].mxu0
        %v5087 = vadd.f32 %v4990, %v5086
        %v5088 = vpop.f32.mrb[0].mxu0
        %5089 = vmatprep.mubr.bf16.mxu0 %v4415
        %5090 = vmatmul.mubr.bf16.gmra.mrb[0].mxu0 %v4414
        %v5091 = vpop.f32.mrb[0].mxu0
        %v5092 = vadd.f32 %v4995, %v5091
        %v5093 = vpop.f32.mrb[0].mxu0
        %v5094 = vpop.f32.mrb[0].mxu0
        %v5095 = vadd.f32 %v4998, %v5094
        %v5096 = vpop.f32.mrb[0].mxu0
        %5097 = vdwg.mxu0
        %v5098 = vpack.c.bf16 %v5039, %v5036
        %v5099 = vpack.c.bf16 %v5047, %v5044
        %v5100 = vpack.c.bf16 %v5055, %v5052
        %v5101 = vpack.c.bf16 %v5063, %v5060
        %v5102 = vpack.c.bf16 %v5071, %v5068
        %v5103 = vpack.c.bf16 %v5079, %v5076
        %v5104 = vpack.c.bf16 %v5087, %v5084
        %v5105 = vpack.c.bf16 %v5095, %v5092
        %v5114 = vunpack.c.l.b16 %v5098
        %v5115 = vunpack.c.h.b16 %v5098
        %v5116 = vunpack.c.l.b16 %v5099
        %v5117 = vunpack.c.h.b16 %v5099
        %v5118 = vunpack.c.l.b16 %v5100
        %v5119 = vunpack.c.h.b16 %v5100
        %v5120 = vunpack.c.l.b16 %v5101
        %v5121 = vunpack.c.h.b16 %v5101
        %v5122 = vunpack.c.l.b16 %v5102
        %v5123 = vunpack.c.h.b16 %v5102
        %v5124 = vunpack.c.l.b16 %v5103
        %v5125 = vunpack.c.h.b16 %v5103
        %v5126 = vunpack.c.l.b16 %v5104
        %v5127 = vunpack.c.h.b16 %v5104
        %v5128 = vunpack.c.l.b16 %v5105
        %v5129 = vunpack.c.h.b16 %v5105
        %v5130 = vpack.c.b16 %v5114, %v5114
        %v5131 = vpack.c.b16 %v5115, %v5115
        %v5132 = vpack.c.b16 %v5116, %v5116
        %v5133 = vpack.c.b16 %v5117, %v5117
        %v5134 = vpack.c.b16 %v5118, %v5118
        %v5135 = vpack.c.b16 %v5119, %v5119
        %v5136 = vpack.c.b16 %v5120, %v5120
        %v5137 = vpack.c.b16 %v5121, %v5121
        %v5138 = vpack.c.b16 %v5122, %v5122
        %v5139 = vpack.c.b16 %v5123, %v5123
        %v5140 = vpack.c.b16 %v5124, %v5124
        %v5141 = vpack.c.b16 %v5125, %v5125
        %v5142 = vpack.c.b16 %v5126, %v5126
        %v5143 = vpack.c.b16 %v5127, %v5127
        %v5144 = vpack.c.b16 %v5128, %v5128
        %v5145 = vpack.c.b16 %v5129, %v5129
        %5162 = vst [vmem:[%s421] sm:$0xf] %v5130
        %5163 = vst [vmem:[%s421 + $0x4] sm:$0xf] %v5131
        %5164 = vst [vmem:[%s421 + $0x8] sm:$0xf] %v5132
        %5165 = vst [vmem:[%s421 + $0xc] sm:$0xf] %v5133
        %5166 = vst [vmem:[%s421 + $0x10] sm:$0xf] %v5134
        %5167 = vst [vmem:[%s421 + $0x14] sm:$0xf] %v5135
        %5168 = vst [vmem:[%s421 + $0x18] sm:$0xf] %v5136
        %5169 = vst [vmem:[%s421 + $0x1c] sm:$0xf] %v5137
        %5170 = vst [vmem:[%s421 + $0x20] sm:$0xf] %v5138
        %5171 = vst [vmem:[%s421 + $0x24] sm:$0xf] %v5139
        %5172 = vst [vmem:[%s421 + $0x28] sm:$0xf] %v5140
        %5173 = vst [vmem:[%s421 + $0x2c] sm:$0xf] %v5141
        %5174 = vst [vmem:[%s421 + $0x30] sm:$0xf] %v5142
        %5175 = vst [vmem:[%s421 + $0x34] sm:$0xf] %v5143
        %5176 = vst [vmem:[%s421 + $0x38] sm:$0xf] %v5144
        %5177 = vst [vmem:[%s421 + $0x3c] sm:$0xf] %v5145
        %s5178 = sand.u32 %s231, 1
        %s5179 = scalar_lea.sflag [#allocation4], %s5178
        %s5180 = sand.u32 %s231, 1
        %s5181 = smul.addr %s5180, 64
        %s5182 = scalar_lea.vmem [#allocation13], %s5181
        // Predicated region
        $region81: #{tpu_custom_call.1} parent=55 // pred_check
          %p5183 = pneg %p241
        $region82: #{tpu_custom_call.1} parent=55 // pred_check_branch
          %5185 = sbr.rel (%p5183) target = $region84
        $region83: #{tpu_custom_call.1} parent=55 // pred_region
          %s5186 = smul.u32 16, %s29
          %s5188 = ssub.s32 1024, 1024
          %5189 = vsyncadd %s5179, %s5188
          %s5190 = smul.addr %s5186, 64
          %s5191 = scalar_lea.hbm %s9, %s5190
          %s5192 = sshll.u32 %s5182, 4
          %s5193 = int_to_ptr.vmem [resolvable:$true] %s5192
          %5198 = dma.vmem_to_hbm [thread:$0]  %s5193, 1024, %s5191, %s5179, 64, 64, 4
        $region84: #{tpu_custom_call.1} parent=55 // pred_fallthru
          _
      $region56: #{tpu_custom_call.1} parent=5 // pred_fallthru
        _
      %p5199 = scmp.le.s32.totalorder 2, %s24
      // Predicated region
      $region85: #{tpu_custom_call.1} parent=5 // pred_check
        %p5200 = pneg %p5199
      $region86: #{tpu_custom_call.1} parent=5 // pred_check_branch
        %5202 = sbr.rel (%p5200) target = $region88
      $region87: #{tpu_custom_call.1} parent=5 // pred_region
        %s5203 = ssub.s32 %s24, 2
        // Predicated region
        $region89: #{tpu_custom_call.1} parent=87 // pred_check
          %p5204 = pneg %p247
        $region90: #{tpu_custom_call.1} parent=87 // pred_check_branch
          %5206 = sbr.rel (%p5204) target = $region92
        $region91: #{tpu_custom_call.1} parent=87 // pred_region
          %s5207 = sand.u32 %s232, 1
          %s5208 = scalar_lea.sflag [#allocation4], %s5207
          %s5209 = sand.u32 %s232, 1
          %s5210 = smul.addr %s5209, 64
          %s5211 = scalar_lea.vmem [#allocation13], %s5210
          %5212 = dma.done %s5208, 1024
        $region92: #{tpu_custom_call.1} parent=87 // pred_fallthru
          _
      $region88: #{tpu_custom_call.1} parent=5 // pred_fallthru
        _
    $region6: #{tpu_custom_call.1} parent=1 // loop_footer
      %s28 = sadd.s32 1, %s24
    $region7: #{tpu_custom_call.1} parent=1 // loop_footer_branch
      %23 = sbr.rel target = $region3
    $region8: #{tpu_custom_call.1} parent=1 // loop_exit
      _
    %5213 = vsyncpa [#allocation3], 1
    %s5214 = scalar_lea.sflag [#allocation3], 1
    %5215 = vsyncpa %s5214, 1
    %5216 = vsyncpa [#allocation6], 1
    %5217 = vsyncpa [#allocation9], 1
    %5218 = vsyncpa [#allocation12], 1
    %5219 = vsyncpa [#allocation4], 1
    %s5220 = scalar_lea.sflag [#allocation4], 1
    %5221 = vsyncpa %s5220, 1

</llo_original>
